<compile_context>
chip_gen: v5e
topology: v5e:2x2
jax: 0.10.0
libtpu: 0.0.40
codegen_flags: <defaults>
</compile_context>

<pallas_src>
import functools
import math

import jax
import jax.numpy as jnp
from jax.experimental import pallas as pl
from jax.experimental.pallas import tpu as pltpu


# --------------------------------------------------------------------------
# Fused kernel: conv_tail(3x3) + PReLU + conv_out(3x3) + bias, one batch elem.
# --------------------------------------------------------------------------
def _to_clean_kernel(x_ref, wt_ref, wo_ref, scal_ref, out_ref, xpad, tpad,
                     *, H, W, C):
    """x_ref: (H,W,C) f32; wt_ref: (9C,C) bf16; wo_ref: (9,C) f32;
    scal_ref: (2,) f32 SMEM; out_ref: (H,W) f32;
    xpad/tpad: (H+2,W+2,C) bf16 VMEM scratch."""
    alpha = scal_ref[0]
    bias = scal_ref[1]

    # ---- in-kernel zero padding (no host jnp.pad / extra HBM pass) --------
    xpad[...] = jnp.zeros_like(xpad)
    xpad[1:H + 1, 1:W + 1, :] = x_ref[...].astype(jnp.bfloat16)

    # ---- conv_tail: im2col -> single (H*W, 9C) @ (9C, C) bf16 MXU matmul --
    cols = jnp.concatenate(
        [xpad[dy:dy + H, dx:dx + W, :] for dy in range(3) for dx in range(3)],
        axis=-1)                                           # (H, W, 9C) bf16
    acc = jnp.dot(cols.reshape(H * W, 9 * C), wt_ref[...],
                  preferred_element_type=jnp.float32)      # (H*W, C) f32

    # ---- PReLU (self.relut), single learnable alpha ------------------------
    acc = jnp.where(acc >= 0, acc, alpha * acc)

    # ---- re-pad the activation for conv_out, again purely in VMEM ---------
    tpad[...] = jnp.zeros_like(tpad)
    tpad[1:H + 1, 1:W + 1, :] = acc.reshape(H, W, C).astype(jnp.bfloat16)

    # ---- conv_out: 3x3, C -> 1, bias=True (VPU accumulate + XLU reduce) ---
    accc = jnp.zeros((H, W, C), jnp.float32)
    for t in range(9):
        dy, dx = t // 3, t % 3
        accc = accc + tpad[dy:dy + H, dx:dx + W, :].astype(jnp.float32) * wo_ref[t]
    out_ref[...] = (jnp.sum(accc, axis=-1) + bias).astype(out_ref.dtype)


# --------------------------------------------------------------------------
# pallas_call wrapper (grid over batch; whole image per grid step)
# --------------------------------------------------------------------------
def to_clean_image_forward(x, params):
    """x: (N, H, W, C) f32 NHWC.  Returns (N, H, W, 1) f32."""
    N, H, W, C = x.shape
    wt, wo, scal = params["w_tail"], params["w_out"], params["scal"]
    kern = functools.partial(_to_clean_kernel, H=H, W=W, C=C)
    out = pl.pallas_call(
        kern,
        out_shape=jax.ShapeDtypeStruct((N, H, W), jnp.float32),
        grid=(N,),
        in_specs=[
            pl.BlockSpec((None, H, W, C), lambda n: (n, 0, 0, 0)),
            pl.BlockSpec((9 * C, C), lambda n: (0, 0)),
            pl.BlockSpec((9, C), lambda n: (0, 0)),
            pl.BlockSpec(memory_space=pltpu.MemorySpace.SMEM),
        ],
        out_specs=pl.BlockSpec((None, H, W), lambda n: (n, 0, 0)),
        scratch_shapes=[
            pltpu.VMEM((H + 2, W + 2, C), jnp.bfloat16),   # padded input
            pltpu.VMEM((H + 2, W + 2, C), jnp.bfloat16),   # padded PReLU(conv_tail)
        ],
        compiler_params=pltpu.CompilerParams(
            dimension_semantics=("parallel",),
            vmem_limit_bytes=32 * 1024 * 1024),
    )(x, wt, wo, scal)
    return out[..., None]                                  # (N, H, W, 1)


# --------------------------------------------------------------------------
# Pure-JAX reference (same bf16 operand quantization, f32 accumulation)
# --------------------------------------------------------------------------
def to_clean_image_ref(x, params):
    C = x.shape[-1]
    wt = params["w_tail"].astype(jnp.float32).reshape(3, 3, C, C)   # HWIO
    wo = params["w_out"].astype(jnp.float32).reshape(3, 3, C, 1)    # HWIO
    alpha, bias = params["scal"][0], params["scal"][1]
    xq = x.astype(jnp.bfloat16).astype(jnp.float32)
    tail = jax.lax.conv_general_dilated(
        xq, wt, (1, 1), "SAME", dimension_numbers=("NHWC", "HWIO", "NHWC"),
        precision=jax.lax.Precision.HIGHEST)
    tail = jnp.where(tail >= 0, tail, alpha * tail)
    tq = tail.astype(jnp.bfloat16).astype(jnp.float32)
    out = jax.lax.conv_general_dilated(
        tq, wo, (1, 1), "SAME", dimension_numbers=("NHWC", "HWIO", "NHWC"),
        precision=jax.lax.Precision.HIGHEST)
    return out + bias


# --------------------------------------------------------------------------
# Deterministic parameter init (matches the layouts above)
# --------------------------------------------------------------------------
def init_params(key, C=64):
    k1, k2, k3 = jax.random.split(key, 3)
    std = math.sqrt(2.0 / (9 * C))
    w_tail = (std * jax.random.normal(k1, (9 * C, C), jnp.float32)
              ).astype(jnp.bfloat16)                       # MXU operands in bf16
    w_out = std * jax.random.normal(k2, (9, C), jnp.float32)
    bias = (0.1 * jax.random.normal(k3, (), jnp.float32)).astype(jnp.float32)
    alpha = jnp.asarray(0.25, jnp.float32)                 # nn.PReLU() default
    scal = jnp.stack([alpha, bias])                        # (2,) f32 -> SMEM
    return {"w_tail": w_tail, "w_out": w_out, "scal": scal}


if __name__ == "__main__":
    key = jax.random.PRNGKey(0)
    kx, kp = jax.random.split(key)

    # PyTorch resize1 is (N, C, H, W) = (2, 64, 16, 16); NHWC here.
    N, H, W, C = 2, 16, 16, 64
    x = jax.random.normal(kx, (N, H, W, C), jnp.float32)
    params = init_params(kp, C)

    out = jax.jit(to_clean_image_forward)(x, params)
    out = jax.block_until_ready(out)
    assert out.shape == (N, H, W, 1), out.shape
    assert bool(jnp.all(jnp.isfinite(out)))

    ref = to_clean_image_ref(x, params)
    err = float(jnp.max(jnp.abs(out - ref)))
    assert err < 5e-2, f"max abs err {err}"
    print("KERNEL_OK")
</pallas_src>

<mosaic_0001>
module attributes {stable_mosaic.version = 11 : i64} {
  func.func @_to_clean_kernel(%arg0: i32, %arg1: memref<1x16x16x64xf32, #tpu.memory_space<vmem>>, %arg2: memref<576x64xbf16, #tpu.memory_space<vmem>>, %arg3: memref<9x64xf32, #tpu.memory_space<vmem>>, %arg4: memref<2xf32, #tpu.memory_space<smem>>, %arg5: memref<1x16x16xf32, #tpu.memory_space<vmem>>, %arg6: memref<18x18x64xbf16, #tpu.memory_space<vmem>>, %arg7: memref<18x18x64xbf16, #tpu.memory_space<vmem>>) attributes {dimension_semantics = [#tpu.dimension_semantics<parallel>], iteration_bounds = array<i64: 2>, scalar_prefetch = 0 : i64, scratch_operands = 2 : i64, tpu.core_type = #tpu.core_type<tc>, window_params = [{transform_indices = @transform_0, window_bounds = array<i64: 1, 16, 16, 64>}, {pipeline_mode = #tpu.pipeline_mode<synchronous>, transform_indices = @transform_1, window_bounds = array<i64: 576, 64>}, {pipeline_mode = #tpu.pipeline_mode<synchronous>, transform_indices = @transform_2, window_bounds = array<i64: 9, 64>}, {transform_indices = @transform_3, window_bounds = array<i64: 2>}, {transform_indices = @transform_4, window_bounds = array<i64: 1, 16, 16>}]} {
    %c0 = arith.constant 0 : index
    %0 = memref.load %arg4[%c0] : memref<2xf32, #tpu.memory_space<smem>>
    %c1 = arith.constant 1 : index
    %1 = memref.load %arg4[%c1] : memref<2xf32, #tpu.memory_space<smem>>
    %cst = arith.constant 0.000000e+00 : bf16
    %2 = vector.broadcast %cst : bf16 to vector<18x18x64xbf16>
    %c0_0 = arith.constant 0 : index
    %c0_1 = arith.constant 0 : index
    %c0_2 = arith.constant 0 : index
    %3 = vector.load %arg6[%c0_0, %c0_1, %c0_2] : memref<18x18x64xbf16, #tpu.memory_space<vmem>>, vector<18x18x64xbf16>
    tpu.vector_store %arg6[%c0_0, %c0_1, %c0_2], %2 {strides = array<i32>} : memref<18x18x64xbf16, #tpu.memory_space<vmem>>, vector<18x18x64xbf16>,
    %c0_3 = arith.constant 0 : index
    %c0_4 = arith.constant 0 : index
    %c0_5 = arith.constant 0 : index
    %c0_6 = arith.constant 0 : index
    %4 = vector.load %arg1[%c0_3, %c0_4, %c0_5, %c0_6] : memref<1x16x16x64xf32, #tpu.memory_space<vmem>>, vector<1x16x16x64xf32>
    %5 = vector.shape_cast %4 : vector<1x16x16x64xf32> to vector<16x16x64xf32>
    %6 = arith.truncf %5 : vector<16x16x64xf32> to vector<16x16x64xbf16>
    %c1_7 = arith.constant 1 : index
    %c1_8 = arith.constant 1 : index
    %c0_9 = arith.constant 0 : index
    %7 = vector.load %arg6[%c1_7, %c1_8, %c0_9] : memref<18x18x64xbf16, #tpu.memory_space<vmem>>, vector<16x16x64xbf16>
    tpu.vector_store %arg6[%c1_7, %c1_8, %c0_9], %6 {strides = array<i32>} : memref<18x18x64xbf16, #tpu.memory_space<vmem>>, vector<16x16x64xbf16>,
    %c0_10 = arith.constant 0 : index
    %c0_11 = arith.constant 0 : index
    %c0_12 = arith.constant 0 : index
    %8 = vector.load %arg6[%c0_10, %c0_11, %c0_12] : memref<18x18x64xbf16, #tpu.memory_space<vmem>>, vector<16x16x64xbf16>
    %c0_13 = arith.constant 0 : index
    %c1_14 = arith.constant 1 : index
    %c0_15 = arith.constant 0 : index
    %9 = vector.load %arg6[%c0_13, %c1_14, %c0_15] : memref<18x18x64xbf16, #tpu.memory_space<vmem>>, vector<16x16x64xbf16>
    %c0_16 = arith.constant 0 : index
    %c2 = arith.constant 2 : index
    %c0_17 = arith.constant 0 : index
    %10 = vector.load %arg6[%c0_16, %c2, %c0_17] : memref<18x18x64xbf16, #tpu.memory_space<vmem>>, vector<16x16x64xbf16>
    %c1_18 = arith.constant 1 : index
    %c0_19 = arith.constant 0 : index
    %c0_20 = arith.constant 0 : index
    %11 = vector.load %arg6[%c1_18, %c0_19, %c0_20] : memref<18x18x64xbf16, #tpu.memory_space<vmem>>, vector<16x16x64xbf16>
    %c1_21 = arith.constant 1 : index
    %c1_22 = arith.constant 1 : index
    %c0_23 = arith.constant 0 : index
    %12 = vector.load %arg6[%c1_21, %c1_22, %c0_23] : memref<18x18x64xbf16, #tpu.memory_space<vmem>>, vector<16x16x64xbf16>
    %c1_24 = arith.constant 1 : index
    %c2_25 = arith.constant 2 : index
    %c0_26 = arith.constant 0 : index
    %13 = vector.load %arg6[%c1_24, %c2_25, %c0_26] : memref<18x18x64xbf16, #tpu.memory_space<vmem>>, vector<16x16x64xbf16>
    %c2_27 = arith.constant 2 : index
    %c0_28 = arith.constant 0 : index
    %c0_29 = arith.constant 0 : index
    %14 = vector.load %arg6[%c2_27, %c0_28, %c0_29] : memref<18x18x64xbf16, #tpu.memory_space<vmem>>, vector<16x16x64xbf16>
    %c2_30 = arith.constant 2 : index
    %c1_31 = arith.constant 1 : index
    %c0_32 = arith.constant 0 : index
    %15 = vector.load %arg6[%c2_30, %c1_31, %c0_32] : memref<18x18x64xbf16, #tpu.memory_space<vmem>>, vector<16x16x64xbf16>
    %c2_33 = arith.constant 2 : index
    %c2_34 = arith.constant 2 : index
    %c0_35 = arith.constant 0 : index
    %16 = vector.load %arg6[%c2_33, %c2_34, %c0_35] : memref<18x18x64xbf16, #tpu.memory_space<vmem>>, vector<16x16x64xbf16>
    %17 = tpu.concatenate %8, %9, %10, %11, %12, %13, %14, %15, %16 in 2 : vector<16x16x64xbf16>, vector<16x16x64xbf16>, vector<16x16x64xbf16>, vector<16x16x64xbf16>, vector<16x16x64xbf16>, vector<16x16x64xbf16>, vector<16x16x64xbf16>, vector<16x16x64xbf16>, vector<16x16x64xbf16> -> vector<16x16x576xbf16>
    %18 = vector.shape_cast %17 : vector<16x16x576xbf16> to vector<256x576xbf16>
    %c0_36 = arith.constant 0 : index
    %c0_37 = arith.constant 0 : index
    %19 = vector.load %arg2[%c0_36, %c0_37] : memref<576x64xbf16, #tpu.memory_space<vmem>>, vector<576x64xbf16>
    %cst_38 = arith.constant dense<0.000000e+00> : vector<256x64xf32>
    %20 = tpu.matmul %18, %19, %cst_38 {dimension_numbers = #tpu.dot_dimension_numbers<[1], [0], [0], [1], [0, 0, 1, 1], [], []>} : vector<256x576xbf16>, vector<576x64xbf16>, vector<256x64xf32> -> vector<256x64xf32>
    %cst_39 = arith.constant 0.000000e+00 : f32
    %21 = vector.broadcast %cst_39 : f32 to vector<256x64xf32>
    %22 = arith.cmpf oge, %20, %21 : vector<256x64xf32>
    %23 = vector.broadcast %0 : f32 to vector<256x64xf32>
    %24 = arith.mulf %23, %20 : vector<256x64xf32>
    %25 = arith.select %22, %20, %24 : vector<256x64xi1>, vector<256x64xf32>
    %cst_40 = arith.constant 0.000000e+00 : bf16
    %26 = vector.broadcast %cst_40 : bf16 to vector<18x18x64xbf16>
    %c0_41 = arith.constant 0 : index
    %c0_42 = arith.constant 0 : index
    %c0_43 = arith.constant 0 : index
    %27 = vector.load %arg7[%c0_41, %c0_42, %c0_43] : memref<18x18x64xbf16, #tpu.memory_space<vmem>>, vector<18x18x64xbf16>
    tpu.vector_store %arg7[%c0_41, %c0_42, %c0_43], %26 {strides = array<i32>} : memref<18x18x64xbf16, #tpu.memory_space<vmem>>, vector<18x18x64xbf16>,
    %28 = vector.shape_cast %25 : vector<256x64xf32> to vector<16x16x64xf32>
    %29 = arith.truncf %28 : vector<16x16x64xf32> to vector<16x16x64xbf16>
    %c1_44 = arith.constant 1 : index
    %c1_45 = arith.constant 1 : index
    %c0_46 = arith.constant 0 : index
    %30 = vector.load %arg7[%c1_44, %c1_45, %c0_46] : memref<18x18x64xbf16, #tpu.memory_space<vmem>>, vector<16x16x64xbf16>
    tpu.vector_store %arg7[%c1_44, %c1_45, %c0_46], %29 {strides = array<i32>} : memref<18x18x64xbf16, #tpu.memory_space<vmem>>, vector<16x16x64xbf16>,
    %cst_47 = arith.constant 0.000000e+00 : f32
    %31 = vector.broadcast %cst_47 : f32 to vector<16x16x64xf32>
    %c0_48 = arith.constant 0 : index
    %c0_49 = arith.constant 0 : index
    %c0_50 = arith.constant 0 : index
    %32 = vector.load %arg7[%c0_48, %c0_49, %c0_50] : memref<18x18x64xbf16, #tpu.memory_space<vmem>>, vector<16x16x64xbf16>
    %33 = arith.extf %32 : vector<16x16x64xbf16> to vector<16x16x64xf32>
    %c0_51 = arith.constant 0 : index
    %c0_52 = arith.constant 0 : index
    %34 = vector.load %arg3[%c0_51, %c0_52] : memref<9x64xf32, #tpu.memory_space<vmem>>, vector<1x64xf32>
    %35 = vector.shape_cast %34 : vector<1x64xf32> to vector<64xf32>
    %36 = vector.shape_cast %35 : vector<64xf32> to vector<1x1x64xf32>
    %37 = vector.broadcast %36 : vector<1x1x64xf32> to vector<16x16x64xf32>
    %38 = arith.mulf %33, %37 : vector<16x16x64xf32>
    %39 = arith.addf %31, %38 : vector<16x16x64xf32>
    %c0_53 = arith.constant 0 : index
    %c1_54 = arith.constant 1 : index
    %c0_55 = arith.constant 0 : index
    %40 = vector.load %arg7[%c0_53, %c1_54, %c0_55] : memref<18x18x64xbf16, #tpu.memory_space<vmem>>, vector<16x16x64xbf16>
    %41 = arith.extf %40 : vector<16x16x64xbf16> to vector<16x16x64xf32>
    %c1_56 = arith.constant 1 : index
    %c0_57 = arith.constant 0 : index
    %42 = vector.load %arg3[%c1_56, %c0_57] : memref<9x64xf32, #tpu.memory_space<vmem>>, vector<1x64xf32>
    %43 = vector.shape_cast %42 : vector<1x64xf32> to vector<64xf32>
    %44 = vector.shape_cast %43 : vector<64xf32> to vector<1x1x64xf32>
    %45 = vector.broadcast %44 : vector<1x1x64xf32> to vector<16x16x64xf32>
    %46 = arith.mulf %41, %45 : vector<16x16x64xf32>
    %47 = arith.addf %39, %46 : vector<16x16x64xf32>
    %c0_58 = arith.constant 0 : index
    %c2_59 = arith.constant 2 : index
    %c0_60 = arith.constant 0 : index
    %48 = vector.load %arg7[%c0_58, %c2_59, %c0_60] : memref<18x18x64xbf16, #tpu.memory_space<vmem>>, vector<16x16x64xbf16>
    %49 = arith.extf %48 : vector<16x16x64xbf16> to vector<16x16x64xf32>
    %c2_61 = arith.constant 2 : index
    %c0_62 = arith.constant 0 : index
    %50 = vector.load %arg3[%c2_61, %c0_62] : memref<9x64xf32, #tpu.memory_space<vmem>>, vector<1x64xf32>
    %51 = vector.shape_cast %50 : vector<1x64xf32> to vector<64xf32>
    %52 = vector.shape_cast %51 : vector<64xf32> to vector<1x1x64xf32>
    %53 = vector.broadcast %52 : vector<1x1x64xf32> to vector<16x16x64xf32>
    %54 = arith.mulf %49, %53 : vector<16x16x64xf32>
    %55 = arith.addf %47, %54 : vector<16x16x64xf32>
    %c1_63 = arith.constant 1 : index
    %c0_64 = arith.constant 0 : index
    %c0_65 = arith.constant 0 : index
    %56 = vector.load %arg7[%c1_63, %c0_64, %c0_65] : memref<18x18x64xbf16, #tpu.memory_space<vmem>>, vector<16x16x64xbf16>
    %57 = arith.extf %56 : vector<16x16x64xbf16> to vector<16x16x64xf32>
    %c3 = arith.constant 3 : index
    %c0_66 = arith.constant 0 : index
    %58 = vector.load %arg3[%c3, %c0_66] : memref<9x64xf32, #tpu.memory_space<vmem>>, vector<1x64xf32>
    %59 = vector.shape_cast %58 : vector<1x64xf32> to vector<64xf32>
    %60 = vector.shape_cast %59 : vector<64xf32> to vector<1x1x64xf32>
    %61 = vector.broadcast %60 : vector<1x1x64xf32> to vector<16x16x64xf32>
    %62 = arith.mulf %57, %61 : vector<16x16x64xf32>
    %63 = arith.addf %55, %62 : vector<16x16x64xf32>
    %c1_67 = arith.constant 1 : index
    %c1_68 = arith.constant 1 : index
    %c0_69 = arith.constant 0 : index
    %64 = vector.load %arg7[%c1_67, %c1_68, %c0_69] : memref<18x18x64xbf16, #tpu.memory_space<vmem>>, vector<16x16x64xbf16>
    %65 = arith.extf %64 : vector<16x16x64xbf16> to vector<16x16x64xf32>
    %c4 = arith.constant 4 : index
    %c0_70 = arith.constant 0 : index
    %66 = vector.load %arg3[%c4, %c0_70] : memref<9x64xf32, #tpu.memory_space<vmem>>, vector<1x64xf32>
    %67 = vector.shape_cast %66 : vector<1x64xf32> to vector<64xf32>
    %68 = vector.shape_cast %67 : vector<64xf32> to vector<1x1x64xf32>
    %69 = vector.broadcast %68 : vector<1x1x64xf32> to vector<16x16x64xf32>
    %70 = arith.mulf %65, %69 : vector<16x16x64xf32>
    %71 = arith.addf %63, %70 : vector<16x16x64xf32>
    %c1_71 = arith.constant 1 : index
    %c2_72 = arith.constant 2 : index
    %c0_73 = arith.constant 0 : index
    %72 = vector.load %arg7[%c1_71, %c2_72, %c0_73] : memref<18x18x64xbf16, #tpu.memory_space<vmem>>, vector<16x16x64xbf16>
    %73 = arith.extf %72 : vector<16x16x64xbf16> to vector<16x16x64xf32>
    %c5 = arith.constant 5 : index
    %c0_74 = arith.constant 0 : index
    %74 = vector.load %arg3[%c5, %c0_74] : memref<9x64xf32, #tpu.memory_space<vmem>>, vector<1x64xf32>
    %75 = vector.shape_cast %74 : vector<1x64xf32> to vector<64xf32>
    %76 = vector.shape_cast %75 : vector<64xf32> to vector<1x1x64xf32>
    %77 = vector.broadcast %76 : vector<1x1x64xf32> to vector<16x16x64xf32>
    %78 = arith.mulf %73, %77 : vector<16x16x64xf32>
    %79 = arith.addf %71, %78 : vector<16x16x64xf32>
    %c2_75 = arith.constant 2 : index
    %c0_76 = arith.constant 0 : index
    %c0_77 = arith.constant 0 : index
    %80 = vector.load %arg7[%c2_75, %c0_76, %c0_77] : memref<18x18x64xbf16, #tpu.memory_space<vmem>>, vector<16x16x64xbf16>
    %81 = arith.extf %80 : vector<16x16x64xbf16> to vector<16x16x64xf32>
    %c6 = arith.constant 6 : index
    %c0_78 = arith.constant 0 : index
    %82 = vector.load %arg3[%c6, %c0_78] : memref<9x64xf32, #tpu.memory_space<vmem>>, vector<1x64xf32>
    %83 = vector.shape_cast %82 : vector<1x64xf32> to vector<64xf32>
    %84 = vector.shape_cast %83 : vector<64xf32> to vector<1x1x64xf32>
    %85 = vector.broadcast %84 : vector<1x1x64xf32> to vector<16x16x64xf32>
    %86 = arith.mulf %81, %85 : vector<16x16x64xf32>
    %87 = arith.addf %79, %86 : vector<16x16x64xf32>
    %c2_79 = arith.constant 2 : index
    %c1_80 = arith.constant 1 : index
    %c0_81 = arith.constant 0 : index
    %88 = vector.load %arg7[%c2_79, %c1_80, %c0_81] : memref<18x18x64xbf16, #tpu.memory_space<vmem>>, vector<16x16x64xbf16>
    %89 = arith.extf %88 : vector<16x16x64xbf16> to vector<16x16x64xf32>
    %c7 = arith.constant 7 : index
    %c0_82 = arith.constant 0 : index
    %90 = vector.load %arg3[%c7, %c0_82] : memref<9x64xf32, #tpu.memory_space<vmem>>, vector<1x64xf32>
    %91 = vector.shape_cast %90 : vector<1x64xf32> to vector<64xf32>
    %92 = vector.shape_cast %91 : vector<64xf32> to vector<1x1x64xf32>
    %93 = vector.broadcast %92 : vector<1x1x64xf32> to vector<16x16x64xf32>
    %94 = arith.mulf %89, %93 : vector<16x16x64xf32>
    %95 = arith.addf %87, %94 : vector<16x16x64xf32>
    %c2_83 = arith.constant 2 : index
    %c2_84 = arith.constant 2 : index
    %c0_85 = arith.constant 0 : index
    %96 = vector.load %arg7[%c2_83, %c2_84, %c0_85] : memref<18x18x64xbf16, #tpu.memory_space<vmem>>, vector<16x16x64xbf16>
    %97 = arith.extf %96 : vector<16x16x64xbf16> to vector<16x16x64xf32>
    %c8 = arith.constant 8 : index
    %c0_86 = arith.constant 0 : index
    %98 = vector.load %arg3[%c8, %c0_86] : memref<9x64xf32, #tpu.memory_space<vmem>>, vector<1x64xf32>
    %99 = vector.shape_cast %98 : vector<1x64xf32> to vector<64xf32>
    %100 = vector.shape_cast %99 : vector<64xf32> to vector<1x1x64xf32>
    %101 = vector.broadcast %100 : vector<1x1x64xf32> to vector<16x16x64xf32>
    %102 = arith.mulf %97, %101 : vector<16x16x64xf32>
    %103 = arith.addf %95, %102 : vector<16x16x64xf32>
    %cst_87 = arith.constant dense<0.000000e+00> : vector<16x16xf32>
    %104 = vector.multi_reduction <add>, %103, %cst_87 [2] : vector<16x16x64xf32> to vector<16x16xf32>
    %105 = vector.broadcast %1 : f32 to vector<16x16xf32>
    %106 = arith.addf %104, %105 : vector<16x16xf32>
    %c0_88 = arith.constant 0 : index
    %c0_89 = arith.constant 0 : index
    %c0_90 = arith.constant 0 : index
    %107 = vector.load %arg5[%c0_88, %c0_89, %c0_90] : memref<1x16x16xf32, #tpu.memory_space<vmem>>, vector<1x16x16xf32>
    %108 = vector.shape_cast %107 : vector<1x16x16xf32> to vector<16x16xf32>
    %109 = vector.shape_cast %106 : vector<16x16xf32> to vector<1x16x16xf32>
    tpu.vector_store %arg5[%c0_88, %c0_89, %c0_90], %109 {strides = array<i32>} : memref<1x16x16xf32, #tpu.memory_space<vmem>>, vector<1x16x16xf32>,
    return
  }
  func.func @transform_0(%arg0: i32) -> (i32, i32, i32, i32) {
    %c0_i32 = arith.constant 0 : i32
    %c0_i32_0 = arith.constant 0 : i32
    %c0_i32_1 = arith.constant 0 : i32
    %c0_i32_2 = arith.constant 0 : i32
    return %arg0, %c0_i32, %c0_i32_0, %c0_i32_1 : i32, i32, i32, i32
  }
  func.func @transform_1(%arg0: i32) -> (i32, i32) {
    %c0_i32 = arith.constant 0 : i32
    %c0_i32_0 = arith.constant 0 : i32
    %c0_i32_1 = arith.constant 0 : i32
    return %c0_i32, %c0_i32_0 : i32, i32
  }
  func.func @transform_2(%arg0: i32) -> (i32, i32) {
    %c0_i32 = arith.constant 0 : i32
    %c0_i32_0 = arith.constant 0 : i32
    %c0_i32_1 = arith.constant 0 : i32
    return %c0_i32, %c0_i32_0 : i32, i32
  }
  func.func @transform_3(%arg0: i32) -> i32 {
    %c0_i32 = arith.constant 0 : i32
    %c0_i32_0 = arith.constant 0 : i32
    return %c0_i32 : i32
  }
  func.func @transform_4(%arg0: i32) -> (i32, i32, i32) {
    %c0_i32 = arith.constant 0 : i32
    %c0_i32_0 = arith.constant 0 : i32
    %c0_i32_1 = arith.constant 0 : i32
    return %arg0, %c0_i32, %c0_i32_0 : i32, i32, i32
  }
}

</mosaic_0001>

<llo_original>
// kernel: to_clean_image_forward.1
$region0: #{to_clean_image_forward.1}
  #allocation0 [shape = 'u32[]', space=smem, size = 0x4, offset = 0x4, fixed_abs, tag = 'smem constant byte address 0x4 - core index']
  #allocation1 [shape = 'u32[72,128]{1,0:T(1,128)}', space=vmem, size = 0x9000, scoped, tag = 'internal scratch']
  #allocation2 [shape = 'bf16[18,18,64]{2,1,0:T(8,128)(2,1)}', space=vmem, size = 0x1b000, scoped, tag = 'scratch operand']
  #allocation3 [shape = 'bf16[18,18,64]{2,1,0:T(8,128)(2,1)}', space=vmem, size = 0x1b000, scoped, tag = 'scratch operand']
  %s0 = inlined_call_operand.hbm [shape: f32[2,16,16,64], index: 0, kind: input, shape index: {}]
  %s1 = inlined_call_operand.vmem [shape: bf16[576,64], index: 1, kind: input, shape index: {}]
  %s2 = inlined_call_operand.vmem [shape: f32[9,64], index: 2, kind: input, shape index: {}]
  %s3 = inlined_call_operand.vmem [shape: f32[2], index: 3, kind: input, shape index: {}]
  %s4 = inlined_call_operand.hbm [shape: f32[2,16,16], index: 4, kind: output, shape index: {}]
  %s5 = sld [smem:[#allocation0]]
  $region57: #{to_clean_image_forward.1} parent=0
    _
  %s7 = ssub.s32 1, %s5
  %s8 = scalar_select 0, %s7, %s5
  $region1: #{to_clean_image_forward.1} parent=0
    #allocation4 [shape = 'u8[262144]{0}', space=vmem, size = 0x40000, scoped, tag = 'input window, operand 0']
    #allocation5 [shape = 's32[2]{0}', space=sflag, size = 0x8, scoped, tag = 'scoped memory for to_clean_image_forward.1']
    #allocation6 [shape = 's32[2]{0}', space=sflag, size = 0x8, scoped, tag = 'scoped memory for to_clean_image_forward.1']
    #allocation7 [shape = 's32[2]{0}', space=sflag, size = 0x8, scoped, tag = 'scoped memory for to_clean_image_forward.1']
    #allocation8 [shape = 'u8[512]{0}', space=smem, size = 0x200, scoped, tag = 'input window, operand 3, single buffered']
    #allocation9 [shape = 'u8[16384]{0}', space=vmem, size = 0x4000, scoped, tag = 'output window, operand 0']
    %9 = vsyncpa [#allocation5], 0
    %s10 = scalar_lea.sflag [#allocation5], 1
    %11 = vsyncpa %s10, 0
    %12 = vsyncpa [#allocation7], 0
    %13 = vsyncpa [#allocation6], 0
    %s14 = scalar_lea.sflag [#allocation6], 1
    %15 = vsyncpa %s14, 0
    loop: start=0, step=1, limit=4
    $region2: #{to_clean_image_forward.1} parent=1 // loop_pre_header
      _
    $region3: #{to_clean_image_forward.1} parent=1 // loop_header
      %s17 = sphi 0, %s21
      %p18 = scmp.ge.s32.totalorder %s17, 4
      %s27 = sphi 0, %s29
      %s30 = sphi 0, %s27
      %s31 = sphi 0, %s30
      %s47 = sphi 0, %s31
      %s51 = sphi 0, %s51
      %s53 = sphi 0, %s51
      %s54 = sphi 0, %s53
      %s68 = sphi 0, %s54
      %s72 = sphi 0, %s72
      %s74 = sphi 0, %s72
      %s75 = sphi 0, %s74
      %s89 = sphi 0, %s75
      %s93 = sphi 0, %s93
      %s95 = sphi 0, %s93
      %s96 = sphi 0, %s95
      %s110 = sphi 0, %s96
      %s116 = sphi 0, %s118
      %s119 = sphi 0, %s116
      %s120 = sphi 0, %s119
      %s136 = sphi 0, %s120
    $region4: #{to_clean_image_forward.1} parent=1 // loop_header_branch
      %20 = sbr.rel (%p18) target = $region8
    $region5: #{to_clean_image_forward.1} parent=1 // loop_body
      %s22 = ssub.s32 %s17, 1
      %s23 = ssub.s32 %s17, 2
      %s24 = sadd.s32 %s17, 1
      %s25 = ssub.s32 %s17, %s24
      %p26 = scmp.eq.s32.totalorder %s25, 0
      %s28 = sadd.s32 %s27, 1
      %s29 = scalar_select %p26, %s27, %s28
      %p32 = pneg %p26
      %p33 = scmp.eq.s32.totalorder %s17, 1
      %p34 = por %p32, %p33
      %p35 = scmp.ne.s32.totalorder %s27, %s30
      %p36 = scmp.eq.s32.totalorder %s17, 0
      %p37 = por %p35, %p36
      %p38 = scmp.ne.s32.totalorder %s27, %s30
      %p39 = scmp.eq.s32.totalorder %s22, 1
      %p40 = por %p38, %p39
      %p41 = scmp.ne.s32.totalorder %s30, %s31
      %p42 = scmp.eq.s32.totalorder %s22, 0
      %p43 = por %p41, %p42
      %p44 = scmp.ne.s32.totalorder %s30, %s31
      %p45 = scmp.eq.s32.totalorder %s23, 1
      %p46 = por %p44, %p45
      %p48 = scmp.ne.s32.totalorder %s31, %s47
      %p49 = scmp.eq.s32.totalorder %s23, 0
      %p50 = por %p48, %p49
      %s52 = sadd.s32 %s51, 1
      %p55 = scmp.eq.s32.totalorder %s17, 1
      %p56 = scmp.ne.s32.totalorder %s51, %s53
      %p57 = scmp.eq.s32.totalorder %s17, 0
      %p58 = por %p56, %p57
      %p59 = scmp.ne.s32.totalorder %s51, %s53
      %p60 = scmp.eq.s32.totalorder %s22, 1
      %p61 = por %p59, %p60
      %p62 = scmp.ne.s32.totalorder %s53, %s54
      %p63 = scmp.eq.s32.totalorder %s22, 0
      %p64 = por %p62, %p63
      %p65 = scmp.ne.s32.totalorder %s53, %s54
      %p66 = scmp.eq.s32.totalorder %s23, 1
      %p67 = por %p65, %p66
      %p69 = scmp.ne.s32.totalorder %s54, %s68
      %p70 = scmp.eq.s32.totalorder %s23, 0
      %p71 = por %p69, %p70
      %s73 = sadd.s32 %s72, 1
      %p76 = scmp.eq.s32.totalorder %s17, 1
      %p77 = scmp.ne.s32.totalorder %s72, %s74
      %p78 = scmp.eq.s32.totalorder %s17, 0
      %p79 = por %p77, %p78
      %p80 = scmp.ne.s32.totalorder %s72, %s74
      %p81 = scmp.eq.s32.totalorder %s22, 1
      %p82 = por %p80, %p81
      %p83 = scmp.ne.s32.totalorder %s74, %s75
      %p84 = scmp.eq.s32.totalorder %s22, 0
      %p85 = por %p83, %p84
      %p86 = scmp.ne.s32.totalorder %s74, %s75
      %p87 = scmp.eq.s32.totalorder %s23, 1
      %p88 = por %p86, %p87
      %p90 = scmp.ne.s32.totalorder %s75, %s89
      %p91 = scmp.eq.s32.totalorder %s23, 0
      %p92 = por %p90, %p91
      %s94 = sadd.s32 %s93, 1
      %p97 = scmp.eq.s32.totalorder %s17, 1
      %p98 = scmp.ne.s32.totalorder %s93, %s95
      %p99 = scmp.eq.s32.totalorder %s17, 0
      %p100 = por %p98, %p99
      %p101 = scmp.ne.s32.totalorder %s93, %s95
      %p102 = scmp.eq.s32.totalorder %s22, 1
      %p103 = por %p101, %p102
      %p104 = scmp.ne.s32.totalorder %s95, %s96
      %p105 = scmp.eq.s32.totalorder %s22, 0
      %p106 = por %p104, %p105
      %p107 = scmp.ne.s32.totalorder %s95, %s96
      %p108 = scmp.eq.s32.totalorder %s23, 1
      %p109 = por %p107, %p108
      %p111 = scmp.ne.s32.totalorder %s96, %s110
      %p112 = scmp.eq.s32.totalorder %s23, 0
      %p113 = por %p111, %p112
      %s114 = ssub.s32 %s17, %s24
      %p115 = scmp.eq.s32.totalorder %s114, 0
      %s117 = sadd.s32 %s116, 1
      %s118 = scalar_select %p115, %s116, %s117
      %p121 = pneg %p115
      %p122 = scmp.eq.s32.totalorder %s17, 1
      %p123 = por %p121, %p122
      %p124 = scmp.ne.s32.totalorder %s116, %s119
      %p125 = scmp.eq.s32.totalorder %s17, 0
      %p126 = por %p124, %p125
      %p127 = scmp.ne.s32.totalorder %s116, %s119
      %p128 = scmp.eq.s32.totalorder %s22, 1
      %p129 = por %p127, %p128
      %p130 = scmp.ne.s32.totalorder %s119, %s120
      %p131 = scmp.eq.s32.totalorder %s22, 0
      %p132 = por %p130, %p131
      %p133 = scmp.ne.s32.totalorder %s119, %s120
      %p134 = scmp.eq.s32.totalorder %s23, 1
      %p135 = por %p133, %p134
      %p137 = scmp.ne.s32.totalorder %s120, %s136
      %p138 = scmp.eq.s32.totalorder %s23, 0
      %p139 = por %p137, %p138
      %p140 = scmp.le.s32.totalorder 1, %s17
      %p141 = scmp.lt.s32.totalorder %s17, 3
      %p142 = pnand %p140, %p141
      %p143 = pneg %p142
      // Predicated region
      $region9: #{to_clean_image_forward.1} parent=5 // pred_check
        _
      $region10: #{to_clean_image_forward.1} parent=5 // pred_check_branch
        %145 = sbr.rel (%p142) target = $region12
      $region11: #{to_clean_image_forward.1} parent=5 // pred_region
        %s146 = ssub.s32 %s17, 1
        // Predicated region
        $region13: #{to_clean_image_forward.1} parent=11 // pred_check
          %p147 = pneg %p64
        $region14: #{to_clean_image_forward.1} parent=11 // pred_check_branch
          %149 = sbr.rel (%p147) target = $region16
        $region15: #{to_clean_image_forward.1} parent=11 // pred_region
          _
        $region16: #{to_clean_image_forward.1} parent=11 // pred_fallthru
          _
        // Predicated region
        $region17: #{to_clean_image_forward.1} parent=11 // pred_check
          %p150 = pneg %p85
        $region18: #{to_clean_image_forward.1} parent=11 // pred_check_branch
          %152 = sbr.rel (%p150) target = $region20
        $region19: #{to_clean_image_forward.1} parent=11 // pred_region
          _
        $region20: #{to_clean_image_forward.1} parent=11 // pred_fallthru
          _
        // Predicated region
        $region21: #{to_clean_image_forward.1} parent=11 // pred_check
          %p153 = pneg %p106
        $region22: #{to_clean_image_forward.1} parent=11 // pred_check_branch
          %155 = sbr.rel (%p153) target = $region24
        $region23: #{to_clean_image_forward.1} parent=11 // pred_region
          %157 = vsyncadd [#allocation7], 0
          %s159 = sshll.u32 %s3, 4
          %s160 = int_to_ptr.vmem [resolvable:$true] %s159
          %162 = dma.vmem_to_smem %s160, 16, [#allocation8], [#allocation7]
        $region24: #{to_clean_image_forward.1} parent=11 // pred_fallthru
          _
      $region12: #{to_clean_image_forward.1} parent=5 // pred_fallthru
        _
      %p163 = scmp.lt.s32.totalorder %s17, 2
      // Predicated region
      $region25: #{to_clean_image_forward.1} parent=5 // pred_check
        %p164 = pneg %p163
      $region26: #{to_clean_image_forward.1} parent=5 // pred_check_branch
        %166 = sbr.rel (%p164) target = $region28
      $region27: #{to_clean_image_forward.1} parent=5 // pred_region
        // Predicated region
        $region29: #{to_clean_image_forward.1} parent=27 // pred_check
          %p167 = pneg %p37
        $region30: #{to_clean_image_forward.1} parent=27 // pred_check_branch
          %169 = sbr.rel (%p167) target = $region32
        $region31: #{to_clean_image_forward.1} parent=27 // pred_region
          %s170 = sand.u32 %s27, 1
          %s171 = scalar_lea.sflag [#allocation5], %s170
          %s172 = sand.u32 %s27, 1
          %s173 = smul.addr %s172, 256
          %s174 = scalar_lea.vmem [#allocation4], %s173
          %176 = vsyncadd %s171, 0
          %s177 = smul.addr %s17, 32
          %s178 = smul.addr %s177, 8
          %s179 = scalar_lea.hbm %s0, %s178
          %s180 = sshll.u32 %s179, 4
          %s181 = int_to_ptr.hbm [resolvable:$true] %s180
          %s182 = sshll.u32 %s174, 4
          %s183 = int_to_ptr.vmem [resolvable:$true] %s182
          %188 = dma.hbm_to_vmem [thread:$0]  %s181, 4096, %s183, %s171, 128, 128, 8
        $region32: #{to_clean_image_forward.1} parent=27 // pred_fallthru
          _
      $region28: #{to_clean_image_forward.1} parent=5 // pred_fallthru
        _
      %p189 = scmp.le.s32.totalorder 1, %s17
      %p190 = scmp.lt.s32.totalorder %s17, 3
      %p191 = pnand %p189, %p190
      %p192 = pneg %p191
      // Predicated region
      $region33: #{to_clean_image_forward.1} parent=5 // pred_check
        _
      $region34: #{to_clean_image_forward.1} parent=5 // pred_check_branch
        %194 = sbr.rel (%p191) target = $region36
      $region35: #{to_clean_image_forward.1} parent=5 // pred_region
        %s195 = ssub.s32 %s17, 1
        %s196 = sand.u32 %s30, 1
        %s197 = scalar_lea.sflag [#allocation5], %s196
        %s198 = sand.u32 %s30, 1
        %s199 = smul.addr %s198, 256
        %s200 = scalar_lea.vmem [#allocation4], %s199
        // Predicated region
        $region37: #{to_clean_image_forward.1} parent=35 // pred_check
          %p201 = pneg %p43
        $region38: #{to_clean_image_forward.1} parent=35 // pred_check_branch
          %203 = sbr.rel (%p201) target = $region40
        $region39: #{to_clean_image_forward.1} parent=35 // pred_region
          %205 = dma.done %s197, 4096
        $region40: #{to_clean_image_forward.1} parent=35 // pred_fallthru
          _
        // Predicated region
        $region41: #{to_clean_image_forward.1} parent=35 // pred_check
          %p206 = pneg %p106
        $region42: #{to_clean_image_forward.1} parent=35 // pred_check_branch
          %208 = sbr.rel (%p206) target = $region44
        $region43: #{to_clean_image_forward.1} parent=35 // pred_region
          %210 = dma.done [#allocation7], 16
        $region44: #{to_clean_image_forward.1} parent=35 // pred_fallthru
          _
        %211 = sfence
        %s212 = sand.u32 %s30, 1
        %s213 = scalar_lea.sflag [#allocation5], %s212
        %s214 = sand.u32 %s30, 1
        %s215 = smul.addr %s214, 256
        %s216 = scalar_lea.vmem [#allocation4], %s215
        %p217 = pneg %p43
        %p218 = pneg %p40
        %p219 = pneg %p64
        %p220 = pneg %p61
        %p221 = pneg %p85
        %p222 = pneg %p82
        %p223 = pneg %p106
        %p224 = pneg %p103
        %p225 = pneg %p132
        %p226 = pneg %p129
        %s227 = sand.u32 %s119, 1
        %s228 = scalar_lea.sflag [#allocation6], %s227
        %s229 = sand.u32 %s119, 1
        %s230 = smul.addr %s229, 16
        %s231 = scalar_lea.vmem [#allocation9], %s230
        %s233 = sld [smem:[#allocation8]]
        %s234 = sld [smem:[#allocation8 + $0x1]]
        %vm235 = vcmask 519168
        %236 = vst.msk [vmem:[#allocation2] sm:$0xf] %vm235, 0
        %237 = vst.msk [vmem:[#allocation2 + $0x4] sm:$0xf] %vm235, 0
        %vm238 = vcmask 516096
        %239 = vst.msk [vmem:[#allocation2 + $0x8] sm:$0x1] %vm238, 0
        %240 = vst.msk [vmem:[#allocation2 + $0xc] sm:$0xf] %vm235, 0
        %241 = vst.msk [vmem:[#allocation2 + $0x10] sm:$0xf] %vm235, 0
        %242 = vst.msk [vmem:[#allocation2 + $0x14] sm:$0x1] %vm238, 0
        %243 = vst.msk [vmem:[#allocation2 + $0x18] sm:$0xf] %vm235, 0
        %244 = vst.msk [vmem:[#allocation2 + $0x1c] sm:$0xf] %vm235, 0
        %245 = vst.msk [vmem:[#allocation2 + $0x20] sm:$0x1] %vm238, 0
        %246 = vst.msk [vmem:[#allocation2 + $0x24] sm:$0xf] %vm235, 0
        %247 = vst.msk [vmem:[#allocation2 + $0x28] sm:$0xf] %vm235, 0
        %248 = vst.msk [vmem:[#allocation2 + $0x2c] sm:$0x1] %vm238, 0
        %249 = vst.msk [vmem:[#allocation2 + $0x30] sm:$0xf] %vm235, 0
        %250 = vst.msk [vmem:[#allocation2 + $0x34] sm:$0xf] %vm235, 0
        %251 = vst.msk [vmem:[#allocation2 + $0x38] sm:$0x1] %vm238, 0
        %252 = vst.msk [vmem:[#allocation2 + $0x3c] sm:$0xf] %vm235, 0
        %253 = vst.msk [vmem:[#allocation2 + $0x40] sm:$0xf] %vm235, 0
        %254 = vst.msk [vmem:[#allocation2 + $0x44] sm:$0x1] %vm238, 0
        %255 = vst.msk [vmem:[#allocation2 + $0x48] sm:$0xf] %vm235, 0
        %256 = vst.msk [vmem:[#allocation2 + $0x4c] sm:$0xf] %vm235, 0
        %257 = vst.msk [vmem:[#allocation2 + $0x50] sm:$0x1] %vm238, 0
        %258 = vst.msk [vmem:[#allocation2 + $0x54] sm:$0xf] %vm235, 0
        %259 = vst.msk [vmem:[#allocation2 + $0x58] sm:$0xf] %vm235, 0
        %260 = vst.msk [vmem:[#allocation2 + $0x5c] sm:$0x1] %vm238, 0
        %261 = vst.msk [vmem:[#allocation2 + $0x60] sm:$0xf] %vm235, 0
        %262 = vst.msk [vmem:[#allocation2 + $0x64] sm:$0xf] %vm235, 0
        %263 = vst.msk [vmem:[#allocation2 + $0x68] sm:$0x1] %vm238, 0
        %264 = vst.msk [vmem:[#allocation2 + $0x6c] sm:$0xf] %vm235, 0
        %265 = vst.msk [vmem:[#allocation2 + $0x70] sm:$0xf] %vm235, 0
        %266 = vst.msk [vmem:[#allocation2 + $0x74] sm:$0x1] %vm238, 0
        %267 = vst.msk [vmem:[#allocation2 + $0x78] sm:$0xf] %vm235, 0
        %268 = vst.msk [vmem:[#allocation2 + $0x7c] sm:$0xf] %vm235, 0
        %269 = vst.msk [vmem:[#allocation2 + $0x80] sm:$0x1] %vm238, 0
        %270 = vst.msk [vmem:[#allocation2 + $0x84] sm:$0xf] %vm235, 0
        %271 = vst.msk [vmem:[#allocation2 + $0x88] sm:$0xf] %vm235, 0
        %272 = vst.msk [vmem:[#allocation2 + $0x8c] sm:$0x1] %vm238, 0
        %273 = vst.msk [vmem:[#allocation2 + $0x90] sm:$0xf] %vm235, 0
        %274 = vst.msk [vmem:[#allocation2 + $0x94] sm:$0xf] %vm235, 0
        %275 = vst.msk [vmem:[#allocation2 + $0x98] sm:$0x1] %vm238, 0
        %276 = vst.msk [vmem:[#allocation2 + $0x9c] sm:$0xf] %vm235, 0
        %277 = vst.msk [vmem:[#allocation2 + $0xa0] sm:$0xf] %vm235, 0
        %278 = vst.msk [vmem:[#allocation2 + $0xa4] sm:$0x1] %vm238, 0
        %279 = vst.msk [vmem:[#allocation2 + $0xa8] sm:$0xf] %vm235, 0
        %280 = vst.msk [vmem:[#allocation2 + $0xac] sm:$0xf] %vm235, 0
        %281 = vst.msk [vmem:[#allocation2 + $0xb0] sm:$0x1] %vm238, 0
        %282 = vst.msk [vmem:[#allocation2 + $0xb4] sm:$0xf] %vm235, 0
        %283 = vst.msk [vmem:[#allocation2 + $0xb8] sm:$0xf] %vm235, 0
        %284 = vst.msk [vmem:[#allocation2 + $0xbc] sm:$0x1] %vm238, 0
        %285 = vst.msk [vmem:[#allocation2 + $0xc0] sm:$0xf] %vm235, 0
        %286 = vst.msk [vmem:[#allocation2 + $0xc4] sm:$0xf] %vm235, 0
        %287 = vst.msk [vmem:[#allocation2 + $0xc8] sm:$0x1] %vm238, 0
        %288 = vst.msk [vmem:[#allocation2 + $0xcc] sm:$0xf] %vm235, 0
        %289 = vst.msk [vmem:[#allocation2 + $0xd0] sm:$0xf] %vm235, 0
        %290 = vst.msk [vmem:[#allocation2 + $0xd4] sm:$0x1] %vm238, 0
        %v291 = vld [vmem:[%s200] sm:$0xff]
        %v292 = vld [vmem:[%s200 + $0x8] sm:$0xff]
        %v293 = vld [vmem:[%s200 + $0x10] sm:$0xff]
        %v294 = vld [vmem:[%s200 + $0x18] sm:$0xff]
        %v295 = vld [vmem:[%s200 + $0x20] sm:$0xff]
        %v296 = vld [vmem:[%s200 + $0x28] sm:$0xff]
        %v297 = vld [vmem:[%s200 + $0x30] sm:$0xff]
        %v298 = vld [vmem:[%s200 + $0x38] sm:$0xff]
        %v299 = vld [vmem:[%s200 + $0x40] sm:$0xff]
        %v300 = vld [vmem:[%s200 + $0x48] sm:$0xff]
        %v301 = vld [vmem:[%s200 + $0x50] sm:$0xff]
        %v302 = vld [vmem:[%s200 + $0x58] sm:$0xff]
        %v303 = vld [vmem:[%s200 + $0x60] sm:$0xff]
        %v304 = vld [vmem:[%s200 + $0x68] sm:$0xff]
        %v305 = vld [vmem:[%s200 + $0x70] sm:$0xff]
        %v306 = vld [vmem:[%s200 + $0x78] sm:$0xff]
        %v307 = vld [vmem:[%s200 + $0x80] sm:$0xff]
        %v308 = vld [vmem:[%s200 + $0x88] sm:$0xff]
        %v309 = vld [vmem:[%s200 + $0x90] sm:$0xff]
        %v310 = vld [vmem:[%s200 + $0x98] sm:$0xff]
        %v311 = vld [vmem:[%s200 + $0xa0] sm:$0xff]
        %v312 = vld [vmem:[%s200 + $0xa8] sm:$0xff]
        %v313 = vld [vmem:[%s200 + $0xb0] sm:$0xff]
        %v314 = vld [vmem:[%s200 + $0xb8] sm:$0xff]
        %v315 = vld [vmem:[%s200 + $0xc0] sm:$0xff]
        %v316 = vld [vmem:[%s200 + $0xc8] sm:$0xff]
        %v317 = vld [vmem:[%s200 + $0xd0] sm:$0xff]
        %v318 = vld [vmem:[%s200 + $0xd8] sm:$0xff]
        %v319 = vld [vmem:[%s200 + $0xe0] sm:$0xff]
        %v320 = vld [vmem:[%s200 + $0xe8] sm:$0xff]
        %v321 = vld [vmem:[%s200 + $0xf0] sm:$0xff]
        %v322 = vld [vmem:[%s200 + $0xf8] sm:$0xff]
        %v323 = vpack.c.bf16 %v291, %v291
        %v324 = vpack.c.bf16 %v292, %v292
        %v325 = vpack.c.bf16 %v293, %v293
        %v326 = vpack.c.bf16 %v294, %v294
        %v327 = vpack.c.bf16 %v295, %v295
        %v328 = vpack.c.bf16 %v296, %v296
        %v329 = vpack.c.bf16 %v297, %v297
        %v330 = vpack.c.bf16 %v298, %v298
        %v331 = vpack.c.bf16 %v299, %v299
        %v332 = vpack.c.bf16 %v300, %v300
        %v333 = vpack.c.bf16 %v301, %v301
        %v334 = vpack.c.bf16 %v302, %v302
        %v335 = vpack.c.bf16 %v303, %v303
        %v336 = vpack.c.bf16 %v304, %v304
        %v337 = vpack.c.bf16 %v305, %v305
        %v338 = vpack.c.bf16 %v306, %v306
        %v339 = vpack.c.bf16 %v307, %v307
        %v340 = vpack.c.bf16 %v308, %v308
        %v341 = vpack.c.bf16 %v309, %v309
        %v342 = vpack.c.bf16 %v310, %v310
        %v343 = vpack.c.bf16 %v311, %v311
        %v344 = vpack.c.bf16 %v312, %v312
        %v345 = vpack.c.bf16 %v313, %v313
        %v346 = vpack.c.bf16 %v314, %v314
        %v347 = vpack.c.bf16 %v315, %v315
        %v348 = vpack.c.bf16 %v316, %v316
        %v349 = vpack.c.bf16 %v317, %v317
        %v350 = vpack.c.bf16 %v318, %v318
        %v351 = vpack.c.bf16 %v319, %v319
        %v352 = vpack.c.bf16 %v320, %v320
        %v353 = vpack.c.bf16 %v321, %v321
        %v354 = vpack.c.bf16 %v322, %v322
        %vm355 = vsmask.f32 256
        %vm356 = vsmask.f32 4368
        %vm357 = vmor %vm355, %vm356
        %v359 = vshrl.u32 %v323, 16
        %v361 = vrot.slane %v359, 7
        %v362 = vshll.u32 %v323, 16
        %v364 = vor.u32 %v361, %v362
        %v365 = vrot.slane %v361, 4
        %v367 = vshrl.u32 %v324, 16
        %v369 = vrot.slane %v367, 7
        %v370 = vshll.u32 %v324, 16
        %v372 = vor.u32 %v369, %v370
        %v373 = vsel %vm357, %v365, %v372
        %v374 = vrot.slane %v369, 4
        %v376 = vshrl.u32 %v325, 16
        %v378 = vrot.slane %v376, 7
        %v379 = vshll.u32 %v325, 16
        %v381 = vor.u32 %v378, %v379
        %v382 = vrot.slane %v378, 4
        %v384 = vshrl.u32 %v326, 16
        %v386 = vrot.slane %v384, 7
        %v387 = vshll.u32 %v326, 16
        %v389 = vor.u32 %v386, %v387
        %v390 = vsel %vm357, %v382, %v389
        %v391 = vrot.slane %v386, 4
        %v393 = vshrl.u32 %v327, 16
        %v395 = vrot.slane %v393, 7
        %v396 = vshll.u32 %v327, 16
        %v398 = vor.u32 %v395, %v396
        %v399 = vrot.slane %v395, 4
        %v401 = vshrl.u32 %v328, 16
        %v403 = vrot.slane %v401, 7
        %v404 = vshll.u32 %v328, 16
        %v406 = vor.u32 %v403, %v404
        %v407 = vsel %vm357, %v399, %v406
        %v408 = vrot.slane %v403, 4
        %v410 = vshrl.u32 %v329, 16
        %v412 = vrot.slane %v410, 7
        %v413 = vshll.u32 %v329, 16
        %v415 = vor.u32 %v412, %v413
        %v416 = vrot.slane %v412, 4
        %v418 = vshrl.u32 %v330, 16
        %v420 = vrot.slane %v418, 7
        %v421 = vshll.u32 %v330, 16
        %v423 = vor.u32 %v420, %v421
        %v424 = vsel %vm357, %v416, %v423
        %v425 = vrot.slane %v420, 4
        %v427 = vshrl.u32 %v331, 16
        %v429 = vrot.slane %v427, 7
        %v430 = vshll.u32 %v331, 16
        %v432 = vor.u32 %v429, %v430
        %v433 = vrot.slane %v429, 4
        %v435 = vshrl.u32 %v332, 16
        %v437 = vrot.slane %v435, 7
        %v438 = vshll.u32 %v332, 16
        %v440 = vor.u32 %v437, %v438
        %v441 = vsel %vm357, %v433, %v440
        %v442 = vrot.slane %v437, 4
        %v444 = vshrl.u32 %v333, 16
        %v446 = vrot.slane %v444, 7
        %v447 = vshll.u32 %v333, 16
        %v449 = vor.u32 %v446, %v447
        %v450 = vrot.slane %v446, 4
        %v452 = vshrl.u32 %v334, 16
        %v454 = vrot.slane %v452, 7
        %v455 = vshll.u32 %v334, 16
        %v457 = vor.u32 %v454, %v455
        %v458 = vsel %vm357, %v450, %v457
        %v459 = vrot.slane %v454, 4
        %v461 = vshrl.u32 %v335, 16
        %v463 = vrot.slane %v461, 7
        %v464 = vshll.u32 %v335, 16
        %v466 = vor.u32 %v463, %v464
        %v467 = vrot.slane %v463, 4
        %v469 = vshrl.u32 %v336, 16
        %v471 = vrot.slane %v469, 7
        %v472 = vshll.u32 %v336, 16
        %v474 = vor.u32 %v471, %v472
        %v475 = vsel %vm357, %v467, %v474
        %v476 = vrot.slane %v471, 4
        %v478 = vshrl.u32 %v337, 16
        %v480 = vrot.slane %v478, 7
        %v481 = vshll.u32 %v337, 16
        %v483 = vor.u32 %v480, %v481
        %v484 = vrot.slane %v480, 4
        %v486 = vshrl.u32 %v338, 16
        %v488 = vrot.slane %v486, 7
        %v489 = vshll.u32 %v338, 16
        %v491 = vor.u32 %v488, %v489
        %v492 = vsel %vm357, %v484, %v491
        %v493 = vrot.slane %v488, 4
        %v495 = vshrl.u32 %v339, 16
        %v497 = vrot.slane %v495, 7
        %v498 = vshll.u32 %v339, 16
        %v500 = vor.u32 %v497, %v498
        %v501 = vrot.slane %v497, 4
        %v503 = vshrl.u32 %v340, 16
        %v505 = vrot.slane %v503, 7
        %v506 = vshll.u32 %v340, 16
        %v508 = vor.u32 %v505, %v506
        %v509 = vsel %vm357, %v501, %v508
        %v510 = vrot.slane %v505, 4
        %v512 = vshrl.u32 %v341, 16
        %v514 = vrot.slane %v512, 7
        %v515 = vshll.u32 %v341, 16
        %v517 = vor.u32 %v514, %v515
        %v518 = vrot.slane %v514, 4
        %v520 = vshrl.u32 %v342, 16
        %v522 = vrot.slane %v520, 7
        %v523 = vshll.u32 %v342, 16
        %v525 = vor.u32 %v522, %v523
        %v526 = vsel %vm357, %v518, %v525
        %v527 = vrot.slane %v522, 4
        %v529 = vshrl.u32 %v343, 16
        %v531 = vrot.slane %v529, 7
        %v532 = vshll.u32 %v343, 16
        %v534 = vor.u32 %v531, %v532
        %v535 = vrot.slane %v531, 4
        %v537 = vshrl.u32 %v344, 16
        %v539 = vrot.slane %v537, 7
        %v540 = vshll.u32 %v344, 16
        %v542 = vor.u32 %v539, %v540
        %v543 = vsel %vm357, %v535, %v542
        %v544 = vrot.slane %v539, 4
        %v546 = vshrl.u32 %v345, 16
        %v548 = vrot.slane %v546, 7
        %v549 = vshll.u32 %v345, 16
        %v551 = vor.u32 %v548, %v549
        %v552 = vrot.slane %v548, 4
        %v554 = vshrl.u32 %v346, 16
        %v556 = vrot.slane %v554, 7
        %v557 = vshll.u32 %v346, 16
        %v559 = vor.u32 %v556, %v557
        %v560 = vsel %vm357, %v552, %v559
        %v561 = vrot.slane %v556, 4
        %v563 = vshrl.u32 %v347, 16
        %v565 = vrot.slane %v563, 7
        %v566 = vshll.u32 %v347, 16
        %v568 = vor.u32 %v565, %v566
        %v569 = vrot.slane %v565, 4
        %v571 = vshrl.u32 %v348, 16
        %v573 = vrot.slane %v571, 7
        %v574 = vshll.u32 %v348, 16
        %v576 = vor.u32 %v573, %v574
        %v577 = vsel %vm357, %v569, %v576
        %v578 = vrot.slane %v573, 4
        %v580 = vshrl.u32 %v349, 16
        %v582 = vrot.slane %v580, 7
        %v583 = vshll.u32 %v349, 16
        %v585 = vor.u32 %v582, %v583
        %v586 = vrot.slane %v582, 4
        %v588 = vshrl.u32 %v350, 16
        %v590 = vrot.slane %v588, 7
        %v591 = vshll.u32 %v350, 16
        %v593 = vor.u32 %v590, %v591
        %v594 = vsel %vm357, %v586, %v593
        %v595 = vrot.slane %v590, 4
        %v597 = vshrl.u32 %v351, 16
        %v599 = vrot.slane %v597, 7
        %v600 = vshll.u32 %v351, 16
        %v602 = vor.u32 %v599, %v600
        %v603 = vrot.slane %v599, 4
        %v605 = vshrl.u32 %v352, 16
        %v607 = vrot.slane %v605, 7
        %v608 = vshll.u32 %v352, 16
        %v610 = vor.u32 %v607, %v608
        %v611 = vsel %vm357, %v603, %v610
        %v612 = vrot.slane %v607, 4
        %v614 = vshrl.u32 %v353, 16
        %v616 = vrot.slane %v614, 7
        %v617 = vshll.u32 %v353, 16
        %v619 = vor.u32 %v616, %v617
        %v620 = vrot.slane %v616, 4
        %v622 = vshrl.u32 %v354, 16
        %v624 = vrot.slane %v622, 7
        %v625 = vshll.u32 %v354, 16
        %v627 = vor.u32 %v624, %v625
        %v628 = vsel %vm357, %v620, %v627
        %v629 = vrot.slane %v624, 4
        %s678 = scalar_lea.vmem [#allocation2], 12
        %vm679 = vcmask 519168
        %vm680 = vsmask.f32 7938
        %vm681 = vmand %vm679, %vm680
        %v682 = vld [vmem:[%s678] sm:$0xf]
        %v683 = vsel %vm681, %v364, %v682
        %684 = vst [vmem:[%s678] sm:$0xf] %v683
        %685 = vst.msk [vmem:[%s678 + $0x4] sm:$0xf] %vm235, %v373
        %vm686 = vcmask 516096
        %vm687 = vmand %vm686, %vm355
        %v688 = vld [vmem:[%s678 + $0x8] sm:$0x1]
        %v689 = vsel %vm687, %v374, %v688
        %690 = vst [vmem:[%s678 + $0x8] sm:$0x1] %v689
        %v691 = vld [vmem:[%s678 + $0xc] sm:$0xf]
        %v692 = vsel %vm681, %v381, %v691
        %693 = vst [vmem:[%s678 + $0xc] sm:$0xf] %v692
        %694 = vst.msk [vmem:[%s678 + $0x10] sm:$0xf] %vm235, %v390
        %v695 = vld [vmem:[%s678 + $0x14] sm:$0x1]
        %v696 = vsel %vm687, %v391, %v695
        %697 = vst [vmem:[%s678 + $0x14] sm:$0x1] %v696
        %v698 = vld [vmem:[%s678 + $0x18] sm:$0xf]
        %v699 = vsel %vm681, %v398, %v698
        %700 = vst [vmem:[%s678 + $0x18] sm:$0xf] %v699
        %701 = vst.msk [vmem:[%s678 + $0x1c] sm:$0xf] %vm235, %v407
        %v702 = vld [vmem:[%s678 + $0x20] sm:$0x1]
        %v703 = vsel %vm687, %v408, %v702
        %704 = vst [vmem:[%s678 + $0x20] sm:$0x1] %v703
        %v705 = vld [vmem:[%s678 + $0x24] sm:$0xf]
        %v706 = vsel %vm681, %v415, %v705
        %707 = vst [vmem:[%s678 + $0x24] sm:$0xf] %v706
        %708 = vst.msk [vmem:[%s678 + $0x28] sm:$0xf] %vm235, %v424
        %v709 = vld [vmem:[%s678 + $0x2c] sm:$0x1]
        %v710 = vsel %vm687, %v425, %v709
        %711 = vst [vmem:[%s678 + $0x2c] sm:$0x1] %v710
        %v712 = vld [vmem:[%s678 + $0x30] sm:$0xf]
        %v713 = vsel %vm681, %v432, %v712
        %714 = vst [vmem:[%s678 + $0x30] sm:$0xf] %v713
        %715 = vst.msk [vmem:[%s678 + $0x34] sm:$0xf] %vm235, %v441
        %v716 = vld [vmem:[%s678 + $0x38] sm:$0x1]
        %v717 = vsel %vm687, %v442, %v716
        %718 = vst [vmem:[%s678 + $0x38] sm:$0x1] %v717
        %v719 = vld [vmem:[%s678 + $0x3c] sm:$0xf]
        %v720 = vsel %vm681, %v449, %v719
        %721 = vst [vmem:[%s678 + $0x3c] sm:$0xf] %v720
        %722 = vst.msk [vmem:[%s678 + $0x40] sm:$0xf] %vm235, %v458
        %v723 = vld [vmem:[%s678 + $0x44] sm:$0x1]
        %v724 = vsel %vm687, %v459, %v723
        %725 = vst [vmem:[%s678 + $0x44] sm:$0x1] %v724
        %v726 = vld [vmem:[%s678 + $0x48] sm:$0xf]
        %v727 = vsel %vm681, %v466, %v726
        %728 = vst [vmem:[%s678 + $0x48] sm:$0xf] %v727
        %729 = vst.msk [vmem:[%s678 + $0x4c] sm:$0xf] %vm235, %v475
        %v730 = vld [vmem:[%s678 + $0x50] sm:$0x1]
        %v731 = vsel %vm687, %v476, %v730
        %732 = vst [vmem:[%s678 + $0x50] sm:$0x1] %v731
        %v733 = vld [vmem:[%s678 + $0x54] sm:$0xf]
        %v734 = vsel %vm681, %v483, %v733
        %735 = vst [vmem:[%s678 + $0x54] sm:$0xf] %v734
        %736 = vst.msk [vmem:[%s678 + $0x58] sm:$0xf] %vm235, %v492
        %v737 = vld [vmem:[%s678 + $0x5c] sm:$0x1]
        %v738 = vsel %vm687, %v493, %v737
        %739 = vst [vmem:[%s678 + $0x5c] sm:$0x1] %v738
        %v740 = vld [vmem:[%s678 + $0x60] sm:$0xf]
        %v741 = vsel %vm681, %v500, %v740
        %742 = vst [vmem:[%s678 + $0x60] sm:$0xf] %v741
        %743 = vst.msk [vmem:[%s678 + $0x64] sm:$0xf] %vm235, %v509
        %v744 = vld [vmem:[%s678 + $0x68] sm:$0x1]
        %v745 = vsel %vm687, %v510, %v744
        %746 = vst [vmem:[%s678 + $0x68] sm:$0x1] %v745
        %v747 = vld [vmem:[%s678 + $0x6c] sm:$0xf]
        %v748 = vsel %vm681, %v517, %v747
        %749 = vst [vmem:[%s678 + $0x6c] sm:$0xf] %v748
        %750 = vst.msk [vmem:[%s678 + $0x70] sm:$0xf] %vm235, %v526
        %v751 = vld [vmem:[%s678 + $0x74] sm:$0x1]
        %v752 = vsel %vm687, %v527, %v751
        %753 = vst [vmem:[%s678 + $0x74] sm:$0x1] %v752
        %v754 = vld [vmem:[%s678 + $0x78] sm:$0xf]
        %v755 = vsel %vm681, %v534, %v754
        %756 = vst [vmem:[%s678 + $0x78] sm:$0xf] %v755
        %757 = vst.msk [vmem:[%s678 + $0x7c] sm:$0xf] %vm235, %v543
        %v758 = vld [vmem:[%s678 + $0x80] sm:$0x1]
        %v759 = vsel %vm687, %v544, %v758
        %760 = vst [vmem:[%s678 + $0x80] sm:$0x1] %v759
        %v761 = vld [vmem:[%s678 + $0x84] sm:$0xf]
        %v762 = vsel %vm681, %v551, %v761
        %763 = vst [vmem:[%s678 + $0x84] sm:$0xf] %v762
        %764 = vst.msk [vmem:[%s678 + $0x88] sm:$0xf] %vm235, %v560
        %v765 = vld [vmem:[%s678 + $0x8c] sm:$0x1]
        %v766 = vsel %vm687, %v561, %v765
        %767 = vst [vmem:[%s678 + $0x8c] sm:$0x1] %v766
        %v768 = vld [vmem:[%s678 + $0x90] sm:$0xf]
        %v769 = vsel %vm681, %v568, %v768
        %770 = vst [vmem:[%s678 + $0x90] sm:$0xf] %v769
        %771 = vst.msk [vmem:[%s678 + $0x94] sm:$0xf] %vm235, %v577
        %v772 = vld [vmem:[%s678 + $0x98] sm:$0x1]
        %v773 = vsel %vm687, %v578, %v772
        %774 = vst [vmem:[%s678 + $0x98] sm:$0x1] %v773
        %v775 = vld [vmem:[%s678 + $0x9c] sm:$0xf]
        %v776 = vsel %vm681, %v585, %v775
        %777 = vst [vmem:[%s678 + $0x9c] sm:$0xf] %v776
        %778 = vst.msk [vmem:[%s678 + $0xa0] sm:$0xf] %vm235, %v594
        %v779 = vld [vmem:[%s678 + $0xa4] sm:$0x1]
        %v780 = vsel %vm687, %v595, %v779
        %781 = vst [vmem:[%s678 + $0xa4] sm:$0x1] %v780
        %v782 = vld [vmem:[%s678 + $0xa8] sm:$0xf]
        %v783 = vsel %vm681, %v602, %v782
        %784 = vst [vmem:[%s678 + $0xa8] sm:$0xf] %v783
        %785 = vst.msk [vmem:[%s678 + $0xac] sm:$0xf] %vm235, %v611
        %v786 = vld [vmem:[%s678 + $0xb0] sm:$0x1]
        %v787 = vsel %vm687, %v612, %v786
        %788 = vst [vmem:[%s678 + $0xb0] sm:$0x1] %v787
        %v789 = vld [vmem:[%s678 + $0xb4] sm:$0xf]
        %v790 = vsel %vm681, %v619, %v789
        %791 = vst [vmem:[%s678 + $0xb4] sm:$0xf] %v790
        %792 = vst.msk [vmem:[%s678 + $0xb8] sm:$0xf] %vm235, %v628
        %v793 = vld [vmem:[%s678 + $0xbc] sm:$0x1]
        %v794 = vsel %vm687, %v629, %v793
        %795 = vst [vmem:[%s678 + $0xbc] sm:$0x1] %v794
        %v796 = vld [vmem:[#allocation2] sm:$0xf]
        %v797 = vld [vmem:[#allocation2 + $0x4] sm:$0xf]
        %v798 = vld [vmem:[#allocation2 + $0xc] sm:$0xf]
        %v799 = vld [vmem:[#allocation2 + $0x10] sm:$0xf]
        %v800 = vld [vmem:[#allocation2 + $0x18] sm:$0xf]
        %v801 = vld [vmem:[#allocation2 + $0x1c] sm:$0xf]
        %v802 = vld [vmem:[#allocation2 + $0x24] sm:$0xf]
        %v803 = vld [vmem:[#allocation2 + $0x28] sm:$0xf]
        %v804 = vld [vmem:[#allocation2 + $0x30] sm:$0xf]
        %v805 = vld [vmem:[#allocation2 + $0x34] sm:$0xf]
        %v806 = vld [vmem:[#allocation2 + $0x3c] sm:$0xf]
        %v807 = vld [vmem:[#allocation2 + $0x40] sm:$0xf]
        %v808 = vld [vmem:[#allocation2 + $0x48] sm:$0xf]
        %v809 = vld [vmem:[#allocation2 + $0x4c] sm:$0xf]
        %v810 = vld [vmem:[#allocation2 + $0x54] sm:$0xf]
        %v811 = vld [vmem:[#allocation2 + $0x58] sm:$0xf]
        %v812 = vld [vmem:[#allocation2 + $0x60] sm:$0xf]
        %v813 = vld [vmem:[#allocation2 + $0x64] sm:$0xf]
        %v814 = vld [vmem:[#allocation2 + $0x6c] sm:$0xf]
        %v815 = vld [vmem:[#allocation2 + $0x70] sm:$0xf]
        %v816 = vld [vmem:[#allocation2 + $0x78] sm:$0xf]
        %v817 = vld [vmem:[#allocation2 + $0x7c] sm:$0xf]
        %v818 = vld [vmem:[#allocation2 + $0x84] sm:$0xf]
        %v819 = vld [vmem:[#allocation2 + $0x88] sm:$0xf]
        %v820 = vld [vmem:[#allocation2 + $0x90] sm:$0xf]
        %v821 = vld [vmem:[#allocation2 + $0x94] sm:$0xf]
        %v822 = vld [vmem:[#allocation2 + $0x9c] sm:$0xf]
        %v823 = vld [vmem:[#allocation2 + $0xa0] sm:$0xf]
        %v824 = vld [vmem:[#allocation2 + $0xa8] sm:$0xf]
        %v825 = vld [vmem:[#allocation2 + $0xac] sm:$0xf]
        %v826 = vld [vmem:[#allocation2 + $0xb4] sm:$0xf]
        %v827 = vld [vmem:[#allocation2 + $0xb8] sm:$0xf]
        %v828 = vld [vmem:[#allocation2 + $0x8] sm:$0x1]
        %v829 = vld [vmem:[#allocation2 + $0x14] sm:$0x1]
        %v830 = vld [vmem:[#allocation2 + $0x20] sm:$0x1]
        %v831 = vld [vmem:[#allocation2 + $0x2c] sm:$0x1]
        %v832 = vld [vmem:[#allocation2 + $0x38] sm:$0x1]
        %v833 = vld [vmem:[#allocation2 + $0x44] sm:$0x1]
        %v834 = vld [vmem:[#allocation2 + $0x50] sm:$0x1]
        %v835 = vld [vmem:[#allocation2 + $0x5c] sm:$0x1]
        %v836 = vld [vmem:[#allocation2 + $0x68] sm:$0x1]
        %v837 = vld [vmem:[#allocation2 + $0x74] sm:$0x1]
        %v838 = vld [vmem:[#allocation2 + $0x80] sm:$0x1]
        %v839 = vld [vmem:[#allocation2 + $0x8c] sm:$0x1]
        %v840 = vld [vmem:[#allocation2 + $0x98] sm:$0x1]
        %v841 = vld [vmem:[#allocation2 + $0xa4] sm:$0x1]
        %v842 = vld [vmem:[#allocation2 + $0xb0] sm:$0x1]
        %v843 = vld [vmem:[#allocation2 + $0xbc] sm:$0x1]
        %v844 = vld [vmem:[#allocation2] sm:$0xe]
        %v845 = vld [vmem:[#allocation2 + $0xc] sm:$0xe]
        %v846 = vld [vmem:[#allocation2 + $0x18] sm:$0xe]
        %v847 = vld [vmem:[#allocation2 + $0x24] sm:$0xe]
        %v848 = vld [vmem:[#allocation2 + $0x30] sm:$0xe]
        %v849 = vld [vmem:[#allocation2 + $0x3c] sm:$0xe]
        %v850 = vld [vmem:[#allocation2 + $0x48] sm:$0xe]
        %v851 = vld [vmem:[#allocation2 + $0x54] sm:$0xe]
        %v852 = vld [vmem:[#allocation2 + $0x60] sm:$0xe]
        %v853 = vld [vmem:[#allocation2 + $0x6c] sm:$0xe]
        %v854 = vld [vmem:[#allocation2 + $0x78] sm:$0xe]
        %v855 = vld [vmem:[#allocation2 + $0x84] sm:$0xe]
        %v856 = vld [vmem:[#allocation2 + $0x90] sm:$0xe]
        %v857 = vld [vmem:[#allocation2 + $0x9c] sm:$0xe]
        %v858 = vld [vmem:[#allocation2 + $0xa8] sm:$0xe]
        %v859 = vld [vmem:[#allocation2 + $0xb4] sm:$0xe]
        %v860 = vld [vmem:[%s678] sm:$0xf]
        %v861 = vld [vmem:[%s678 + $0x4] sm:$0xf]
        %v862 = vld [vmem:[%s678 + $0xc] sm:$0xf]
        %v863 = vld [vmem:[%s678 + $0x10] sm:$0xf]
        %v864 = vld [vmem:[%s678 + $0x18] sm:$0xf]
        %v865 = vld [vmem:[%s678 + $0x1c] sm:$0xf]
        %v866 = vld [vmem:[%s678 + $0x24] sm:$0xf]
        %v867 = vld [vmem:[%s678 + $0x28] sm:$0xf]
        %v868 = vld [vmem:[%s678 + $0x30] sm:$0xf]
        %v869 = vld [vmem:[%s678 + $0x34] sm:$0xf]
        %v870 = vld [vmem:[%s678 + $0x3c] sm:$0xf]
        %v871 = vld [vmem:[%s678 + $0x40] sm:$0xf]
        %v872 = vld [vmem:[%s678 + $0x48] sm:$0xf]
        %v873 = vld [vmem:[%s678 + $0x4c] sm:$0xf]
        %v874 = vld [vmem:[%s678 + $0x54] sm:$0xf]
        %v875 = vld [vmem:[%s678 + $0x58] sm:$0xf]
        %v876 = vld [vmem:[%s678 + $0x60] sm:$0xf]
        %v877 = vld [vmem:[%s678 + $0x64] sm:$0xf]
        %v878 = vld [vmem:[%s678 + $0x6c] sm:$0xf]
        %v879 = vld [vmem:[%s678 + $0x70] sm:$0xf]
        %v880 = vld [vmem:[%s678 + $0x78] sm:$0xf]
        %v881 = vld [vmem:[%s678 + $0x7c] sm:$0xf]
        %v882 = vld [vmem:[%s678 + $0x84] sm:$0xf]
        %v883 = vld [vmem:[%s678 + $0x88] sm:$0xf]
        %v884 = vld [vmem:[%s678 + $0x90] sm:$0xf]
        %v885 = vld [vmem:[%s678 + $0x94] sm:$0xf]
        %v886 = vld [vmem:[%s678 + $0x9c] sm:$0xf]
        %v887 = vld [vmem:[%s678 + $0xa0] sm:$0xf]
        %v888 = vld [vmem:[%s678 + $0xa8] sm:$0xf]
        %v889 = vld [vmem:[%s678 + $0xac] sm:$0xf]
        %v890 = vld [vmem:[%s678 + $0xb4] sm:$0xf]
        %v891 = vld [vmem:[%s678 + $0xb8] sm:$0xf]
        %v892 = vld [vmem:[%s678 + $0x8] sm:$0x1]
        %v893 = vld [vmem:[%s678 + $0x14] sm:$0x1]
        %v894 = vld [vmem:[%s678 + $0x20] sm:$0x1]
        %v895 = vld [vmem:[%s678 + $0x2c] sm:$0x1]
        %v896 = vld [vmem:[%s678 + $0x38] sm:$0x1]
        %v897 = vld [vmem:[%s678 + $0x44] sm:$0x1]
        %v898 = vld [vmem:[%s678 + $0x50] sm:$0x1]
        %v899 = vld [vmem:[%s678 + $0x5c] sm:$0x1]
        %v900 = vld [vmem:[%s678 + $0x68] sm:$0x1]
        %v901 = vld [vmem:[%s678 + $0x74] sm:$0x1]
        %v902 = vld [vmem:[%s678 + $0x80] sm:$0x1]
        %v903 = vld [vmem:[%s678 + $0x8c] sm:$0x1]
        %v904 = vld [vmem:[%s678 + $0x98] sm:$0x1]
        %v905 = vld [vmem:[%s678 + $0xa4] sm:$0x1]
        %v906 = vld [vmem:[%s678 + $0xb0] sm:$0x1]
        %v907 = vld [vmem:[%s678 + $0xbc] sm:$0x1]
        %v908 = vld [vmem:[%s678] sm:$0xe]
        %v909 = vld [vmem:[%s678 + $0xc] sm:$0xe]
        %v910 = vld [vmem:[%s678 + $0x18] sm:$0xe]
        %v911 = vld [vmem:[%s678 + $0x24] sm:$0xe]
        %v912 = vld [vmem:[%s678 + $0x30] sm:$0xe]
        %v913 = vld [vmem:[%s678 + $0x3c] sm:$0xe]
        %v914 = vld [vmem:[%s678 + $0x48] sm:$0xe]
        %v915 = vld [vmem:[%s678 + $0x54] sm:$0xe]
        %v916 = vld [vmem:[%s678 + $0x60] sm:$0xe]
        %v917 = vld [vmem:[%s678 + $0x6c] sm:$0xe]
        %v918 = vld [vmem:[%s678 + $0x78] sm:$0xe]
        %v919 = vld [vmem:[%s678 + $0x84] sm:$0xe]
        %v920 = vld [vmem:[%s678 + $0x90] sm:$0xe]
        %v921 = vld [vmem:[%s678 + $0x9c] sm:$0xe]
        %v922 = vld [vmem:[%s678 + $0xa8] sm:$0xe]
        %v923 = vld [vmem:[%s678 + $0xb4] sm:$0xe]
        %s924 = scalar_lea.vmem [#allocation2], 24
        %v925 = vld [vmem:[%s924] sm:$0xf]
        %v926 = vld [vmem:[%s924 + $0x4] sm:$0xf]
        %v927 = vld [vmem:[%s924 + $0xc] sm:$0xf]
        %v928 = vld [vmem:[%s924 + $0x10] sm:$0xf]
        %v929 = vld [vmem:[%s924 + $0x18] sm:$0xf]
        %v930 = vld [vmem:[%s924 + $0x1c] sm:$0xf]
        %v931 = vld [vmem:[%s924 + $0x24] sm:$0xf]
        %v932 = vld [vmem:[%s924 + $0x28] sm:$0xf]
        %v933 = vld [vmem:[%s924 + $0x30] sm:$0xf]
        %v934 = vld [vmem:[%s924 + $0x34] sm:$0xf]
        %v935 = vld [vmem:[%s924 + $0x3c] sm:$0xf]
        %v936 = vld [vmem:[%s924 + $0x40] sm:$0xf]
        %v937 = vld [vmem:[%s924 + $0x48] sm:$0xf]
        %v938 = vld [vmem:[%s924 + $0x4c] sm:$0xf]
        %v939 = vld [vmem:[%s924 + $0x54] sm:$0xf]
        %v940 = vld [vmem:[%s924 + $0x58] sm:$0xf]
        %v941 = vld [vmem:[%s924 + $0x60] sm:$0xf]
        %v942 = vld [vmem:[%s924 + $0x64] sm:$0xf]
        %v943 = vld [vmem:[%s924 + $0x6c] sm:$0xf]
        %v944 = vld [vmem:[%s924 + $0x70] sm:$0xf]
        %v945 = vld [vmem:[%s924 + $0x78] sm:$0xf]
        %v946 = vld [vmem:[%s924 + $0x7c] sm:$0xf]
        %v947 = vld [vmem:[%s924 + $0x84] sm:$0xf]
        %v948 = vld [vmem:[%s924 + $0x88] sm:$0xf]
        %v949 = vld [vmem:[%s924 + $0x90] sm:$0xf]
        %v950 = vld [vmem:[%s924 + $0x94] sm:$0xf]
        %v951 = vld [vmem:[%s924 + $0x9c] sm:$0xf]
        %v952 = vld [vmem:[%s924 + $0xa0] sm:$0xf]
        %v953 = vld [vmem:[%s924 + $0xa8] sm:$0xf]
        %v954 = vld [vmem:[%s924 + $0xac] sm:$0xf]
        %v955 = vld [vmem:[%s924 + $0xb4] sm:$0xf]
        %v956 = vld [vmem:[%s924 + $0xb8] sm:$0xf]
        %v957 = vld [vmem:[%s924 + $0x8] sm:$0x1]
        %v958 = vld [vmem:[%s924 + $0x14] sm:$0x1]
        %v959 = vld [vmem:[%s924 + $0x20] sm:$0x1]
        %v960 = vld [vmem:[%s924 + $0x2c] sm:$0x1]
        %v961 = vld [vmem:[%s924 + $0x38] sm:$0x1]
        %v962 = vld [vmem:[%s924 + $0x44] sm:$0x1]
        %v963 = vld [vmem:[%s924 + $0x50] sm:$0x1]
        %v964 = vld [vmem:[%s924 + $0x5c] sm:$0x1]
        %v965 = vld [vmem:[%s924 + $0x68] sm:$0x1]
        %v966 = vld [vmem:[%s924 + $0x74] sm:$0x1]
        %v967 = vld [vmem:[%s924 + $0x80] sm:$0x1]
        %v968 = vld [vmem:[%s924 + $0x8c] sm:$0x1]
        %v969 = vld [vmem:[%s924 + $0x98] sm:$0x1]
        %v970 = vld [vmem:[%s924 + $0xa4] sm:$0x1]
        %v971 = vld [vmem:[%s924 + $0xb0] sm:$0x1]
        %v972 = vld [vmem:[%s924 + $0xbc] sm:$0x1]
        %v973 = vld [vmem:[%s924] sm:$0xe]
        %v974 = vld [vmem:[%s924 + $0xc] sm:$0xe]
        %v975 = vld [vmem:[%s924 + $0x18] sm:$0xe]
        %v976 = vld [vmem:[%s924 + $0x24] sm:$0xe]
        %v977 = vld [vmem:[%s924 + $0x30] sm:$0xe]
        %v978 = vld [vmem:[%s924 + $0x3c] sm:$0xe]
        %v979 = vld [vmem:[%s924 + $0x48] sm:$0xe]
        %v980 = vld [vmem:[%s924 + $0x54] sm:$0xe]
        %v981 = vld [vmem:[%s924 + $0x60] sm:$0xe]
        %v982 = vld [vmem:[%s924 + $0x6c] sm:$0xe]
        %v983 = vld [vmem:[%s924 + $0x78] sm:$0xe]
        %v984 = vld [vmem:[%s924 + $0x84] sm:$0xe]
        %v985 = vld [vmem:[%s924 + $0x90] sm:$0xe]
        %v986 = vld [vmem:[%s924 + $0x9c] sm:$0xe]
        %v987 = vld [vmem:[%s924 + $0xa8] sm:$0xe]
        %v988 = vld [vmem:[%s924 + $0xb4] sm:$0xe]
        %v1021 = vunpack.c.l.b16 %v796
        %v1022 = vunpack.c.l.b16 %v797
        %v1023 = vunpack.c.l.b16 %v798
        %v1024 = vunpack.c.l.b16 %v799
        %v1025 = vunpack.c.l.b16 %v800
        %v1026 = vunpack.c.l.b16 %v801
        %v1027 = vunpack.c.l.b16 %v802
        %v1028 = vunpack.c.l.b16 %v803
        %v1029 = vunpack.c.l.b16 %v804
        %v1030 = vunpack.c.l.b16 %v805
        %v1031 = vunpack.c.l.b16 %v806
        %v1032 = vunpack.c.l.b16 %v807
        %v1033 = vunpack.c.l.b16 %v808
        %v1034 = vunpack.c.l.b16 %v809
        %v1035 = vunpack.c.l.b16 %v810
        %v1036 = vunpack.c.l.b16 %v811
        %v1037 = vunpack.c.l.b16 %v812
        %v1038 = vunpack.c.l.b16 %v813
        %v1039 = vunpack.c.l.b16 %v814
        %v1040 = vunpack.c.l.b16 %v815
        %v1041 = vunpack.c.l.b16 %v816
        %v1042 = vunpack.c.l.b16 %v817
        %v1043 = vunpack.c.l.b16 %v818
        %v1044 = vunpack.c.l.b16 %v819
        %v1045 = vunpack.c.l.b16 %v820
        %v1046 = vunpack.c.l.b16 %v821
        %v1047 = vunpack.c.l.b16 %v822
        %v1048 = vunpack.c.l.b16 %v823
        %v1049 = vunpack.c.l.b16 %v824
        %v1050 = vunpack.c.l.b16 %v825
        %v1051 = vunpack.c.l.b16 %v826
        %v1052 = vunpack.c.l.b16 %v827
        %v1053 = vpack.c.b16 %v1022, %v1021
        %v1054 = vpack.c.b16 %v1024, %v1023
        %v1055 = vpack.c.b16 %v1026, %v1025
        %v1056 = vpack.c.b16 %v1028, %v1027
        %v1057 = vpack.c.b16 %v1030, %v1029
        %v1058 = vpack.c.b16 %v1032, %v1031
        %v1059 = vpack.c.b16 %v1034, %v1033
        %v1060 = vpack.c.b16 %v1036, %v1035
        %v1061 = vpack.c.b16 %v1038, %v1037
        %v1062 = vpack.c.b16 %v1040, %v1039
        %v1063 = vpack.c.b16 %v1042, %v1041
        %v1064 = vpack.c.b16 %v1044, %v1043
        %v1065 = vpack.c.b16 %v1046, %v1045
        %v1066 = vpack.c.b16 %v1048, %v1047
        %v1067 = vpack.c.b16 %v1050, %v1049
        %v1068 = vpack.c.b16 %v1052, %v1051
        %v1085 = vunpack.c.l.b16 %v828
        %v1086 = vunpack.c.l.b16 %v829
        %v1087 = vunpack.c.l.b16 %v830
        %v1088 = vunpack.c.l.b16 %v831
        %v1089 = vunpack.c.l.b16 %v832
        %v1090 = vunpack.c.l.b16 %v833
        %v1091 = vunpack.c.l.b16 %v834
        %v1092 = vunpack.c.l.b16 %v835
        %v1093 = vunpack.c.l.b16 %v836
        %v1094 = vunpack.c.l.b16 %v837
        %v1095 = vunpack.c.l.b16 %v838
        %v1096 = vunpack.c.l.b16 %v839
        %v1097 = vunpack.c.l.b16 %v840
        %v1098 = vunpack.c.l.b16 %v841
        %v1099 = vunpack.c.l.b16 %v842
        %v1100 = vunpack.c.l.b16 %v843
        %v1101 = vpack.c.b16 %v1085, %v1085
        %v1102 = vpack.c.b16 %v1086, %v1086
        %v1103 = vpack.c.b16 %v1087, %v1087
        %v1104 = vpack.c.b16 %v1088, %v1088
        %v1105 = vpack.c.b16 %v1089, %v1089
        %v1106 = vpack.c.b16 %v1090, %v1090
        %v1107 = vpack.c.b16 %v1091, %v1091
        %v1108 = vpack.c.b16 %v1092, %v1092
        %v1109 = vpack.c.b16 %v1093, %v1093
        %v1110 = vpack.c.b16 %v1094, %v1094
        %v1111 = vpack.c.b16 %v1095, %v1095
        %v1112 = vpack.c.b16 %v1096, %v1096
        %v1113 = vpack.c.b16 %v1097, %v1097
        %v1114 = vpack.c.b16 %v1098, %v1098
        %v1115 = vpack.c.b16 %v1099, %v1099
        %v1116 = vpack.c.b16 %v1100, %v1100
        %vm1117 = vsmask.f32 7424
        %v1119 = vshrl.u32 %v1053, 16
        %v1121 = vshll.u32 %v1053, 16
        %v1123 = vrot.slane %v1121, 1
        %v1124 = vor.u32 %v1119, %v1123
        %v1126 = vshll.u32 %v1101, 16
        %v1128 = vrot.slane %v1126, 1
        %v1129 = vsel %vm1117, %v1124, %v1128
        %v1131 = vshrl.u32 %v1054, 16
        %v1133 = vshll.u32 %v1054, 16
        %v1135 = vrot.slane %v1133, 1
        %v1136 = vor.u32 %v1131, %v1135
        %v1138 = vshll.u32 %v1102, 16
        %v1140 = vrot.slane %v1138, 1
        %v1141 = vsel %vm1117, %v1136, %v1140
        %v1143 = vshrl.u32 %v1055, 16
        %v1145 = vshll.u32 %v1055, 16
        %v1147 = vrot.slane %v1145, 1
        %v1148 = vor.u32 %v1143, %v1147
        %v1150 = vshll.u32 %v1103, 16
        %v1152 = vrot.slane %v1150, 1
        %v1153 = vsel %vm1117, %v1148, %v1152
        %v1155 = vshrl.u32 %v1056, 16
        %v1157 = vshll.u32 %v1056, 16
        %v1159 = vrot.slane %v1157, 1
        %v1160 = vor.u32 %v1155, %v1159
        %v1162 = vshll.u32 %v1104, 16
        %v1164 = vrot.slane %v1162, 1
        %v1165 = vsel %vm1117, %v1160, %v1164
        %v1167 = vshrl.u32 %v1057, 16
        %v1169 = vshll.u32 %v1057, 16
        %v1171 = vrot.slane %v1169, 1
        %v1172 = vor.u32 %v1167, %v1171
        %v1174 = vshll.u32 %v1105, 16
        %v1176 = vrot.slane %v1174, 1
        %v1177 = vsel %vm1117, %v1172, %v1176
        %v1179 = vshrl.u32 %v1058, 16
        %v1181 = vshll.u32 %v1058, 16
        %v1183 = vrot.slane %v1181, 1
        %v1184 = vor.u32 %v1179, %v1183
        %v1186 = vshll.u32 %v1106, 16
        %v1188 = vrot.slane %v1186, 1
        %v1189 = vsel %vm1117, %v1184, %v1188
        %v1191 = vshrl.u32 %v1059, 16
        %v1193 = vshll.u32 %v1059, 16
        %v1195 = vrot.slane %v1193, 1
        %v1196 = vor.u32 %v1191, %v1195
        %v1198 = vshll.u32 %v1107, 16
        %v1200 = vrot.slane %v1198, 1
        %v1201 = vsel %vm1117, %v1196, %v1200
        %v1203 = vshrl.u32 %v1060, 16
        %v1205 = vshll.u32 %v1060, 16
        %v1207 = vrot.slane %v1205, 1
        %v1208 = vor.u32 %v1203, %v1207
        %v1210 = vshll.u32 %v1108, 16
        %v1212 = vrot.slane %v1210, 1
        %v1213 = vsel %vm1117, %v1208, %v1212
        %v1215 = vshrl.u32 %v1061, 16
        %v1217 = vshll.u32 %v1061, 16
        %v1219 = vrot.slane %v1217, 1
        %v1220 = vor.u32 %v1215, %v1219
        %v1222 = vshll.u32 %v1109, 16
        %v1224 = vrot.slane %v1222, 1
        %v1225 = vsel %vm1117, %v1220, %v1224
        %v1227 = vshrl.u32 %v1062, 16
        %v1229 = vshll.u32 %v1062, 16
        %v1231 = vrot.slane %v1229, 1
        %v1232 = vor.u32 %v1227, %v1231
        %v1234 = vshll.u32 %v1110, 16
        %v1236 = vrot.slane %v1234, 1
        %v1237 = vsel %vm1117, %v1232, %v1236
        %v1239 = vshrl.u32 %v1063, 16
        %v1241 = vshll.u32 %v1063, 16
        %v1243 = vrot.slane %v1241, 1
        %v1244 = vor.u32 %v1239, %v1243
        %v1246 = vshll.u32 %v1111, 16
        %v1248 = vrot.slane %v1246, 1
        %v1249 = vsel %vm1117, %v1244, %v1248
        %v1251 = vshrl.u32 %v1064, 16
        %v1253 = vshll.u32 %v1064, 16
        %v1255 = vrot.slane %v1253, 1
        %v1256 = vor.u32 %v1251, %v1255
        %v1258 = vshll.u32 %v1112, 16
        %v1260 = vrot.slane %v1258, 1
        %v1261 = vsel %vm1117, %v1256, %v1260
        %v1263 = vshrl.u32 %v1065, 16
        %v1265 = vshll.u32 %v1065, 16
        %v1267 = vrot.slane %v1265, 1
        %v1268 = vor.u32 %v1263, %v1267
        %v1270 = vshll.u32 %v1113, 16
        %v1272 = vrot.slane %v1270, 1
        %v1273 = vsel %vm1117, %v1268, %v1272
        %v1275 = vshrl.u32 %v1066, 16
        %v1277 = vshll.u32 %v1066, 16
        %v1279 = vrot.slane %v1277, 1
        %v1280 = vor.u32 %v1275, %v1279
        %v1282 = vshll.u32 %v1114, 16
        %v1284 = vrot.slane %v1282, 1
        %v1285 = vsel %vm1117, %v1280, %v1284
        %v1287 = vshrl.u32 %v1067, 16
        %v1289 = vshll.u32 %v1067, 16
        %v1291 = vrot.slane %v1289, 1
        %v1292 = vor.u32 %v1287, %v1291
        %v1294 = vshll.u32 %v1115, 16
        %v1296 = vrot.slane %v1294, 1
        %v1297 = vsel %vm1117, %v1292, %v1296
        %v1299 = vshrl.u32 %v1068, 16
        %v1301 = vshll.u32 %v1068, 16
        %v1303 = vrot.slane %v1301, 1
        %v1304 = vor.u32 %v1299, %v1303
        %v1306 = vshll.u32 %v1116, 16
        %v1308 = vrot.slane %v1306, 1
        %v1309 = vsel %vm1117, %v1304, %v1308
        %1310 = vrot.lane.b32.xlu0 %v1129, 64
        %v1311 = vpop.permute.xlu0 %1310
        %1312 = vrot.lane.b32.xlu0 %v1141, 64
        %v1313 = vpop.permute.xlu0 %1312
        %1314 = vrot.lane.b32.xlu0 %v1153, 64
        %v1315 = vpop.permute.xlu0 %1314
        %1316 = vrot.lane.b32.xlu0 %v1165, 64
        %v1317 = vpop.permute.xlu0 %1316
        %1318 = vrot.lane.b32.xlu0 %v1177, 64
        %v1319 = vpop.permute.xlu0 %1318
        %1320 = vrot.lane.b32.xlu0 %v1189, 64
        %v1321 = vpop.permute.xlu0 %1320
        %1322 = vrot.lane.b32.xlu0 %v1201, 64
        %v1323 = vpop.permute.xlu0 %1322
        %1324 = vrot.lane.b32.xlu0 %v1213, 64
        %v1325 = vpop.permute.xlu0 %1324
        %1326 = vrot.lane.b32.xlu0 %v1225, 64
        %v1327 = vpop.permute.xlu0 %1326
        %1328 = vrot.lane.b32.xlu0 %v1237, 64
        %v1329 = vpop.permute.xlu0 %1328
        %1330 = vrot.lane.b32.xlu0 %v1249, 64
        %v1331 = vpop.permute.xlu0 %1330
        %1332 = vrot.lane.b32.xlu0 %v1261, 64
        %v1333 = vpop.permute.xlu0 %1332
        %1334 = vrot.lane.b32.xlu0 %v1273, 64
        %v1335 = vpop.permute.xlu0 %1334
        %1336 = vrot.lane.b32.xlu0 %v1285, 64
        %v1337 = vpop.permute.xlu0 %1336
        %1338 = vrot.lane.b32.xlu0 %v1297, 64
        %v1339 = vpop.permute.xlu0 %1338
        %1340 = vrot.lane.b32.xlu0 %v1309, 64
        %v1341 = vpop.permute.xlu0 %1340
        %v1358 = vunpack.c.l.b16 %v844
        %v1359 = vunpack.c.l.b16 %v845
        %v1360 = vunpack.c.l.b16 %v846
        %v1361 = vunpack.c.l.b16 %v847
        %v1362 = vunpack.c.l.b16 %v848
        %v1363 = vunpack.c.l.b16 %v849
        %v1364 = vunpack.c.l.b16 %v850
        %v1365 = vunpack.c.l.b16 %v851
        %v1366 = vunpack.c.l.b16 %v852
        %v1367 = vunpack.c.l.b16 %v853
        %v1368 = vunpack.c.l.b16 %v854
        %v1369 = vunpack.c.l.b16 %v855
        %v1370 = vunpack.c.l.b16 %v856
        %v1371 = vunpack.c.l.b16 %v857
        %v1372 = vunpack.c.l.b16 %v858
        %v1373 = vunpack.c.l.b16 %v859
        %v1374 = vpack.c.b16 %v1022, %v1358
        %v1375 = vpack.c.b16 %v1024, %v1359
        %v1376 = vpack.c.b16 %v1026, %v1360
        %v1377 = vpack.c.b16 %v1028, %v1361
        %v1378 = vpack.c.b16 %v1030, %v1362
        %v1379 = vpack.c.b16 %v1032, %v1363
        %v1380 = vpack.c.b16 %v1034, %v1364
        %v1381 = vpack.c.b16 %v1036, %v1365
        %v1382 = vpack.c.b16 %v1038, %v1366
        %v1383 = vpack.c.b16 %v1040, %v1367
        %v1384 = vpack.c.b16 %v1042, %v1368
        %v1385 = vpack.c.b16 %v1044, %v1369
        %v1386 = vpack.c.b16 %v1046, %v1370
        %v1387 = vpack.c.b16 %v1048, %v1371
        %v1388 = vpack.c.b16 %v1050, %v1372
        %v1389 = vpack.c.b16 %v1052, %v1373
        %vm1390 = vcmask 1046528
        %v1391 = vrot.slane %v1374, 1
        %v1392 = vrot.slane %v1101, 1
        %v1393 = vsel %vm1390, %v1391, %v1392
        %v1394 = vrot.slane %v1375, 1
        %v1395 = vrot.slane %v1102, 1
        %v1396 = vsel %vm1390, %v1394, %v1395
        %v1397 = vrot.slane %v1376, 1
        %v1398 = vrot.slane %v1103, 1
        %v1399 = vsel %vm1390, %v1397, %v1398
        %v1400 = vrot.slane %v1377, 1
        %v1401 = vrot.slane %v1104, 1
        %v1402 = vsel %vm1390, %v1400, %v1401
        %v1403 = vrot.slane %v1378, 1
        %v1404 = vrot.slane %v1105, 1
        %v1405 = vsel %vm1390, %v1403, %v1404
        %v1406 = vrot.slane %v1379, 1
        %v1407 = vrot.slane %v1106, 1
        %v1408 = vsel %vm1390, %v1406, %v1407
        %v1409 = vrot.slane %v1380, 1
        %v1410 = vrot.slane %v1107, 1
        %v1411 = vsel %vm1390, %v1409, %v1410
        %v1412 = vrot.slane %v1381, 1
        %v1413 = vrot.slane %v1108, 1
        %v1414 = vsel %vm1390, %v1412, %v1413
        %v1415 = vrot.slane %v1382, 1
        %v1416 = vrot.slane %v1109, 1
        %v1417 = vsel %vm1390, %v1415, %v1416
        %v1418 = vrot.slane %v1383, 1
        %v1419 = vrot.slane %v1110, 1
        %v1420 = vsel %vm1390, %v1418, %v1419
        %v1421 = vrot.slane %v1384, 1
        %v1422 = vrot.slane %v1111, 1
        %v1423 = vsel %vm1390, %v1421, %v1422
        %v1424 = vrot.slane %v1385, 1
        %v1425 = vrot.slane %v1112, 1
        %v1426 = vsel %vm1390, %v1424, %v1425
        %v1427 = vrot.slane %v1386, 1
        %v1428 = vrot.slane %v1113, 1
        %v1429 = vsel %vm1390, %v1427, %v1428
        %v1430 = vrot.slane %v1387, 1
        %v1431 = vrot.slane %v1114, 1
        %v1432 = vsel %vm1390, %v1430, %v1431
        %v1433 = vrot.slane %v1388, 1
        %v1434 = vrot.slane %v1115, 1
        %v1435 = vsel %vm1390, %v1433, %v1434
        %v1436 = vrot.slane %v1389, 1
        %v1437 = vrot.slane %v1116, 1
        %v1438 = vsel %vm1390, %v1436, %v1437
        %v1471 = vunpack.c.l.b16 %v860
        %v1472 = vunpack.c.l.b16 %v861
        %v1473 = vunpack.c.l.b16 %v862
        %v1474 = vunpack.c.l.b16 %v863
        %v1475 = vunpack.c.l.b16 %v864
        %v1476 = vunpack.c.l.b16 %v865
        %v1477 = vunpack.c.l.b16 %v866
        %v1478 = vunpack.c.l.b16 %v867
        %v1479 = vunpack.c.l.b16 %v868
        %v1480 = vunpack.c.l.b16 %v869
        %v1481 = vunpack.c.l.b16 %v870
        %v1482 = vunpack.c.l.b16 %v871
        %v1483 = vunpack.c.l.b16 %v872
        %v1484 = vunpack.c.l.b16 %v873
        %v1485 = vunpack.c.l.b16 %v874
        %v1486 = vunpack.c.l.b16 %v875
        %v1487 = vunpack.c.l.b16 %v876
        %v1488 = vunpack.c.l.b16 %v877
        %v1489 = vunpack.c.l.b16 %v878
        %v1490 = vunpack.c.l.b16 %v879
        %v1491 = vunpack.c.l.b16 %v880
        %v1492 = vunpack.c.l.b16 %v881
        %v1493 = vunpack.c.l.b16 %v882
        %v1494 = vunpack.c.l.b16 %v883
        %v1495 = vunpack.c.l.b16 %v884
        %v1496 = vunpack.c.l.b16 %v885
        %v1497 = vunpack.c.l.b16 %v886
        %v1498 = vunpack.c.l.b16 %v887
        %v1499 = vunpack.c.l.b16 %v888
        %v1500 = vunpack.c.l.b16 %v889
        %v1501 = vunpack.c.l.b16 %v890
        %v1502 = vunpack.c.l.b16 %v891
        %v1503 = vpack.c.b16 %v1472, %v1471
        %v1504 = vpack.c.b16 %v1474, %v1473
        %v1505 = vpack.c.b16 %v1476, %v1475
        %v1506 = vpack.c.b16 %v1478, %v1477
        %v1507 = vpack.c.b16 %v1480, %v1479
        %v1508 = vpack.c.b16 %v1482, %v1481
        %v1509 = vpack.c.b16 %v1484, %v1483
        %v1510 = vpack.c.b16 %v1486, %v1485
        %v1511 = vpack.c.b16 %v1488, %v1487
        %v1512 = vpack.c.b16 %v1490, %v1489
        %v1513 = vpack.c.b16 %v1492, %v1491
        %v1514 = vpack.c.b16 %v1494, %v1493
        %v1515 = vpack.c.b16 %v1496, %v1495
        %v1516 = vpack.c.b16 %v1498, %v1497
        %v1517 = vpack.c.b16 %v1500, %v1499
        %v1518 = vpack.c.b16 %v1502, %v1501
        %1519 = vrot.lane.b32.xlu0 %v1503, 64
        %v1520 = vpop.permute.xlu0 %1519
        %1521 = vrot.lane.b32.xlu0 %v1504, 64
        %v1522 = vpop.permute.xlu0 %1521
        %1523 = vrot.lane.b32.xlu0 %v1505, 64
        %v1524 = vpop.permute.xlu0 %1523
        %1525 = vrot.lane.b32.xlu0 %v1506, 64
        %v1526 = vpop.permute.xlu0 %1525
        %1527 = vrot.lane.b32.xlu0 %v1507, 64
        %v1528 = vpop.permute.xlu0 %1527
        %1529 = vrot.lane.b32.xlu0 %v1508, 64
        %v1530 = vpop.permute.xlu0 %1529
        %1531 = vrot.lane.b32.xlu0 %v1509, 64
        %v1532 = vpop.permute.xlu0 %1531
        %1533 = vrot.lane.b32.xlu0 %v1510, 64
        %v1534 = vpop.permute.xlu0 %1533
        %1535 = vrot.lane.b32.xlu0 %v1511, 64
        %v1536 = vpop.permute.xlu0 %1535
        %1537 = vrot.lane.b32.xlu0 %v1512, 64
        %v1538 = vpop.permute.xlu0 %1537
        %1539 = vrot.lane.b32.xlu0 %v1513, 64
        %v1540 = vpop.permute.xlu0 %1539
        %1541 = vrot.lane.b32.xlu0 %v1514, 64
        %v1542 = vpop.permute.xlu0 %1541
        %1543 = vrot.lane.b32.xlu0 %v1515, 64
        %v1544 = vpop.permute.xlu0 %1543
        %1545 = vrot.lane.b32.xlu0 %v1516, 64
        %v1546 = vpop.permute.xlu0 %1545
        %1547 = vrot.lane.b32.xlu0 %v1517, 64
        %v1548 = vpop.permute.xlu0 %1547
        %1549 = vrot.lane.b32.xlu0 %v1518, 64
        %v1550 = vpop.permute.xlu0 %1549
        %v1567 = vunpack.c.l.b16 %v892
        %v1568 = vunpack.c.l.b16 %v893
        %v1569 = vunpack.c.l.b16 %v894
        %v1570 = vunpack.c.l.b16 %v895
        %v1571 = vunpack.c.l.b16 %v896
        %v1572 = vunpack.c.l.b16 %v897
        %v1573 = vunpack.c.l.b16 %v898
        %v1574 = vunpack.c.l.b16 %v899
        %v1575 = vunpack.c.l.b16 %v900
        %v1576 = vunpack.c.l.b16 %v901
        %v1577 = vunpack.c.l.b16 %v902
        %v1578 = vunpack.c.l.b16 %v903
        %v1579 = vunpack.c.l.b16 %v904
        %v1580 = vunpack.c.l.b16 %v905
        %v1581 = vunpack.c.l.b16 %v906
        %v1582 = vunpack.c.l.b16 %v907
        %v1583 = vpack.c.b16 %v1567, %v1567
        %v1584 = vpack.c.b16 %v1568, %v1568
        %v1585 = vpack.c.b16 %v1569, %v1569
        %v1586 = vpack.c.b16 %v1570, %v1570
        %v1587 = vpack.c.b16 %v1571, %v1571
        %v1588 = vpack.c.b16 %v1572, %v1572
        %v1589 = vpack.c.b16 %v1573, %v1573
        %v1590 = vpack.c.b16 %v1574, %v1574
        %v1591 = vpack.c.b16 %v1575, %v1575
        %v1592 = vpack.c.b16 %v1576, %v1576
        %v1593 = vpack.c.b16 %v1577, %v1577
        %v1594 = vpack.c.b16 %v1578, %v1578
        %v1595 = vpack.c.b16 %v1579, %v1579
        %v1596 = vpack.c.b16 %v1580, %v1580
        %v1597 = vpack.c.b16 %v1581, %v1581
        %v1598 = vpack.c.b16 %v1582, %v1582
        %v1600 = vshrl.u32 %v1503, 16
        %v1602 = vshll.u32 %v1503, 16
        %v1604 = vrot.slane %v1602, 1
        %v1605 = vor.u32 %v1600, %v1604
        %v1607 = vshll.u32 %v1583, 16
        %v1609 = vrot.slane %v1607, 1
        %v1610 = vsel %vm1117, %v1605, %v1609
        %v1612 = vshrl.u32 %v1504, 16
        %v1614 = vshll.u32 %v1504, 16
        %v1616 = vrot.slane %v1614, 1
        %v1617 = vor.u32 %v1612, %v1616
        %v1619 = vshll.u32 %v1584, 16
        %v1621 = vrot.slane %v1619, 1
        %v1622 = vsel %vm1117, %v1617, %v1621
        %v1624 = vshrl.u32 %v1505, 16
        %v1626 = vshll.u32 %v1505, 16
        %v1628 = vrot.slane %v1626, 1
        %v1629 = vor.u32 %v1624, %v1628
        %v1631 = vshll.u32 %v1585, 16
        %v1633 = vrot.slane %v1631, 1
        %v1634 = vsel %vm1117, %v1629, %v1633
        %v1636 = vshrl.u32 %v1506, 16
        %v1638 = vshll.u32 %v1506, 16
        %v1640 = vrot.slane %v1638, 1
        %v1641 = vor.u32 %v1636, %v1640
        %v1643 = vshll.u32 %v1586, 16
        %v1645 = vrot.slane %v1643, 1
        %v1646 = vsel %vm1117, %v1641, %v1645
        %v1648 = vshrl.u32 %v1507, 16
        %v1650 = vshll.u32 %v1507, 16
        %v1652 = vrot.slane %v1650, 1
        %v1653 = vor.u32 %v1648, %v1652
        %v1655 = vshll.u32 %v1587, 16
        %v1657 = vrot.slane %v1655, 1
        %v1658 = vsel %vm1117, %v1653, %v1657
        %v1660 = vshrl.u32 %v1508, 16
        %v1662 = vshll.u32 %v1508, 16
        %v1664 = vrot.slane %v1662, 1
        %v1665 = vor.u32 %v1660, %v1664
        %v1667 = vshll.u32 %v1588, 16
        %v1669 = vrot.slane %v1667, 1
        %v1670 = vsel %vm1117, %v1665, %v1669
        %v1672 = vshrl.u32 %v1509, 16
        %v1674 = vshll.u32 %v1509, 16
        %v1676 = vrot.slane %v1674, 1
        %v1677 = vor.u32 %v1672, %v1676
        %v1679 = vshll.u32 %v1589, 16
        %v1681 = vrot.slane %v1679, 1
        %v1682 = vsel %vm1117, %v1677, %v1681
        %v1684 = vshrl.u32 %v1510, 16
        %v1686 = vshll.u32 %v1510, 16
        %v1688 = vrot.slane %v1686, 1
        %v1689 = vor.u32 %v1684, %v1688
        %v1691 = vshll.u32 %v1590, 16
        %v1693 = vrot.slane %v1691, 1
        %v1694 = vsel %vm1117, %v1689, %v1693
        %v1696 = vshrl.u32 %v1511, 16
        %v1698 = vshll.u32 %v1511, 16
        %v1700 = vrot.slane %v1698, 1
        %v1701 = vor.u32 %v1696, %v1700
        %v1703 = vshll.u32 %v1591, 16
        %v1705 = vrot.slane %v1703, 1
        %v1706 = vsel %vm1117, %v1701, %v1705
        %v1708 = vshrl.u32 %v1512, 16
        %v1710 = vshll.u32 %v1512, 16
        %v1712 = vrot.slane %v1710, 1
        %v1713 = vor.u32 %v1708, %v1712
        %v1715 = vshll.u32 %v1592, 16
        %v1717 = vrot.slane %v1715, 1
        %v1718 = vsel %vm1117, %v1713, %v1717
        %v1720 = vshrl.u32 %v1513, 16
        %v1722 = vshll.u32 %v1513, 16
        %v1724 = vrot.slane %v1722, 1
        %v1725 = vor.u32 %v1720, %v1724
        %v1727 = vshll.u32 %v1593, 16
        %v1729 = vrot.slane %v1727, 1
        %v1730 = vsel %vm1117, %v1725, %v1729
        %v1732 = vshrl.u32 %v1514, 16
        %v1734 = vshll.u32 %v1514, 16
        %v1736 = vrot.slane %v1734, 1
        %v1737 = vor.u32 %v1732, %v1736
        %v1739 = vshll.u32 %v1594, 16
        %v1741 = vrot.slane %v1739, 1
        %v1742 = vsel %vm1117, %v1737, %v1741
        %v1744 = vshrl.u32 %v1515, 16
        %v1746 = vshll.u32 %v1515, 16
        %v1748 = vrot.slane %v1746, 1
        %v1749 = vor.u32 %v1744, %v1748
        %v1751 = vshll.u32 %v1595, 16
        %v1753 = vrot.slane %v1751, 1
        %v1754 = vsel %vm1117, %v1749, %v1753
        %v1756 = vshrl.u32 %v1516, 16
        %v1758 = vshll.u32 %v1516, 16
        %v1760 = vrot.slane %v1758, 1
        %v1761 = vor.u32 %v1756, %v1760
        %v1763 = vshll.u32 %v1596, 16
        %v1765 = vrot.slane %v1763, 1
        %v1766 = vsel %vm1117, %v1761, %v1765
        %v1768 = vshrl.u32 %v1517, 16
        %v1770 = vshll.u32 %v1517, 16
        %v1772 = vrot.slane %v1770, 1
        %v1773 = vor.u32 %v1768, %v1772
        %v1775 = vshll.u32 %v1597, 16
        %v1777 = vrot.slane %v1775, 1
        %v1778 = vsel %vm1117, %v1773, %v1777
        %v1780 = vshrl.u32 %v1518, 16
        %v1782 = vshll.u32 %v1518, 16
        %v1784 = vrot.slane %v1782, 1
        %v1785 = vor.u32 %v1780, %v1784
        %v1787 = vshll.u32 %v1598, 16
        %v1789 = vrot.slane %v1787, 1
        %v1790 = vsel %vm1117, %v1785, %v1789
        %v1807 = vunpack.c.l.b16 %v908
        %v1808 = vunpack.c.l.b16 %v909
        %v1809 = vunpack.c.l.b16 %v910
        %v1810 = vunpack.c.l.b16 %v911
        %v1811 = vunpack.c.l.b16 %v912
        %v1812 = vunpack.c.l.b16 %v913
        %v1813 = vunpack.c.l.b16 %v914
        %v1814 = vunpack.c.l.b16 %v915
        %v1815 = vunpack.c.l.b16 %v916
        %v1816 = vunpack.c.l.b16 %v917
        %v1817 = vunpack.c.l.b16 %v918
        %v1818 = vunpack.c.l.b16 %v919
        %v1819 = vunpack.c.l.b16 %v920
        %v1820 = vunpack.c.l.b16 %v921
        %v1821 = vunpack.c.l.b16 %v922
        %v1822 = vunpack.c.l.b16 %v923
        %v1823 = vpack.c.b16 %v1472, %v1807
        %v1824 = vpack.c.b16 %v1474, %v1808
        %v1825 = vpack.c.b16 %v1476, %v1809
        %v1826 = vpack.c.b16 %v1478, %v1810
        %v1827 = vpack.c.b16 %v1480, %v1811
        %v1828 = vpack.c.b16 %v1482, %v1812
        %v1829 = vpack.c.b16 %v1484, %v1813
        %v1830 = vpack.c.b16 %v1486, %v1814
        %v1831 = vpack.c.b16 %v1488, %v1815
        %v1832 = vpack.c.b16 %v1490, %v1816
        %v1833 = vpack.c.b16 %v1492, %v1817
        %v1834 = vpack.c.b16 %v1494, %v1818
        %v1835 = vpack.c.b16 %v1496, %v1819
        %v1836 = vpack.c.b16 %v1498, %v1820
        %v1837 = vpack.c.b16 %v1500, %v1821
        %v1838 = vpack.c.b16 %v1502, %v1822
        %v1839 = vrot.slane %v1823, 1
        %v1840 = vrot.slane %v1583, 1
        %v1841 = vsel %vm1390, %v1839, %v1840
        %v1842 = vrot.slane %v1824, 1
        %v1843 = vrot.slane %v1584, 1
        %v1844 = vsel %vm1390, %v1842, %v1843
        %v1845 = vrot.slane %v1825, 1
        %v1846 = vrot.slane %v1585, 1
        %v1847 = vsel %vm1390, %v1845, %v1846
        %v1848 = vrot.slane %v1826, 1
        %v1849 = vrot.slane %v1586, 1
        %v1850 = vsel %vm1390, %v1848, %v1849
        %v1851 = vrot.slane %v1827, 1
        %v1852 = vrot.slane %v1587, 1
        %v1853 = vsel %vm1390, %v1851, %v1852
        %v1854 = vrot.slane %v1828, 1
        %v1855 = vrot.slane %v1588, 1
        %v1856 = vsel %vm1390, %v1854, %v1855
        %v1857 = vrot.slane %v1829, 1
        %v1858 = vrot.slane %v1589, 1
        %v1859 = vsel %vm1390, %v1857, %v1858
        %v1860 = vrot.slane %v1830, 1
        %v1861 = vrot.slane %v1590, 1
        %v1862 = vsel %vm1390, %v1860, %v1861
        %v1863 = vrot.slane %v1831, 1
        %v1864 = vrot.slane %v1591, 1
        %v1865 = vsel %vm1390, %v1863, %v1864
        %v1866 = vrot.slane %v1832, 1
        %v1867 = vrot.slane %v1592, 1
        %v1868 = vsel %vm1390, %v1866, %v1867
        %v1869 = vrot.slane %v1833, 1
        %v1870 = vrot.slane %v1593, 1
        %v1871 = vsel %vm1390, %v1869, %v1870
        %v1872 = vrot.slane %v1834, 1
        %v1873 = vrot.slane %v1594, 1
        %v1874 = vsel %vm1390, %v1872, %v1873
        %v1875 = vrot.slane %v1835, 1
        %v1876 = vrot.slane %v1595, 1
        %v1877 = vsel %vm1390, %v1875, %v1876
        %v1878 = vrot.slane %v1836, 1
        %v1879 = vrot.slane %v1596, 1
        %v1880 = vsel %vm1390, %v1878, %v1879
        %v1881 = vrot.slane %v1837, 1
        %v1882 = vrot.slane %v1597, 1
        %v1883 = vsel %vm1390, %v1881, %v1882
        %v1884 = vrot.slane %v1838, 1
        %v1885 = vrot.slane %v1598, 1
        %v1886 = vsel %vm1390, %v1884, %v1885
        %1887 = vrot.lane.b32.xlu0 %v1841, 64
        %v1888 = vpop.permute.xlu0 %1887
        %1889 = vrot.lane.b32.xlu0 %v1844, 64
        %v1890 = vpop.permute.xlu0 %1889
        %1891 = vrot.lane.b32.xlu0 %v1847, 64
        %v1892 = vpop.permute.xlu0 %1891
        %1893 = vrot.lane.b32.xlu0 %v1850, 64
        %v1894 = vpop.permute.xlu0 %1893
        %1895 = vrot.lane.b32.xlu0 %v1853, 64
        %v1896 = vpop.permute.xlu0 %1895
        %1897 = vrot.lane.b32.xlu0 %v1856, 64
        %v1898 = vpop.permute.xlu0 %1897
        %1899 = vrot.lane.b32.xlu0 %v1859, 64
        %v1900 = vpop.permute.xlu0 %1899
        %1901 = vrot.lane.b32.xlu0 %v1862, 64
        %v1902 = vpop.permute.xlu0 %1901
        %1903 = vrot.lane.b32.xlu0 %v1865, 64
        %v1904 = vpop.permute.xlu0 %1903
        %1905 = vrot.lane.b32.xlu0 %v1868, 64
        %v1906 = vpop.permute.xlu0 %1905
        %1907 = vrot.lane.b32.xlu0 %v1871, 64
        %v1908 = vpop.permute.xlu0 %1907
        %1909 = vrot.lane.b32.xlu0 %v1874, 64
        %v1910 = vpop.permute.xlu0 %1909
        %1911 = vrot.lane.b32.xlu0 %v1877, 64
        %v1912 = vpop.permute.xlu0 %1911
        %1913 = vrot.lane.b32.xlu0 %v1880, 64
        %v1914 = vpop.permute.xlu0 %1913
        %1915 = vrot.lane.b32.xlu0 %v1883, 64
        %v1916 = vpop.permute.xlu0 %1915
        %1917 = vrot.lane.b32.xlu0 %v1886, 64
        %v1918 = vpop.permute.xlu0 %1917
        %v1951 = vunpack.c.l.b16 %v925
        %v1952 = vunpack.c.l.b16 %v926
        %v1953 = vunpack.c.l.b16 %v927
        %v1954 = vunpack.c.l.b16 %v928
        %v1955 = vunpack.c.l.b16 %v929
        %v1956 = vunpack.c.l.b16 %v930
        %v1957 = vunpack.c.l.b16 %v931
        %v1958 = vunpack.c.l.b16 %v932
        %v1959 = vunpack.c.l.b16 %v933
        %v1960 = vunpack.c.l.b16 %v934
        %v1961 = vunpack.c.l.b16 %v935
        %v1962 = vunpack.c.l.b16 %v936
        %v1963 = vunpack.c.l.b16 %v937
        %v1964 = vunpack.c.l.b16 %v938
        %v1965 = vunpack.c.l.b16 %v939
        %v1966 = vunpack.c.l.b16 %v940
        %v1967 = vunpack.c.l.b16 %v941
        %v1968 = vunpack.c.l.b16 %v942
        %v1969 = vunpack.c.l.b16 %v943
        %v1970 = vunpack.c.l.b16 %v944
        %v1971 = vunpack.c.l.b16 %v945
        %v1972 = vunpack.c.l.b16 %v946
        %v1973 = vunpack.c.l.b16 %v947
        %v1974 = vunpack.c.l.b16 %v948
        %v1975 = vunpack.c.l.b16 %v949
        %v1976 = vunpack.c.l.b16 %v950
        %v1977 = vunpack.c.l.b16 %v951
        %v1978 = vunpack.c.l.b16 %v952
        %v1979 = vunpack.c.l.b16 %v953
        %v1980 = vunpack.c.l.b16 %v954
        %v1981 = vunpack.c.l.b16 %v955
        %v1982 = vunpack.c.l.b16 %v956
        %v1983 = vpack.c.b16 %v1952, %v1951
        %v1984 = vpack.c.b16 %v1954, %v1953
        %v1985 = vpack.c.b16 %v1956, %v1955
        %v1986 = vpack.c.b16 %v1958, %v1957
        %v1987 = vpack.c.b16 %v1960, %v1959
        %v1988 = vpack.c.b16 %v1962, %v1961
        %v1989 = vpack.c.b16 %v1964, %v1963
        %v1990 = vpack.c.b16 %v1966, %v1965
        %v1991 = vpack.c.b16 %v1968, %v1967
        %v1992 = vpack.c.b16 %v1970, %v1969
        %v1993 = vpack.c.b16 %v1972, %v1971
        %v1994 = vpack.c.b16 %v1974, %v1973
        %v1995 = vpack.c.b16 %v1976, %v1975
        %v1996 = vpack.c.b16 %v1978, %v1977
        %v1997 = vpack.c.b16 %v1980, %v1979
        %v1998 = vpack.c.b16 %v1982, %v1981
        %v2015 = vunpack.c.l.b16 %v957
        %v2016 = vunpack.c.l.b16 %v958
        %v2017 = vunpack.c.l.b16 %v959
        %v2018 = vunpack.c.l.b16 %v960
        %v2019 = vunpack.c.l.b16 %v961
        %v2020 = vunpack.c.l.b16 %v962
        %v2021 = vunpack.c.l.b16 %v963
        %v2022 = vunpack.c.l.b16 %v964
        %v2023 = vunpack.c.l.b16 %v965
        %v2024 = vunpack.c.l.b16 %v966
        %v2025 = vunpack.c.l.b16 %v967
        %v2026 = vunpack.c.l.b16 %v968
        %v2027 = vunpack.c.l.b16 %v969
        %v2028 = vunpack.c.l.b16 %v970
        %v2029 = vunpack.c.l.b16 %v971
        %v2030 = vunpack.c.l.b16 %v972
        %v2031 = vpack.c.b16 %v2015, %v2015
        %v2032 = vpack.c.b16 %v2016, %v2016
        %v2033 = vpack.c.b16 %v2017, %v2017
        %v2034 = vpack.c.b16 %v2018, %v2018
        %v2035 = vpack.c.b16 %v2019, %v2019
        %v2036 = vpack.c.b16 %v2020, %v2020
        %v2037 = vpack.c.b16 %v2021, %v2021
        %v2038 = vpack.c.b16 %v2022, %v2022
        %v2039 = vpack.c.b16 %v2023, %v2023
        %v2040 = vpack.c.b16 %v2024, %v2024
        %v2041 = vpack.c.b16 %v2025, %v2025
        %v2042 = vpack.c.b16 %v2026, %v2026
        %v2043 = vpack.c.b16 %v2027, %v2027
        %v2044 = vpack.c.b16 %v2028, %v2028
        %v2045 = vpack.c.b16 %v2029, %v2029
        %v2046 = vpack.c.b16 %v2030, %v2030
        %v2048 = vshrl.u32 %v1983, 16
        %v2050 = vshll.u32 %v1983, 16
        %v2052 = vrot.slane %v2050, 1
        %v2053 = vor.u32 %v2048, %v2052
        %v2055 = vshll.u32 %v2031, 16
        %v2057 = vrot.slane %v2055, 1
        %v2058 = vsel %vm1117, %v2053, %v2057
        %v2060 = vshrl.u32 %v1984, 16
        %v2062 = vshll.u32 %v1984, 16
        %v2064 = vrot.slane %v2062, 1
        %v2065 = vor.u32 %v2060, %v2064
        %v2067 = vshll.u32 %v2032, 16
        %v2069 = vrot.slane %v2067, 1
        %v2070 = vsel %vm1117, %v2065, %v2069
        %v2072 = vshrl.u32 %v1985, 16
        %v2074 = vshll.u32 %v1985, 16
        %v2076 = vrot.slane %v2074, 1
        %v2077 = vor.u32 %v2072, %v2076
        %v2079 = vshll.u32 %v2033, 16
        %v2081 = vrot.slane %v2079, 1
        %v2082 = vsel %vm1117, %v2077, %v2081
        %v2084 = vshrl.u32 %v1986, 16
        %v2086 = vshll.u32 %v1986, 16
        %v2088 = vrot.slane %v2086, 1
        %v2089 = vor.u32 %v2084, %v2088
        %v2091 = vshll.u32 %v2034, 16
        %v2093 = vrot.slane %v2091, 1
        %v2094 = vsel %vm1117, %v2089, %v2093
        %v2096 = vshrl.u32 %v1987, 16
        %v2098 = vshll.u32 %v1987, 16
        %v2100 = vrot.slane %v2098, 1
        %v2101 = vor.u32 %v2096, %v2100
        %v2103 = vshll.u32 %v2035, 16
        %v2105 = vrot.slane %v2103, 1
        %v2106 = vsel %vm1117, %v2101, %v2105
        %v2108 = vshrl.u32 %v1988, 16
        %v2110 = vshll.u32 %v1988, 16
        %v2112 = vrot.slane %v2110, 1
        %v2113 = vor.u32 %v2108, %v2112
        %v2115 = vshll.u32 %v2036, 16
        %v2117 = vrot.slane %v2115, 1
        %v2118 = vsel %vm1117, %v2113, %v2117
        %v2120 = vshrl.u32 %v1989, 16
        %v2122 = vshll.u32 %v1989, 16
        %v2124 = vrot.slane %v2122, 1
        %v2125 = vor.u32 %v2120, %v2124
        %v2127 = vshll.u32 %v2037, 16
        %v2129 = vrot.slane %v2127, 1
        %v2130 = vsel %vm1117, %v2125, %v2129
        %v2132 = vshrl.u32 %v1990, 16
        %v2134 = vshll.u32 %v1990, 16
        %v2136 = vrot.slane %v2134, 1
        %v2137 = vor.u32 %v2132, %v2136
        %v2139 = vshll.u32 %v2038, 16
        %v2141 = vrot.slane %v2139, 1
        %v2142 = vsel %vm1117, %v2137, %v2141
        %v2144 = vshrl.u32 %v1991, 16
        %v2146 = vshll.u32 %v1991, 16
        %v2148 = vrot.slane %v2146, 1
        %v2149 = vor.u32 %v2144, %v2148
        %v2151 = vshll.u32 %v2039, 16
        %v2153 = vrot.slane %v2151, 1
        %v2154 = vsel %vm1117, %v2149, %v2153
        %v2156 = vshrl.u32 %v1992, 16
        %v2158 = vshll.u32 %v1992, 16
        %v2160 = vrot.slane %v2158, 1
        %v2161 = vor.u32 %v2156, %v2160
        %v2163 = vshll.u32 %v2040, 16
        %v2165 = vrot.slane %v2163, 1
        %v2166 = vsel %vm1117, %v2161, %v2165
        %v2168 = vshrl.u32 %v1993, 16
        %v2170 = vshll.u32 %v1993, 16
        %v2172 = vrot.slane %v2170, 1
        %v2173 = vor.u32 %v2168, %v2172
        %v2175 = vshll.u32 %v2041, 16
        %v2177 = vrot.slane %v2175, 1
        %v2178 = vsel %vm1117, %v2173, %v2177
        %v2180 = vshrl.u32 %v1994, 16
        %v2182 = vshll.u32 %v1994, 16
        %v2184 = vrot.slane %v2182, 1
        %v2185 = vor.u32 %v2180, %v2184
        %v2187 = vshll.u32 %v2042, 16
        %v2189 = vrot.slane %v2187, 1
        %v2190 = vsel %vm1117, %v2185, %v2189
        %v2192 = vshrl.u32 %v1995, 16
        %v2194 = vshll.u32 %v1995, 16
        %v2196 = vrot.slane %v2194, 1
        %v2197 = vor.u32 %v2192, %v2196
        %v2199 = vshll.u32 %v2043, 16
        %v2201 = vrot.slane %v2199, 1
        %v2202 = vsel %vm1117, %v2197, %v2201
        %v2204 = vshrl.u32 %v1996, 16
        %v2206 = vshll.u32 %v1996, 16
        %v2208 = vrot.slane %v2206, 1
        %v2209 = vor.u32 %v2204, %v2208
        %v2211 = vshll.u32 %v2044, 16
        %v2213 = vrot.slane %v2211, 1
        %v2214 = vsel %vm1117, %v2209, %v2213
        %v2216 = vshrl.u32 %v1997, 16
        %v2218 = vshll.u32 %v1997, 16
        %v2220 = vrot.slane %v2218, 1
        %v2221 = vor.u32 %v2216, %v2220
        %v2223 = vshll.u32 %v2045, 16
        %v2225 = vrot.slane %v2223, 1
        %v2226 = vsel %vm1117, %v2221, %v2225
        %v2228 = vshrl.u32 %v1998, 16
        %v2230 = vshll.u32 %v1998, 16
        %v2232 = vrot.slane %v2230, 1
        %v2233 = vor.u32 %v2228, %v2232
        %v2235 = vshll.u32 %v2046, 16
        %v2237 = vrot.slane %v2235, 1
        %v2238 = vsel %vm1117, %v2233, %v2237
        %2239 = vrot.lane.b32.xlu0 %v2058, 64
        %v2240 = vpop.permute.xlu0 %2239
        %2241 = vrot.lane.b32.xlu0 %v2070, 64
        %v2242 = vpop.permute.xlu0 %2241
        %2243 = vrot.lane.b32.xlu0 %v2082, 64
        %v2244 = vpop.permute.xlu0 %2243
        %2245 = vrot.lane.b32.xlu0 %v2094, 64
        %v2246 = vpop.permute.xlu0 %2245
        %2247 = vrot.lane.b32.xlu0 %v2106, 64
        %v2248 = vpop.permute.xlu0 %2247
        %2249 = vrot.lane.b32.xlu0 %v2118, 64
        %v2250 = vpop.permute.xlu0 %2249
        %2251 = vrot.lane.b32.xlu0 %v2130, 64
        %v2252 = vpop.permute.xlu0 %2251
        %2253 = vrot.lane.b32.xlu0 %v2142, 64
        %v2254 = vpop.permute.xlu0 %2253
        %2255 = vrot.lane.b32.xlu0 %v2154, 64
        %v2256 = vpop.permute.xlu0 %2255
        %2257 = vrot.lane.b32.xlu0 %v2166, 64
        %v2258 = vpop.permute.xlu0 %2257
        %2259 = vrot.lane.b32.xlu0 %v2178, 64
        %v2260 = vpop.permute.xlu0 %2259
        %2261 = vrot.lane.b32.xlu0 %v2190, 64
        %v2262 = vpop.permute.xlu0 %2261
        %2263 = vrot.lane.b32.xlu0 %v2202, 64
        %v2264 = vpop.permute.xlu0 %2263
        %2265 = vrot.lane.b32.xlu0 %v2214, 64
        %v2266 = vpop.permute.xlu0 %2265
        %2267 = vrot.lane.b32.xlu0 %v2226, 64
        %v2268 = vpop.permute.xlu0 %2267
        %2269 = vrot.lane.b32.xlu0 %v2238, 64
        %v2270 = vpop.permute.xlu0 %2269
        %v2287 = vunpack.c.l.b16 %v973
        %v2288 = vunpack.c.l.b16 %v974
        %v2289 = vunpack.c.l.b16 %v975
        %v2290 = vunpack.c.l.b16 %v976
        %v2291 = vunpack.c.l.b16 %v977
        %v2292 = vunpack.c.l.b16 %v978
        %v2293 = vunpack.c.l.b16 %v979
        %v2294 = vunpack.c.l.b16 %v980
        %v2295 = vunpack.c.l.b16 %v981
        %v2296 = vunpack.c.l.b16 %v982
        %v2297 = vunpack.c.l.b16 %v983
        %v2298 = vunpack.c.l.b16 %v984
        %v2299 = vunpack.c.l.b16 %v985
        %v2300 = vunpack.c.l.b16 %v986
        %v2301 = vunpack.c.l.b16 %v987
        %v2302 = vunpack.c.l.b16 %v988
        %v2303 = vpack.c.b16 %v1952, %v2287
        %v2304 = vpack.c.b16 %v1954, %v2288
        %v2305 = vpack.c.b16 %v1956, %v2289
        %v2306 = vpack.c.b16 %v1958, %v2290
        %v2307 = vpack.c.b16 %v1960, %v2291
        %v2308 = vpack.c.b16 %v1962, %v2292
        %v2309 = vpack.c.b16 %v1964, %v2293
        %v2310 = vpack.c.b16 %v1966, %v2294
        %v2311 = vpack.c.b16 %v1968, %v2295
        %v2312 = vpack.c.b16 %v1970, %v2296
        %v2313 = vpack.c.b16 %v1972, %v2297
        %v2314 = vpack.c.b16 %v1974, %v2298
        %v2315 = vpack.c.b16 %v1976, %v2299
        %v2316 = vpack.c.b16 %v1978, %v2300
        %v2317 = vpack.c.b16 %v1980, %v2301
        %v2318 = vpack.c.b16 %v1982, %v2302
        %v2319 = vrot.slane %v2303, 1
        %v2320 = vrot.slane %v2031, 1
        %v2321 = vsel %vm1390, %v2319, %v2320
        %v2322 = vrot.slane %v2304, 1
        %v2323 = vrot.slane %v2032, 1
        %v2324 = vsel %vm1390, %v2322, %v2323
        %v2325 = vrot.slane %v2305, 1
        %v2326 = vrot.slane %v2033, 1
        %v2327 = vsel %vm1390, %v2325, %v2326
        %v2328 = vrot.slane %v2306, 1
        %v2329 = vrot.slane %v2034, 1
        %v2330 = vsel %vm1390, %v2328, %v2329
        %v2331 = vrot.slane %v2307, 1
        %v2332 = vrot.slane %v2035, 1
        %v2333 = vsel %vm1390, %v2331, %v2332
        %v2334 = vrot.slane %v2308, 1
        %v2335 = vrot.slane %v2036, 1
        %v2336 = vsel %vm1390, %v2334, %v2335
        %v2337 = vrot.slane %v2309, 1
        %v2338 = vrot.slane %v2037, 1
        %v2339 = vsel %vm1390, %v2337, %v2338
        %v2340 = vrot.slane %v2310, 1
        %v2341 = vrot.slane %v2038, 1
        %v2342 = vsel %vm1390, %v2340, %v2341
        %v2343 = vrot.slane %v2311, 1
        %v2344 = vrot.slane %v2039, 1
        %v2345 = vsel %vm1390, %v2343, %v2344
        %v2346 = vrot.slane %v2312, 1
        %v2347 = vrot.slane %v2040, 1
        %v2348 = vsel %vm1390, %v2346, %v2347
        %v2349 = vrot.slane %v2313, 1
        %v2350 = vrot.slane %v2041, 1
        %v2351 = vsel %vm1390, %v2349, %v2350
        %v2352 = vrot.slane %v2314, 1
        %v2353 = vrot.slane %v2042, 1
        %v2354 = vsel %vm1390, %v2352, %v2353
        %v2355 = vrot.slane %v2315, 1
        %v2356 = vrot.slane %v2043, 1
        %v2357 = vsel %vm1390, %v2355, %v2356
        %v2358 = vrot.slane %v2316, 1
        %v2359 = vrot.slane %v2044, 1
        %v2360 = vsel %vm1390, %v2358, %v2359
        %v2361 = vrot.slane %v2317, 1
        %v2362 = vrot.slane %v2045, 1
        %v2363 = vsel %vm1390, %v2361, %v2362
        %v2364 = vrot.slane %v2318, 1
        %v2365 = vrot.slane %v2046, 1
        %v2366 = vsel %vm1390, %v2364, %v2365
        %vm2367 = vcmask 523264
        %v2369 = vsel %vm2367, %v1053, %v1311
        %v2372 = vsel %vm2367, %v1054, %v1313
        %v2375 = vsel %vm2367, %v1055, %v1315
        %v2378 = vsel %vm2367, %v1056, %v1317
        %v2381 = vsel %vm2367, %v1057, %v1319
        %v2384 = vsel %vm2367, %v1058, %v1321
        %v2387 = vsel %vm2367, %v1059, %v1323
        %v2390 = vsel %vm2367, %v1060, %v1325
        %v2393 = vsel %vm2367, %v1061, %v1327
        %v2396 = vsel %vm2367, %v1062, %v1329
        %v2399 = vsel %vm2367, %v1063, %v1331
        %v2402 = vsel %vm2367, %v1064, %v1333
        %v2405 = vsel %vm2367, %v1065, %v1335
        %v2408 = vsel %vm2367, %v1066, %v1337
        %v2411 = vsel %vm2367, %v1067, %v1339
        %v2414 = vsel %vm2367, %v1068, %v1341
        %v2418 = vsel %vm2367, %v1393, %v1520
        %v2422 = vsel %vm2367, %v1396, %v1522
        %v2426 = vsel %vm2367, %v1399, %v1524
        %v2430 = vsel %vm2367, %v1402, %v1526
        %v2434 = vsel %vm2367, %v1405, %v1528
        %v2438 = vsel %vm2367, %v1408, %v1530
        %v2442 = vsel %vm2367, %v1411, %v1532
        %v2446 = vsel %vm2367, %v1414, %v1534
        %v2450 = vsel %vm2367, %v1417, %v1536
        %v2454 = vsel %vm2367, %v1420, %v1538
        %v2458 = vsel %vm2367, %v1423, %v1540
        %v2462 = vsel %vm2367, %v1426, %v1542
        %v2466 = vsel %vm2367, %v1429, %v1544
        %v2470 = vsel %vm2367, %v1432, %v1546
        %v2474 = vsel %vm2367, %v1435, %v1548
        %v2478 = vsel %vm2367, %v1438, %v1550
        %v2482 = vsel %vm2367, %v1610, %v1888
        %v2486 = vsel %vm2367, %v1622, %v1890
        %v2490 = vsel %vm2367, %v1634, %v1892
        %v2494 = vsel %vm2367, %v1646, %v1894
        %v2498 = vsel %vm2367, %v1658, %v1896
        %v2502 = vsel %vm2367, %v1670, %v1898
        %v2506 = vsel %vm2367, %v1682, %v1900
        %v2510 = vsel %vm2367, %v1694, %v1902
        %v2514 = vsel %vm2367, %v1706, %v1904
        %v2518 = vsel %vm2367, %v1718, %v1906
        %v2522 = vsel %vm2367, %v1730, %v1908
        %v2526 = vsel %vm2367, %v1742, %v1910
        %v2530 = vsel %vm2367, %v1754, %v1912
        %v2534 = vsel %vm2367, %v1766, %v1914
        %v2538 = vsel %vm2367, %v1778, %v1916
        %v2542 = vsel %vm2367, %v1790, %v1918
        %v2545 = vsel %vm2367, %v1983, %v2240
        %v2548 = vsel %vm2367, %v1984, %v2242
        %v2551 = vsel %vm2367, %v1985, %v2244
        %v2554 = vsel %vm2367, %v1986, %v2246
        %v2557 = vsel %vm2367, %v1987, %v2248
        %v2560 = vsel %vm2367, %v1988, %v2250
        %v2563 = vsel %vm2367, %v1989, %v2252
        %v2566 = vsel %vm2367, %v1990, %v2254
        %v2569 = vsel %vm2367, %v1991, %v2256
        %v2572 = vsel %vm2367, %v1992, %v2258
        %v2575 = vsel %vm2367, %v1993, %v2260
        %v2578 = vsel %vm2367, %v1994, %v2262
        %v2581 = vsel %vm2367, %v1995, %v2264
        %v2584 = vsel %vm2367, %v1996, %v2266
        %v2587 = vsel %vm2367, %v1997, %v2268
        %v2590 = vsel %vm2367, %v1998, %v2270
        %v2592 = vld [vmem:[%s1] sm:$0xf]
        %v2593 = vld [vmem:[%s1 + $0x4] sm:$0xf]
        %v2594 = vld [vmem:[%s1 + $0x8] sm:$0xf]
        %v2595 = vld [vmem:[%s1 + $0xc] sm:$0xf]
        %v2596 = vld [vmem:[%s1 + $0x10] sm:$0xf]
        %v2597 = vld [vmem:[%s1 + $0x14] sm:$0xf]
        %v2598 = vld [vmem:[%s1 + $0x18] sm:$0xf]
        %v2599 = vld [vmem:[%s1 + $0x1c] sm:$0xf]
        %v2600 = vld [vmem:[%s1 + $0x20] sm:$0xf]
        %v2601 = vld [vmem:[%s1 + $0x24] sm:$0xf]
        %v2602 = vld [vmem:[%s1 + $0x28] sm:$0xf]
        %v2603 = vld [vmem:[%s1 + $0x2c] sm:$0xf]
        %v2604 = vld [vmem:[%s1 + $0x30] sm:$0xf]
        %v2605 = vld [vmem:[%s1 + $0x34] sm:$0xf]
        %v2606 = vld [vmem:[%s1 + $0x38] sm:$0xf]
        %v2607 = vld [vmem:[%s1 + $0x3c] sm:$0xf]
        %v2608 = vld [vmem:[%s1 + $0x40] sm:$0xf]
        %v2609 = vld [vmem:[%s1 + $0x44] sm:$0xf]
        %v2610 = vld [vmem:[%s1 + $0x48] sm:$0xf]
        %v2611 = vld [vmem:[%s1 + $0x4c] sm:$0xf]
        %v2612 = vld [vmem:[%s1 + $0x50] sm:$0xf]
        %v2613 = vld [vmem:[%s1 + $0x54] sm:$0xf]
        %v2614 = vld [vmem:[%s1 + $0x58] sm:$0xf]
        %v2615 = vld [vmem:[%s1 + $0x5c] sm:$0xf]
        %v2616 = vld [vmem:[%s1 + $0x60] sm:$0xf]
        %v2617 = vld [vmem:[%s1 + $0x64] sm:$0xf]
        %v2618 = vld [vmem:[%s1 + $0x68] sm:$0xf]
        %v2619 = vld [vmem:[%s1 + $0x6c] sm:$0xf]
        %v2620 = vld [vmem:[%s1 + $0x70] sm:$0xf]
        %v2621 = vld [vmem:[%s1 + $0x74] sm:$0xf]
        %v2622 = vld [vmem:[%s1 + $0x78] sm:$0xf]
        %v2623 = vld [vmem:[%s1 + $0x7c] sm:$0xf]
        %v2624 = vld [vmem:[%s1 + $0x80] sm:$0xf]
        %v2625 = vld [vmem:[%s1 + $0x84] sm:$0xf]
        %v2626 = vld [vmem:[%s1 + $0x88] sm:$0xf]
        %v2627 = vld [vmem:[%s1 + $0x8c] sm:$0xf]
        %v2628 = vld [vmem:[%s1 + $0x90] sm:$0xf]
        %v2629 = vld [vmem:[%s1 + $0x94] sm:$0xf]
        %v2630 = vld [vmem:[%s1 + $0x98] sm:$0xf]
        %v2631 = vld [vmem:[%s1 + $0x9c] sm:$0xf]
        %v2632 = vld [vmem:[%s1 + $0xa0] sm:$0xf]
        %v2633 = vld [vmem:[%s1 + $0xa4] sm:$0xf]
        %v2634 = vld [vmem:[%s1 + $0xa8] sm:$0xf]
        %v2635 = vld [vmem:[%s1 + $0xac] sm:$0xf]
        %v2636 = vld [vmem:[%s1 + $0xb0] sm:$0xf]
        %v2637 = vld [vmem:[%s1 + $0xb4] sm:$0xf]
        %v2638 = vld [vmem:[%s1 + $0xb8] sm:$0xf]
        %v2639 = vld [vmem:[%s1 + $0xbc] sm:$0xf]
        %v2640 = vld [vmem:[%s1 + $0xc0] sm:$0xf]
        %v2641 = vld [vmem:[%s1 + $0xc4] sm:$0xf]
        %v2642 = vld [vmem:[%s1 + $0xc8] sm:$0xf]
        %v2643 = vld [vmem:[%s1 + $0xcc] sm:$0xf]
        %v2644 = vld [vmem:[%s1 + $0xd0] sm:$0xf]
        %v2645 = vld [vmem:[%s1 + $0xd4] sm:$0xf]
        %v2646 = vld [vmem:[%s1 + $0xd8] sm:$0xf]
        %v2647 = vld [vmem:[%s1 + $0xdc] sm:$0xf]
        %v2648 = vld [vmem:[%s1 + $0xe0] sm:$0xf]
        %v2649 = vld [vmem:[%s1 + $0xe4] sm:$0xf]
        %v2650 = vld [vmem:[%s1 + $0xe8] sm:$0xf]
        %v2651 = vld [vmem:[%s1 + $0xec] sm:$0xf]
        %v2652 = vld [vmem:[%s1 + $0xf0] sm:$0xf]
        %v2653 = vld [vmem:[%s1 + $0xf4] sm:$0xf]
        %v2654 = vld [vmem:[%s1 + $0xf8] sm:$0xf]
        %v2655 = vld [vmem:[%s1 + $0xfc] sm:$0xf]
        %v2656 = vld [vmem:[%s1 + $0x100] sm:$0xf]
        %v2657 = vld [vmem:[%s1 + $0x104] sm:$0xf]
        %v2658 = vld [vmem:[%s1 + $0x108] sm:$0xf]
        %v2659 = vld [vmem:[%s1 + $0x10c] sm:$0xf]
        %v2660 = vld [vmem:[%s1 + $0x110] sm:$0xf]
        %v2661 = vld [vmem:[%s1 + $0x114] sm:$0xf]
        %v2662 = vld [vmem:[%s1 + $0x118] sm:$0xf]
        %v2663 = vld [vmem:[%s1 + $0x11c] sm:$0xf]
        %v2736 = vunpack.c.l.b16 %v2592
        %v2737 = vunpack.c.l.b16 %v2593
        %v2738 = vunpack.c.l.b16 %v2594
        %v2739 = vunpack.c.l.b16 %v2595
        %v2740 = vunpack.c.l.b16 %v2596
        %v2741 = vunpack.c.l.b16 %v2597
        %v2742 = vunpack.c.l.b16 %v2598
        %v2743 = vunpack.c.l.b16 %v2599
        %v2744 = vunpack.c.l.b16 %v2600
        %v2745 = vunpack.c.l.b16 %v2601
        %v2746 = vunpack.c.l.b16 %v2602
        %v2747 = vunpack.c.l.b16 %v2603
        %v2748 = vunpack.c.l.b16 %v2604
        %v2749 = vunpack.c.l.b16 %v2605
        %v2750 = vunpack.c.l.b16 %v2606
        %v2751 = vunpack.c.l.b16 %v2607
        %v2752 = vunpack.c.l.b16 %v2608
        %v2753 = vunpack.c.l.b16 %v2609
        %v2754 = vunpack.c.l.b16 %v2610
        %v2755 = vunpack.c.l.b16 %v2611
        %v2756 = vunpack.c.l.b16 %v2612
        %v2757 = vunpack.c.l.b16 %v2613
        %v2758 = vunpack.c.l.b16 %v2614
        %v2759 = vunpack.c.l.b16 %v2615
        %v2760 = vunpack.c.l.b16 %v2616
        %v2761 = vunpack.c.l.b16 %v2617
        %v2762 = vunpack.c.l.b16 %v2618
        %v2763 = vunpack.c.l.b16 %v2619
        %v2764 = vunpack.c.l.b16 %v2620
        %v2765 = vunpack.c.l.b16 %v2621
        %v2766 = vunpack.c.l.b16 %v2622
        %v2767 = vunpack.c.l.b16 %v2623
        %v2768 = vunpack.c.l.b16 %v2624
        %v2769 = vunpack.c.l.b16 %v2625
        %v2770 = vunpack.c.l.b16 %v2626
        %v2771 = vunpack.c.l.b16 %v2627
        %v2772 = vunpack.c.l.b16 %v2628
        %v2773 = vunpack.c.l.b16 %v2629
        %v2774 = vunpack.c.l.b16 %v2630
        %v2775 = vunpack.c.l.b16 %v2631
        %v2776 = vunpack.c.l.b16 %v2632
        %v2777 = vunpack.c.l.b16 %v2633
        %v2778 = vunpack.c.l.b16 %v2634
        %v2779 = vunpack.c.l.b16 %v2635
        %v2780 = vunpack.c.l.b16 %v2636
        %v2781 = vunpack.c.l.b16 %v2637
        %v2782 = vunpack.c.l.b16 %v2638
        %v2783 = vunpack.c.l.b16 %v2639
        %v2784 = vunpack.c.l.b16 %v2640
        %v2785 = vunpack.c.l.b16 %v2641
        %v2786 = vunpack.c.l.b16 %v2642
        %v2787 = vunpack.c.l.b16 %v2643
        %v2788 = vunpack.c.l.b16 %v2644
        %v2789 = vunpack.c.l.b16 %v2645
        %v2790 = vunpack.c.l.b16 %v2646
        %v2791 = vunpack.c.l.b16 %v2647
        %v2792 = vunpack.c.l.b16 %v2648
        %v2793 = vunpack.c.l.b16 %v2649
        %v2794 = vunpack.c.l.b16 %v2650
        %v2795 = vunpack.c.l.b16 %v2651
        %v2796 = vunpack.c.l.b16 %v2652
        %v2797 = vunpack.c.l.b16 %v2653
        %v2798 = vunpack.c.l.b16 %v2654
        %v2799 = vunpack.c.l.b16 %v2655
        %v2800 = vunpack.c.l.b16 %v2656
        %v2801 = vunpack.c.l.b16 %v2657
        %v2802 = vunpack.c.l.b16 %v2658
        %v2803 = vunpack.c.l.b16 %v2659
        %v2804 = vunpack.c.l.b16 %v2660
        %v2805 = vunpack.c.l.b16 %v2661
        %v2806 = vunpack.c.l.b16 %v2662
        %v2807 = vunpack.c.l.b16 %v2663
        %v2808 = vpack.c.b16 %v2737, %v2736
        %v2809 = vpack.c.b16 %v2739, %v2738
        %v2810 = vpack.c.b16 %v2741, %v2740
        %v2811 = vpack.c.b16 %v2743, %v2742
        %v2812 = vpack.c.b16 %v2745, %v2744
        %v2813 = vpack.c.b16 %v2747, %v2746
        %v2814 = vpack.c.b16 %v2749, %v2748
        %v2815 = vpack.c.b16 %v2751, %v2750
        %v2816 = vpack.c.b16 %v2753, %v2752
        %v2817 = vpack.c.b16 %v2755, %v2754
        %v2818 = vpack.c.b16 %v2757, %v2756
        %v2819 = vpack.c.b16 %v2759, %v2758
        %v2820 = vpack.c.b16 %v2761, %v2760
        %v2821 = vpack.c.b16 %v2763, %v2762
        %v2822 = vpack.c.b16 %v2765, %v2764
        %v2823 = vpack.c.b16 %v2767, %v2766
        %v2824 = vpack.c.b16 %v2769, %v2768
        %v2825 = vpack.c.b16 %v2771, %v2770
        %v2826 = vpack.c.b16 %v2773, %v2772
        %v2827 = vpack.c.b16 %v2775, %v2774
        %v2828 = vpack.c.b16 %v2777, %v2776
        %v2829 = vpack.c.b16 %v2779, %v2778
        %v2830 = vpack.c.b16 %v2781, %v2780
        %v2831 = vpack.c.b16 %v2783, %v2782
        %v2832 = vpack.c.b16 %v2785, %v2784
        %v2833 = vpack.c.b16 %v2787, %v2786
        %v2834 = vpack.c.b16 %v2789, %v2788
        %v2835 = vpack.c.b16 %v2791, %v2790
        %v2836 = vpack.c.b16 %v2793, %v2792
        %v2837 = vpack.c.b16 %v2795, %v2794
        %v2838 = vpack.c.b16 %v2797, %v2796
        %v2839 = vpack.c.b16 %v2799, %v2798
        %v2840 = vpack.c.b16 %v2801, %v2800
        %v2841 = vpack.c.b16 %v2803, %v2802
        %v2842 = vpack.c.b16 %v2805, %v2804
        %v2843 = vpack.c.b16 %v2807, %v2806
        %v2881 = vsel %vm2367, %v2321, 0
        %v2884 = vsel %vm2367, %v2324, 0
        %v2887 = vsel %vm2367, %v2327, 0
        %v2890 = vsel %vm2367, %v2330, 0
        %v2893 = vsel %vm2367, %v2333, 0
        %v2896 = vsel %vm2367, %v2336, 0
        %v2899 = vsel %vm2367, %v2339, 0
        %v2902 = vsel %vm2367, %v2342, 0
        %v2905 = vsel %vm2367, %v2345, 0
        %v2908 = vsel %vm2367, %v2348, 0
        %v2911 = vsel %vm2367, %v2351, 0
        %v2914 = vsel %vm2367, %v2354, 0
        %v2917 = vsel %vm2367, %v2357, 0
        %v2920 = vsel %vm2367, %v2360, 0
        %v2923 = vsel %vm2367, %v2363, 0
        %v2926 = vsel %vm2367, %v2366, 0
        %2928 = vmatpush.bf16.msra.mxu0 %v2815
        %2929 = vmatpush.bf16.msra.mxu0 %v2814
        %2930 = vmatpush.bf16.msra.mxu0 %v2813
        %2931 = vmatpush.bf16.msra.mxu0 %v2812
        %2932 = vmatpush.bf16.msra.mxu0 %v2811
        %2933 = vmatpush.bf16.msra.mxu0 %v2810
        %2934 = vmatpush.bf16.msra.mxu0 %v2809
        %2935 = vmatpush.bf16.msra.mxu0 %v2808
        %2936 = vmatmul.bf16.gmra.mxu0 %v2369
        %v2937 = vpop.f32.mrf.mxu0
        %v2938 = vadd.f32 0.0, %v2937
        %v2939 = vpop.f32.mrf.mxu0
        %v2940 = vadd.f32 0.0, %v2939
        %2941 = vmatmul.bf16.gmra.mxu0 %v2372
        %v2942 = vpop.f32.mrf.mxu0
        %v2943 = vadd.f32 0.0, %v2942
        %v2944 = vpop.f32.mrf.mxu0
        %v2945 = vadd.f32 0.0, %v2944
        %2946 = vmatmul.bf16.gmra.mxu0 %v2375
        %v2947 = vpop.f32.mrf.mxu0
        %v2948 = vadd.f32 0.0, %v2947
        %v2949 = vpop.f32.mrf.mxu0
        %v2950 = vadd.f32 0.0, %v2949
        %2951 = vmatmul.bf16.gmra.mxu0 %v2378
        %v2952 = vpop.f32.mrf.mxu0
        %v2953 = vadd.f32 0.0, %v2952
        %v2954 = vpop.f32.mrf.mxu0
        %v2955 = vadd.f32 0.0, %v2954
        %2956 = vmatmul.bf16.gmra.mxu0 %v2381
        %v2957 = vpop.f32.mrf.mxu0
        %v2958 = vadd.f32 0.0, %v2957
        %v2959 = vpop.f32.mrf.mxu0
        %v2960 = vadd.f32 0.0, %v2959
        %2961 = vmatmul.bf16.gmra.mxu0 %v2384
        %v2962 = vpop.f32.mrf.mxu0
        %v2963 = vadd.f32 0.0, %v2962
        %v2964 = vpop.f32.mrf.mxu0
        %v2965 = vadd.f32 0.0, %v2964
        %2966 = vmatmul.bf16.gmra.mxu0 %v2387
        %v2967 = vpop.f32.mrf.mxu0
        %v2968 = vadd.f32 0.0, %v2967
        %v2969 = vpop.f32.mrf.mxu0
        %v2970 = vadd.f32 0.0, %v2969
        %2971 = vmatmul.bf16.gmra.mxu0 %v2390
        %v2972 = vpop.f32.mrf.mxu0
        %v2973 = vadd.f32 0.0, %v2972
        %v2974 = vpop.f32.mrf.mxu0
        %v2975 = vadd.f32 0.0, %v2974
        %2976 = vmatmul.bf16.gmra.mxu0 %v2393
        %v2977 = vpop.f32.mrf.mxu0
        %v2978 = vadd.f32 0.0, %v2977
        %v2979 = vpop.f32.mrf.mxu0
        %v2980 = vadd.f32 0.0, %v2979
        %2981 = vmatmul.bf16.gmra.mxu0 %v2396
        %v2982 = vpop.f32.mrf.mxu0
        %v2983 = vadd.f32 0.0, %v2982
        %v2984 = vpop.f32.mrf.mxu0
        %v2985 = vadd.f32 0.0, %v2984
        %2986 = vmatmul.bf16.gmra.mxu0 %v2399
        %v2987 = vpop.f32.mrf.mxu0
        %v2988 = vadd.f32 0.0, %v2987
        %v2989 = vpop.f32.mrf.mxu0
        %v2990 = vadd.f32 0.0, %v2989
        %2991 = vmatmul.bf16.gmra.mxu0 %v2402
        %v2992 = vpop.f32.mrf.mxu0
        %v2993 = vadd.f32 0.0, %v2992
        %v2994 = vpop.f32.mrf.mxu0
        %v2995 = vadd.f32 0.0, %v2994
        %2996 = vmatmul.bf16.gmra.mxu0 %v2405
        %v2997 = vpop.f32.mrf.mxu0
        %v2998 = vadd.f32 0.0, %v2997
        %v2999 = vpop.f32.mrf.mxu0
        %v3000 = vadd.f32 0.0, %v2999
        %3001 = vmatmul.bf16.gmra.mxu0 %v2408
        %v3002 = vpop.f32.mrf.mxu0
        %v3003 = vadd.f32 0.0, %v3002
        %v3004 = vpop.f32.mrf.mxu0
        %v3005 = vadd.f32 0.0, %v3004
        %3006 = vmatmul.bf16.gmra.mxu0 %v2411
        %v3007 = vpop.f32.mrf.mxu0
        %v3008 = vadd.f32 0.0, %v3007
        %v3009 = vpop.f32.mrf.mxu0
        %v3010 = vadd.f32 0.0, %v3009
        %3011 = vmatmul.bf16.gmra.mxu0 %v2414
        %v3012 = vpop.f32.mrf.mxu0
        %v3013 = vadd.f32 0.0, %v3012
        %v3014 = vpop.f32.mrf.mxu0
        %v3015 = vadd.f32 0.0, %v3014
        %3016 = vdwg.mxu0
        %3017 = vmatpush.bf16.msra.mxu0 %v2823
        %3018 = vmatpush.bf16.msra.mxu0 %v2822
        %3019 = vmatpush.bf16.msra.mxu0 %v2821
        %3020 = vmatpush.bf16.msra.mxu0 %v2820
        %3021 = vmatpush.bf16.msra.mxu0 %v2819
        %3022 = vmatpush.bf16.msra.mxu0 %v2818
        %3023 = vmatpush.bf16.msra.mxu0 %v2817
        %3024 = vmatpush.bf16.msra.mxu0 %v2816
        %3025 = vmatmul.bf16.gmra.mxu0 %v2418
        %v3026 = vpop.f32.mrf.mxu0
        %v3027 = vadd.f32 %v2938, %v3026
        %v3028 = vpop.f32.mrf.mxu0
        %v3029 = vadd.f32 %v2940, %v3028
        %3030 = vmatmul.bf16.gmra.mxu0 %v2422
        %v3031 = vpop.f32.mrf.mxu0
        %v3032 = vadd.f32 %v2943, %v3031
        %v3033 = vpop.f32.mrf.mxu0
        %v3034 = vadd.f32 %v2945, %v3033
        %3035 = vmatmul.bf16.gmra.mxu0 %v2426
        %v3036 = vpop.f32.mrf.mxu0
        %v3037 = vadd.f32 %v2948, %v3036
        %v3038 = vpop.f32.mrf.mxu0
        %v3039 = vadd.f32 %v2950, %v3038
        %3040 = vmatmul.bf16.gmra.mxu0 %v2430
        %v3041 = vpop.f32.mrf.mxu0
        %v3042 = vadd.f32 %v2953, %v3041
        %v3043 = vpop.f32.mrf.mxu0
        %v3044 = vadd.f32 %v2955, %v3043
        %3045 = vmatmul.bf16.gmra.mxu0 %v2434
        %v3046 = vpop.f32.mrf.mxu0
        %v3047 = vadd.f32 %v2958, %v3046
        %v3048 = vpop.f32.mrf.mxu0
        %v3049 = vadd.f32 %v2960, %v3048
        %3050 = vmatmul.bf16.gmra.mxu0 %v2438
        %v3051 = vpop.f32.mrf.mxu0
        %v3052 = vadd.f32 %v2963, %v3051
        %v3053 = vpop.f32.mrf.mxu0
        %v3054 = vadd.f32 %v2965, %v3053
        %3055 = vmatmul.bf16.gmra.mxu0 %v2442
        %v3056 = vpop.f32.mrf.mxu0
        %v3057 = vadd.f32 %v2968, %v3056
        %v3058 = vpop.f32.mrf.mxu0
        %v3059 = vadd.f32 %v2970, %v3058
        %3060 = vmatmul.bf16.gmra.mxu0 %v2446
        %v3061 = vpop.f32.mrf.mxu0
        %v3062 = vadd.f32 %v2973, %v3061
        %v3063 = vpop.f32.mrf.mxu0
        %v3064 = vadd.f32 %v2975, %v3063
        %3065 = vmatmul.bf16.gmra.mxu0 %v2450
        %v3066 = vpop.f32.mrf.mxu0
        %v3067 = vadd.f32 %v2978, %v3066
        %v3068 = vpop.f32.mrf.mxu0
        %v3069 = vadd.f32 %v2980, %v3068
        %3070 = vmatmul.bf16.gmra.mxu0 %v2454
        %v3071 = vpop.f32.mrf.mxu0
        %v3072 = vadd.f32 %v2983, %v3071
        %v3073 = vpop.f32.mrf.mxu0
        %v3074 = vadd.f32 %v2985, %v3073
        %3075 = vmatmul.bf16.gmra.mxu0 %v2458
        %v3076 = vpop.f32.mrf.mxu0
        %v3077 = vadd.f32 %v2988, %v3076
        %v3078 = vpop.f32.mrf.mxu0
        %v3079 = vadd.f32 %v2990, %v3078
        %3080 = vmatmul.bf16.gmra.mxu0 %v2462
        %v3081 = vpop.f32.mrf.mxu0
        %v3082 = vadd.f32 %v2993, %v3081
        %v3083 = vpop.f32.mrf.mxu0
        %v3084 = vadd.f32 %v2995, %v3083
        %3085 = vmatmul.bf16.gmra.mxu0 %v2466
        %v3086 = vpop.f32.mrf.mxu0
        %v3087 = vadd.f32 %v2998, %v3086
        %v3088 = vpop.f32.mrf.mxu0
        %v3089 = vadd.f32 %v3000, %v3088
        %3090 = vmatmul.bf16.gmra.mxu0 %v2470
        %v3091 = vpop.f32.mrf.mxu0
        %v3092 = vadd.f32 %v3003, %v3091
        %v3093 = vpop.f32.mrf.mxu0
        %v3094 = vadd.f32 %v3005, %v3093
        %3095 = vmatmul.bf16.gmra.mxu0 %v2474
        %v3096 = vpop.f32.mrf.mxu0
        %v3097 = vadd.f32 %v3008, %v3096
        %v3098 = vpop.f32.mrf.mxu0
        %v3099 = vadd.f32 %v3010, %v3098
        %3100 = vmatmul.bf16.gmra.mxu0 %v2478
        %v3101 = vpop.f32.mrf.mxu0
        %v3102 = vadd.f32 %v3013, %v3101
        %v3103 = vpop.f32.mrf.mxu0
        %v3104 = vadd.f32 %v3015, %v3103
        %3105 = vdwg.mxu0
        %3106 = vmatpush.bf16.msra.mxu0 %v2831
        %3107 = vmatpush.bf16.msra.mxu0 %v2830
        %3108 = vmatpush.bf16.msra.mxu0 %v2829
        %3109 = vmatpush.bf16.msra.mxu0 %v2828
        %3110 = vmatpush.bf16.msra.mxu0 %v2827
        %3111 = vmatpush.bf16.msra.mxu0 %v2826
        %3112 = vmatpush.bf16.msra.mxu0 %v2825
        %3113 = vmatpush.bf16.msra.mxu0 %v2824
        %3114 = vmatmul.bf16.gmra.mxu0 %v2482
        %v3115 = vpop.f32.mrf.mxu0
        %v3116 = vadd.f32 %v3027, %v3115
        %v3117 = vpop.f32.mrf.mxu0
        %v3118 = vadd.f32 %v3029, %v3117
        %3119 = vmatmul.bf16.gmra.mxu0 %v2486
        %v3120 = vpop.f32.mrf.mxu0
        %v3121 = vadd.f32 %v3032, %v3120
        %v3122 = vpop.f32.mrf.mxu0
        %v3123 = vadd.f32 %v3034, %v3122
        %3124 = vmatmul.bf16.gmra.mxu0 %v2490
        %v3125 = vpop.f32.mrf.mxu0
        %v3126 = vadd.f32 %v3037, %v3125
        %v3127 = vpop.f32.mrf.mxu0
        %v3128 = vadd.f32 %v3039, %v3127
        %3129 = vmatmul.bf16.gmra.mxu0 %v2494
        %v3130 = vpop.f32.mrf.mxu0
        %v3131 = vadd.f32 %v3042, %v3130
        %v3132 = vpop.f32.mrf.mxu0
        %v3133 = vadd.f32 %v3044, %v3132
        %3134 = vmatmul.bf16.gmra.mxu0 %v2498
        %v3135 = vpop.f32.mrf.mxu0
        %v3136 = vadd.f32 %v3047, %v3135
        %v3137 = vpop.f32.mrf.mxu0
        %v3138 = vadd.f32 %v3049, %v3137
        %3139 = vmatmul.bf16.gmra.mxu0 %v2502
        %v3140 = vpop.f32.mrf.mxu0
        %v3141 = vadd.f32 %v3052, %v3140
        %v3142 = vpop.f32.mrf.mxu0
        %v3143 = vadd.f32 %v3054, %v3142
        %3144 = vmatmul.bf16.gmra.mxu0 %v2506
        %v3145 = vpop.f32.mrf.mxu0
        %v3146 = vadd.f32 %v3057, %v3145
        %v3147 = vpop.f32.mrf.mxu0
        %v3148 = vadd.f32 %v3059, %v3147
        %3149 = vmatmul.bf16.gmra.mxu0 %v2510
        %v3150 = vpop.f32.mrf.mxu0
        %v3151 = vadd.f32 %v3062, %v3150
        %v3152 = vpop.f32.mrf.mxu0
        %v3153 = vadd.f32 %v3064, %v3152
        %3154 = vmatmul.bf16.gmra.mxu0 %v2514
        %v3155 = vpop.f32.mrf.mxu0
        %v3156 = vadd.f32 %v3067, %v3155
        %v3157 = vpop.f32.mrf.mxu0
        %v3158 = vadd.f32 %v3069, %v3157
        %3159 = vmatmul.bf16.gmra.mxu0 %v2518
        %v3160 = vpop.f32.mrf.mxu0
        %v3161 = vadd.f32 %v3072, %v3160
        %v3162 = vpop.f32.mrf.mxu0
        %v3163 = vadd.f32 %v3074, %v3162
        %3164 = vmatmul.bf16.gmra.mxu0 %v2522
        %v3165 = vpop.f32.mrf.mxu0
        %v3166 = vadd.f32 %v3077, %v3165
        %v3167 = vpop.f32.mrf.mxu0
        %v3168 = vadd.f32 %v3079, %v3167
        %3169 = vmatmul.bf16.gmra.mxu0 %v2526
        %v3170 = vpop.f32.mrf.mxu0
        %v3171 = vadd.f32 %v3082, %v3170
        %v3172 = vpop.f32.mrf.mxu0
        %v3173 = vadd.f32 %v3084, %v3172
        %3174 = vmatmul.bf16.gmra.mxu0 %v2530
        %v3175 = vpop.f32.mrf.mxu0
        %v3176 = vadd.f32 %v3087, %v3175
        %v3177 = vpop.f32.mrf.mxu0
        %v3178 = vadd.f32 %v3089, %v3177
        %3179 = vmatmul.bf16.gmra.mxu0 %v2534
        %v3180 = vpop.f32.mrf.mxu0
        %v3181 = vadd.f32 %v3092, %v3180
        %v3182 = vpop.f32.mrf.mxu0
        %v3183 = vadd.f32 %v3094, %v3182
        %3184 = vmatmul.bf16.gmra.mxu0 %v2538
        %v3185 = vpop.f32.mrf.mxu0
        %v3186 = vadd.f32 %v3097, %v3185
        %v3187 = vpop.f32.mrf.mxu0
        %v3188 = vadd.f32 %v3099, %v3187
        %3189 = vmatmul.bf16.gmra.mxu0 %v2542
        %v3190 = vpop.f32.mrf.mxu0
        %v3191 = vadd.f32 %v3102, %v3190
        %v3192 = vpop.f32.mrf.mxu0
        %v3193 = vadd.f32 %v3104, %v3192
        %3194 = vdwg.mxu0
        %3195 = vmatpush.bf16.msra.mxu0 %v2839
        %3196 = vmatpush.bf16.msra.mxu0 %v2838
        %3197 = vmatpush.bf16.msra.mxu0 %v2837
        %3198 = vmatpush.bf16.msra.mxu0 %v2836
        %3199 = vmatpush.bf16.msra.mxu0 %v2835
        %3200 = vmatpush.bf16.msra.mxu0 %v2834
        %3201 = vmatpush.bf16.msra.mxu0 %v2833
        %3202 = vmatpush.bf16.msra.mxu0 %v2832
        %3203 = vmatmul.bf16.gmra.mxu0 %v2545
        %v3204 = vpop.f32.mrf.mxu0
        %v3205 = vadd.f32 %v3116, %v3204
        %v3206 = vpop.f32.mrf.mxu0
        %v3207 = vadd.f32 %v3118, %v3206
        %3208 = vmatmul.bf16.gmra.mxu0 %v2548
        %v3209 = vpop.f32.mrf.mxu0
        %v3210 = vadd.f32 %v3121, %v3209
        %v3211 = vpop.f32.mrf.mxu0
        %v3212 = vadd.f32 %v3123, %v3211
        %3213 = vmatmul.bf16.gmra.mxu0 %v2551
        %v3214 = vpop.f32.mrf.mxu0
        %v3215 = vadd.f32 %v3126, %v3214
        %v3216 = vpop.f32.mrf.mxu0
        %v3217 = vadd.f32 %v3128, %v3216
        %3218 = vmatmul.bf16.gmra.mxu0 %v2554
        %v3219 = vpop.f32.mrf.mxu0
        %v3220 = vadd.f32 %v3131, %v3219
        %v3221 = vpop.f32.mrf.mxu0
        %v3222 = vadd.f32 %v3133, %v3221
        %3223 = vmatmul.bf16.gmra.mxu0 %v2557
        %v3224 = vpop.f32.mrf.mxu0
        %v3225 = vadd.f32 %v3136, %v3224
        %v3226 = vpop.f32.mrf.mxu0
        %v3227 = vadd.f32 %v3138, %v3226
        %3228 = vmatmul.bf16.gmra.mxu0 %v2560
        %v3229 = vpop.f32.mrf.mxu0
        %v3230 = vadd.f32 %v3141, %v3229
        %v3231 = vpop.f32.mrf.mxu0
        %v3232 = vadd.f32 %v3143, %v3231
        %3233 = vmatmul.bf16.gmra.mxu0 %v2563
        %v3234 = vpop.f32.mrf.mxu0
        %v3235 = vadd.f32 %v3146, %v3234
        %v3236 = vpop.f32.mrf.mxu0
        %v3237 = vadd.f32 %v3148, %v3236
        %3238 = vmatmul.bf16.gmra.mxu0 %v2566
        %v3239 = vpop.f32.mrf.mxu0
        %v3240 = vadd.f32 %v3151, %v3239
        %v3241 = vpop.f32.mrf.mxu0
        %v3242 = vadd.f32 %v3153, %v3241
        %3243 = vmatmul.bf16.gmra.mxu0 %v2569
        %v3244 = vpop.f32.mrf.mxu0
        %v3245 = vadd.f32 %v3156, %v3244
        %v3246 = vpop.f32.mrf.mxu0
        %v3247 = vadd.f32 %v3158, %v3246
        %3248 = vmatmul.bf16.gmra.mxu0 %v2572
        %v3249 = vpop.f32.mrf.mxu0
        %v3250 = vadd.f32 %v3161, %v3249
        %v3251 = vpop.f32.mrf.mxu0
        %v3252 = vadd.f32 %v3163, %v3251
        %3253 = vmatmul.bf16.gmra.mxu0 %v2575
        %v3254 = vpop.f32.mrf.mxu0
        %v3255 = vadd.f32 %v3166, %v3254
        %v3256 = vpop.f32.mrf.mxu0
        %v3257 = vadd.f32 %v3168, %v3256
        %3258 = vmatmul.bf16.gmra.mxu0 %v2578
        %v3259 = vpop.f32.mrf.mxu0
        %v3260 = vadd.f32 %v3171, %v3259
        %v3261 = vpop.f32.mrf.mxu0
        %v3262 = vadd.f32 %v3173, %v3261
        %3263 = vmatmul.bf16.gmra.mxu0 %v2581
        %v3264 = vpop.f32.mrf.mxu0
        %v3265 = vadd.f32 %v3176, %v3264
        %v3266 = vpop.f32.mrf.mxu0
        %v3267 = vadd.f32 %v3178, %v3266
        %3268 = vmatmul.bf16.gmra.mxu0 %v2584
        %v3269 = vpop.f32.mrf.mxu0
        %v3270 = vadd.f32 %v3181, %v3269
        %v3271 = vpop.f32.mrf.mxu0
        %v3272 = vadd.f32 %v3183, %v3271
        %3273 = vmatmul.bf16.gmra.mxu0 %v2587
        %v3274 = vpop.f32.mrf.mxu0
        %v3275 = vadd.f32 %v3186, %v3274
        %v3276 = vpop.f32.mrf.mxu0
        %v3277 = vadd.f32 %v3188, %v3276
        %3278 = vmatmul.bf16.gmra.mxu0 %v2590
        %v3279 = vpop.f32.mrf.mxu0
        %v3280 = vadd.f32 %v3191, %v3279
        %v3281 = vpop.f32.mrf.mxu0
        %v3282 = vadd.f32 %v3193, %v3281
        %3283 = vdwg.mxu0
        %3284 = vmatpush.bf16.msra.mxu0 0
        %3285 = vmatpush.bf16.msra.mxu0 0
        %3286 = vmatpush.bf16.msra.mxu0 0
        %3287 = vmatpush.bf16.msra.mxu0 0
        %3288 = vmatpush.bf16.msra.mxu0 %v2843
        %3289 = vmatpush.bf16.msra.mxu0 %v2842
        %3290 = vmatpush.bf16.msra.mxu0 %v2841
        %3291 = vmatpush.bf16.msra.mxu0 %v2840
        %3292 = vmatmul.bf16.gmra.mxu0 %v2881
        %v3293 = vpop.f32.mrf.mxu0
        %v3294 = vadd.f32 %v3205, %v3293
        %v3295 = vpop.f32.mrf.mxu0
        %v3296 = vadd.f32 %v3207, %v3295
        %3297 = vmatmul.bf16.gmra.mxu0 %v2884
        %v3298 = vpop.f32.mrf.mxu0
        %v3299 = vadd.f32 %v3210, %v3298
        %v3300 = vpop.f32.mrf.mxu0
        %v3301 = vadd.f32 %v3212, %v3300
        %3302 = vmatmul.bf16.gmra.mxu0 %v2887
        %v3303 = vpop.f32.mrf.mxu0
        %v3304 = vadd.f32 %v3215, %v3303
        %v3305 = vpop.f32.mrf.mxu0
        %v3306 = vadd.f32 %v3217, %v3305
        %3307 = vmatmul.bf16.gmra.mxu0 %v2890
        %v3308 = vpop.f32.mrf.mxu0
        %v3309 = vadd.f32 %v3220, %v3308
        %v3310 = vpop.f32.mrf.mxu0
        %v3311 = vadd.f32 %v3222, %v3310
        %3312 = vmatmul.bf16.gmra.mxu0 %v2893
        %v3313 = vpop.f32.mrf.mxu0
        %v3314 = vadd.f32 %v3225, %v3313
        %v3315 = vpop.f32.mrf.mxu0
        %v3316 = vadd.f32 %v3227, %v3315
        %3317 = vmatmul.bf16.gmra.mxu0 %v2896
        %v3318 = vpop.f32.mrf.mxu0
        %v3319 = vadd.f32 %v3230, %v3318
        %v3320 = vpop.f32.mrf.mxu0
        %v3321 = vadd.f32 %v3232, %v3320
        %3322 = vmatmul.bf16.gmra.mxu0 %v2899
        %v3323 = vpop.f32.mrf.mxu0
        %v3324 = vadd.f32 %v3235, %v3323
        %v3325 = vpop.f32.mrf.mxu0
        %v3326 = vadd.f32 %v3237, %v3325
        %3327 = vmatmul.bf16.gmra.mxu0 %v2902
        %v3328 = vpop.f32.mrf.mxu0
        %v3329 = vadd.f32 %v3240, %v3328
        %v3330 = vpop.f32.mrf.mxu0
        %v3331 = vadd.f32 %v3242, %v3330
        %3332 = vmatmul.bf16.gmra.mxu0 %v2905
        %v3333 = vpop.f32.mrf.mxu0
        %v3334 = vadd.f32 %v3245, %v3333
        %v3335 = vpop.f32.mrf.mxu0
        %v3336 = vadd.f32 %v3247, %v3335
        %3337 = vmatmul.bf16.gmra.mxu0 %v2908
        %v3338 = vpop.f32.mrf.mxu0
        %v3339 = vadd.f32 %v3250, %v3338
        %v3340 = vpop.f32.mrf.mxu0
        %v3341 = vadd.f32 %v3252, %v3340
        %3342 = vmatmul.bf16.gmra.mxu0 %v2911
        %v3343 = vpop.f32.mrf.mxu0
        %v3344 = vadd.f32 %v3255, %v3343
        %v3345 = vpop.f32.mrf.mxu0
        %v3346 = vadd.f32 %v3257, %v3345
        %3347 = vmatmul.bf16.gmra.mxu0 %v2914
        %v3348 = vpop.f32.mrf.mxu0
        %v3349 = vadd.f32 %v3260, %v3348
        %v3350 = vpop.f32.mrf.mxu0
        %v3351 = vadd.f32 %v3262, %v3350
        %3352 = vmatmul.bf16.gmra.mxu0 %v2917
        %v3353 = vpop.f32.mrf.mxu0
        %v3354 = vadd.f32 %v3265, %v3353
        %v3355 = vpop.f32.mrf.mxu0
        %v3356 = vadd.f32 %v3267, %v3355
        %3357 = vmatmul.bf16.gmra.mxu0 %v2920
        %v3358 = vpop.f32.mrf.mxu0
        %v3359 = vadd.f32 %v3270, %v3358
        %v3360 = vpop.f32.mrf.mxu0
        %v3361 = vadd.f32 %v3272, %v3360
        %3362 = vmatmul.bf16.gmra.mxu0 %v2923
        %v3363 = vpop.f32.mrf.mxu0
        %v3364 = vadd.f32 %v3275, %v3363
        %v3365 = vpop.f32.mrf.mxu0
        %v3366 = vadd.f32 %v3277, %v3365
        %3367 = vmatmul.bf16.gmra.mxu0 %v2926
        %v3368 = vpop.f32.mrf.mxu0
        %v3369 = vadd.f32 %v3280, %v3368
        %v3370 = vpop.f32.mrf.mxu0
        %v3371 = vadd.f32 %v3282, %v3370
        %3372 = vdwg.mxu0
        %vm3373 = vcmp.ge.f32.partialorder %v3294, 0.0
        %vm3374 = vcmp.ge.f32.partialorder %v3296, 0.0
        %vm3375 = vcmp.ge.f32.partialorder %v3299, 0.0
        %vm3376 = vcmp.ge.f32.partialorder %v3301, 0.0
        %vm3377 = vcmp.ge.f32.partialorder %v3304, 0.0
        %vm3378 = vcmp.ge.f32.partialorder %v3306, 0.0
        %vm3379 = vcmp.ge.f32.partialorder %v3309, 0.0
        %vm3380 = vcmp.ge.f32.partialorder %v3311, 0.0
        %vm3381 = vcmp.ge.f32.partialorder %v3314, 0.0
        %vm3382 = vcmp.ge.f32.partialorder %v3316, 0.0
        %vm3383 = vcmp.ge.f32.partialorder %v3319, 0.0
        %vm3384 = vcmp.ge.f32.partialorder %v3321, 0.0
        %vm3385 = vcmp.ge.f32.partialorder %v3324, 0.0
        %vm3386 = vcmp.ge.f32.partialorder %v3326, 0.0
        %vm3387 = vcmp.ge.f32.partialorder %v3329, 0.0
        %vm3388 = vcmp.ge.f32.partialorder %v3331, 0.0
        %vm3389 = vcmp.ge.f32.partialorder %v3334, 0.0
        %vm3390 = vcmp.ge.f32.partialorder %v3336, 0.0
        %vm3391 = vcmp.ge.f32.partialorder %v3339, 0.0
        %vm3392 = vcmp.ge.f32.partialorder %v3341, 0.0
        %vm3393 = vcmp.ge.f32.partialorder %v3344, 0.0
        %vm3394 = vcmp.ge.f32.partialorder %v3346, 0.0
        %vm3395 = vcmp.ge.f32.partialorder %v3349, 0.0
        %vm3396 = vcmp.ge.f32.partialorder %v3351, 0.0
        %vm3397 = vcmp.ge.f32.partialorder %v3354, 0.0
        %vm3398 = vcmp.ge.f32.partialorder %v3356, 0.0
        %vm3399 = vcmp.ge.f32.partialorder %v3359, 0.0
        %vm3400 = vcmp.ge.f32.partialorder %v3361, 0.0
        %vm3401 = vcmp.ge.f32.partialorder %v3364, 0.0
        %vm3402 = vcmp.ge.f32.partialorder %v3366, 0.0
        %vm3403 = vcmp.ge.f32.partialorder %v3369, 0.0
        %vm3404 = vcmp.ge.f32.partialorder %v3371, 0.0
        %v3405 = vstv %s233
        %v3406 = vmul.f32 %v3405, %v3294
        %v3407 = vmul.f32 %v3405, %v3296
        %v3408 = vmul.f32 %v3405, %v3299
        %v3409 = vmul.f32 %v3405, %v3301
        %v3410 = vmul.f32 %v3405, %v3304
        %v3411 = vmul.f32 %v3405, %v3306
        %v3412 = vmul.f32 %v3405, %v3309
        %v3413 = vmul.f32 %v3405, %v3311
        %v3414 = vmul.f32 %v3405, %v3314
        %v3415 = vmul.f32 %v3405, %v3316
        %v3416 = vmul.f32 %v3405, %v3319
        %v3417 = vmul.f32 %v3405, %v3321
        %v3418 = vmul.f32 %v3405, %v3324
        %v3419 = vmul.f32 %v3405, %v3326
        %v3420 = vmul.f32 %v3405, %v3329
        %v3421 = vmul.f32 %v3405, %v3331
        %v3422 = vmul.f32 %v3405, %v3334
        %v3423 = vmul.f32 %v3405, %v3336
        %v3424 = vmul.f32 %v3405, %v3339
        %v3425 = vmul.f32 %v3405, %v3341
        %v3426 = vmul.f32 %v3405, %v3344
        %v3427 = vmul.f32 %v3405, %v3346
        %v3428 = vmul.f32 %v3405, %v3349
        %v3429 = vmul.f32 %v3405, %v3351
        %v3430 = vmul.f32 %v3405, %v3354
        %v3431 = vmul.f32 %v3405, %v3356
        %v3432 = vmul.f32 %v3405, %v3359
        %v3433 = vmul.f32 %v3405, %v3361
        %v3434 = vmul.f32 %v3405, %v3364
        %v3435 = vmul.f32 %v3405, %v3366
        %v3436 = vmul.f32 %v3405, %v3369
        %v3437 = vmul.f32 %v3405, %v3371
        %v3438 = vsel %vm3373, %v3294, %v3406
        %v3439 = vsel %vm3374, %v3296, %v3407
        %v3440 = vsel %vm3375, %v3299, %v3408
        %v3441 = vsel %vm3376, %v3301, %v3409
        %v3442 = vsel %vm3377, %v3304, %v3410
        %v3443 = vsel %vm3378, %v3306, %v3411
        %v3444 = vsel %vm3379, %v3309, %v3412
        %v3445 = vsel %vm3380, %v3311, %v3413
        %v3446 = vsel %vm3381, %v3314, %v3414
        %v3447 = vsel %vm3382, %v3316, %v3415
        %v3448 = vsel %vm3383, %v3319, %v3416
        %v3449 = vsel %vm3384, %v3321, %v3417
        %v3450 = vsel %vm3385, %v3324, %v3418
        %v3451 = vsel %vm3386, %v3326, %v3419
        %v3452 = vsel %vm3387, %v3329, %v3420
        %v3453 = vsel %vm3388, %v3331, %v3421
        %v3454 = vsel %vm3389, %v3334, %v3422
        %v3455 = vsel %vm3390, %v3336, %v3423
        %v3456 = vsel %vm3391, %v3339, %v3424
        %v3457 = vsel %vm3392, %v3341, %v3425
        %v3458 = vsel %vm3393, %v3344, %v3426
        %v3459 = vsel %vm3394, %v3346, %v3427
        %v3460 = vsel %vm3395, %v3349, %v3428
        %v3461 = vsel %vm3396, %v3351, %v3429
        %v3462 = vsel %vm3397, %v3354, %v3430
        %v3463 = vsel %vm3398, %v3356, %v3431
        %v3464 = vsel %vm3399, %v3359, %v3432
        %v3465 = vsel %vm3400, %v3361, %v3433
        %v3466 = vsel %vm3401, %v3364, %v3434
        %v3467 = vsel %vm3402, %v3366, %v3435
        %v3468 = vsel %vm3403, %v3369, %v3436
        %v3469 = vsel %vm3404, %v3371, %v3437
        %3470 = vst.msk [vmem:[#allocation3] sm:$0xf] %vm235, 0
        %3471 = vst.msk [vmem:[#allocation3 + $0x4] sm:$0xf] %vm235, 0
        %3472 = vst.msk [vmem:[#allocation3 + $0x8] sm:$0x1] %vm238, 0
        %3473 = vst.msk [vmem:[#allocation3 + $0xc] sm:$0xf] %vm235, 0
        %3474 = vst.msk [vmem:[#allocation3 + $0x10] sm:$0xf] %vm235, 0
        %3475 = vst.msk [vmem:[#allocation3 + $0x14] sm:$0x1] %vm238, 0
        %3476 = vst.msk [vmem:[#allocation3 + $0x18] sm:$0xf] %vm235, 0
        %3477 = vst.msk [vmem:[#allocation3 + $0x1c] sm:$0xf] %vm235, 0
        %3478 = vst.msk [vmem:[#allocation3 + $0x20] sm:$0x1] %vm238, 0
        %3479 = vst.msk [vmem:[#allocation3 + $0x24] sm:$0xf] %vm235, 0
        %3480 = vst.msk [vmem:[#allocation3 + $0x28] sm:$0xf] %vm235, 0
        %3481 = vst.msk [vmem:[#allocation3 + $0x2c] sm:$0x1] %vm238, 0
        %3482 = vst.msk [vmem:[#allocation3 + $0x30] sm:$0xf] %vm235, 0
        %3483 = vst.msk [vmem:[#allocation3 + $0x34] sm:$0xf] %vm235, 0
        %3484 = vst.msk [vmem:[#allocation3 + $0x38] sm:$0x1] %vm238, 0
        %3485 = vst.msk [vmem:[#allocation3 + $0x3c] sm:$0xf] %vm235, 0
        %3486 = vst.msk [vmem:[#allocation3 + $0x40] sm:$0xf] %vm235, 0
        %3487 = vst.msk [vmem:[#allocation3 + $0x44] sm:$0x1] %vm238, 0
        %3488 = vst.msk [vmem:[#allocation3 + $0x48] sm:$0xf] %vm235, 0
        %3489 = vst.msk [vmem:[#allocation3 + $0x4c] sm:$0xf] %vm235, 0
        %3490 = vst.msk [vmem:[#allocation3 + $0x50] sm:$0x1] %vm238, 0
        %3491 = vst.msk [vmem:[#allocation3 + $0x54] sm:$0xf] %vm235, 0
        %3492 = vst.msk [vmem:[#allocation3 + $0x58] sm:$0xf] %vm235, 0
        %3493 = vst.msk [vmem:[#allocation3 + $0x5c] sm:$0x1] %vm238, 0
        %3494 = vst.msk [vmem:[#allocation3 + $0x60] sm:$0xf] %vm235, 0
        %3495 = vst.msk [vmem:[#allocation3 + $0x64] sm:$0xf] %vm235, 0
        %3496 = vst.msk [vmem:[#allocation3 + $0x68] sm:$0x1] %vm238, 0
        %3497 = vst.msk [vmem:[#allocation3 + $0x6c] sm:$0xf] %vm235, 0
        %3498 = vst.msk [vmem:[#allocation3 + $0x70] sm:$0xf] %vm235, 0
        %3499 = vst.msk [vmem:[#allocation3 + $0x74] sm:$0x1] %vm238, 0
        %3500 = vst.msk [vmem:[#allocation3 + $0x78] sm:$0xf] %vm235, 0
        %3501 = vst.msk [vmem:[#allocation3 + $0x7c] sm:$0xf] %vm235, 0
        %3502 = vst.msk [vmem:[#allocation3 + $0x80] sm:$0x1] %vm238, 0
        %3503 = vst.msk [vmem:[#allocation3 + $0x84] sm:$0xf] %vm235, 0
        %3504 = vst.msk [vmem:[#allocation3 + $0x88] sm:$0xf] %vm235, 0
        %3505 = vst.msk [vmem:[#allocation3 + $0x8c] sm:$0x1] %vm238, 0
        %3506 = vst.msk [vmem:[#allocation3 + $0x90] sm:$0xf] %vm235, 0
        %3507 = vst.msk [vmem:[#allocation3 + $0x94] sm:$0xf] %vm235, 0
        %3508 = vst.msk [vmem:[#allocation3 + $0x98] sm:$0x1] %vm238, 0
        %3509 = vst.msk [vmem:[#allocation3 + $0x9c] sm:$0xf] %vm235, 0
        %3510 = vst.msk [vmem:[#allocation3 + $0xa0] sm:$0xf] %vm235, 0
        %3511 = vst.msk [vmem:[#allocation3 + $0xa4] sm:$0x1] %vm238, 0
        %3512 = vst.msk [vmem:[#allocation3 + $0xa8] sm:$0xf] %vm235, 0
        %3513 = vst.msk [vmem:[#allocation3 + $0xac] sm:$0xf] %vm235, 0
        %3514 = vst.msk [vmem:[#allocation3 + $0xb0] sm:$0x1] %vm238, 0
        %3515 = vst.msk [vmem:[#allocation3 + $0xb4] sm:$0xf] %vm235, 0
        %3516 = vst.msk [vmem:[#allocation3 + $0xb8] sm:$0xf] %vm235, 0
        %3517 = vst.msk [vmem:[#allocation3 + $0xbc] sm:$0x1] %vm238, 0
        %3518 = vst.msk [vmem:[#allocation3 + $0xc0] sm:$0xf] %vm235, 0
        %3519 = vst.msk [vmem:[#allocation3 + $0xc4] sm:$0xf] %vm235, 0
        %3520 = vst.msk [vmem:[#allocation3 + $0xc8] sm:$0x1] %vm238, 0
        %3521 = vst.msk [vmem:[#allocation3 + $0xcc] sm:$0xf] %vm235, 0
        %3522 = vst.msk [vmem:[#allocation3 + $0xd0] sm:$0xf] %vm235, 0
        %3523 = vst.msk [vmem:[#allocation3 + $0xd4] sm:$0x1] %vm238, 0
        %v3524 = vpack.c.bf16 %v3438, %v3438
        %v3525 = vpack.c.bf16 %v3439, %v3439
        %v3526 = vpack.c.bf16 %v3440, %v3440
        %v3527 = vpack.c.bf16 %v3441, %v3441
        %v3528 = vpack.c.bf16 %v3442, %v3442
        %v3529 = vpack.c.bf16 %v3443, %v3443
        %v3530 = vpack.c.bf16 %v3444, %v3444
        %v3531 = vpack.c.bf16 %v3445, %v3445
        %v3532 = vpack.c.bf16 %v3446, %v3446
        %v3533 = vpack.c.bf16 %v3447, %v3447
        %v3534 = vpack.c.bf16 %v3448, %v3448
        %v3535 = vpack.c.bf16 %v3449, %v3449
        %v3536 = vpack.c.bf16 %v3450, %v3450
        %v3537 = vpack.c.bf16 %v3451, %v3451
        %v3538 = vpack.c.bf16 %v3452, %v3452
        %v3539 = vpack.c.bf16 %v3453, %v3453
        %v3540 = vpack.c.bf16 %v3454, %v3454
        %v3541 = vpack.c.bf16 %v3455, %v3455
        %v3542 = vpack.c.bf16 %v3456, %v3456
        %v3543 = vpack.c.bf16 %v3457, %v3457
        %v3544 = vpack.c.bf16 %v3458, %v3458
        %v3545 = vpack.c.bf16 %v3459, %v3459
        %v3546 = vpack.c.bf16 %v3460, %v3460
        %v3547 = vpack.c.bf16 %v3461, %v3461
        %v3548 = vpack.c.bf16 %v3462, %v3462
        %v3549 = vpack.c.bf16 %v3463, %v3463
        %v3550 = vpack.c.bf16 %v3464, %v3464
        %v3551 = vpack.c.bf16 %v3465, %v3465
        %v3552 = vpack.c.bf16 %v3466, %v3466
        %v3553 = vpack.c.bf16 %v3467, %v3467
        %v3554 = vpack.c.bf16 %v3468, %v3468
        %v3555 = vpack.c.bf16 %v3469, %v3469
        %v3557 = vshrl.u32 %v3524, 16
        %v3559 = vrot.slane %v3557, 7
        %v3560 = vshll.u32 %v3524, 16
        %v3562 = vor.u32 %v3559, %v3560
        %v3563 = vrot.slane %v3559, 4
        %v3565 = vshrl.u32 %v3525, 16
        %v3567 = vrot.slane %v3565, 7
        %v3568 = vshll.u32 %v3525, 16
        %v3570 = vor.u32 %v3567, %v3568
        %v3571 = vsel %vm357, %v3563, %v3570
        %v3572 = vrot.slane %v3567, 4
        %v3574 = vshrl.u32 %v3526, 16
        %v3576 = vrot.slane %v3574, 7
        %v3577 = vshll.u32 %v3526, 16
        %v3579 = vor.u32 %v3576, %v3577
        %v3580 = vrot.slane %v3576, 4
        %v3582 = vshrl.u32 %v3527, 16
        %v3584 = vrot.slane %v3582, 7
        %v3585 = vshll.u32 %v3527, 16
        %v3587 = vor.u32 %v3584, %v3585
        %v3588 = vsel %vm357, %v3580, %v3587
        %v3589 = vrot.slane %v3584, 4
        %v3591 = vshrl.u32 %v3528, 16
        %v3593 = vrot.slane %v3591, 7
        %v3594 = vshll.u32 %v3528, 16
        %v3596 = vor.u32 %v3593, %v3594
        %v3597 = vrot.slane %v3593, 4
        %v3599 = vshrl.u32 %v3529, 16
        %v3601 = vrot.slane %v3599, 7
        %v3602 = vshll.u32 %v3529, 16
        %v3604 = vor.u32 %v3601, %v3602
        %v3605 = vsel %vm357, %v3597, %v3604
        %v3606 = vrot.slane %v3601, 4
        %v3608 = vshrl.u32 %v3530, 16
        %v3610 = vrot.slane %v3608, 7
        %v3611 = vshll.u32 %v3530, 16
        %v3613 = vor.u32 %v3610, %v3611
        %v3614 = vrot.slane %v3610, 4
        %v3616 = vshrl.u32 %v3531, 16
        %v3618 = vrot.slane %v3616, 7
        %v3619 = vshll.u32 %v3531, 16
        %v3621 = vor.u32 %v3618, %v3619
        %v3622 = vsel %vm357, %v3614, %v3621
        %v3623 = vrot.slane %v3618, 4
        %v3625 = vshrl.u32 %v3532, 16
        %v3627 = vrot.slane %v3625, 7
        %v3628 = vshll.u32 %v3532, 16
        %v3630 = vor.u32 %v3627, %v3628
        %v3631 = vrot.slane %v3627, 4
        %v3633 = vshrl.u32 %v3533, 16
        %v3635 = vrot.slane %v3633, 7
        %v3636 = vshll.u32 %v3533, 16
        %v3638 = vor.u32 %v3635, %v3636
        %v3639 = vsel %vm357, %v3631, %v3638
        %v3640 = vrot.slane %v3635, 4
        %v3642 = vshrl.u32 %v3534, 16
        %v3644 = vrot.slane %v3642, 7
        %v3645 = vshll.u32 %v3534, 16
        %v3647 = vor.u32 %v3644, %v3645
        %v3648 = vrot.slane %v3644, 4
        %v3650 = vshrl.u32 %v3535, 16
        %v3652 = vrot.slane %v3650, 7
        %v3653 = vshll.u32 %v3535, 16
        %v3655 = vor.u32 %v3652, %v3653
        %v3656 = vsel %vm357, %v3648, %v3655
        %v3657 = vrot.slane %v3652, 4
        %v3659 = vshrl.u32 %v3536, 16
        %v3661 = vrot.slane %v3659, 7
        %v3662 = vshll.u32 %v3536, 16
        %v3664 = vor.u32 %v3661, %v3662
        %v3665 = vrot.slane %v3661, 4
        %v3667 = vshrl.u32 %v3537, 16
        %v3669 = vrot.slane %v3667, 7
        %v3670 = vshll.u32 %v3537, 16
        %v3672 = vor.u32 %v3669, %v3670
        %v3673 = vsel %vm357, %v3665, %v3672
        %v3674 = vrot.slane %v3669, 4
        %v3676 = vshrl.u32 %v3538, 16
        %v3678 = vrot.slane %v3676, 7
        %v3679 = vshll.u32 %v3538, 16
        %v3681 = vor.u32 %v3678, %v3679
        %v3682 = vrot.slane %v3678, 4
        %v3684 = vshrl.u32 %v3539, 16
        %v3686 = vrot.slane %v3684, 7
        %v3687 = vshll.u32 %v3539, 16
        %v3689 = vor.u32 %v3686, %v3687
        %v3690 = vsel %vm357, %v3682, %v3689
        %v3691 = vrot.slane %v3686, 4
        %v3693 = vshrl.u32 %v3540, 16
        %v3695 = vrot.slane %v3693, 7
        %v3696 = vshll.u32 %v3540, 16
        %v3698 = vor.u32 %v3695, %v3696
        %v3699 = vrot.slane %v3695, 4
        %v3701 = vshrl.u32 %v3541, 16
        %v3703 = vrot.slane %v3701, 7
        %v3704 = vshll.u32 %v3541, 16
        %v3706 = vor.u32 %v3703, %v3704
        %v3707 = vsel %vm357, %v3699, %v3706
        %v3708 = vrot.slane %v3703, 4
        %v3710 = vshrl.u32 %v3542, 16
        %v3712 = vrot.slane %v3710, 7
        %v3713 = vshll.u32 %v3542, 16
        %v3715 = vor.u32 %v3712, %v3713
        %v3716 = vrot.slane %v3712, 4
        %v3718 = vshrl.u32 %v3543, 16
        %v3720 = vrot.slane %v3718, 7
        %v3721 = vshll.u32 %v3543, 16
        %v3723 = vor.u32 %v3720, %v3721
        %v3724 = vsel %vm357, %v3716, %v3723
        %v3725 = vrot.slane %v3720, 4
        %v3727 = vshrl.u32 %v3544, 16
        %v3729 = vrot.slane %v3727, 7
        %v3730 = vshll.u32 %v3544, 16
        %v3732 = vor.u32 %v3729, %v3730
        %v3733 = vrot.slane %v3729, 4
        %v3735 = vshrl.u32 %v3545, 16
        %v3737 = vrot.slane %v3735, 7
        %v3738 = vshll.u32 %v3545, 16
        %v3740 = vor.u32 %v3737, %v3738
        %v3741 = vsel %vm357, %v3733, %v3740
        %v3742 = vrot.slane %v3737, 4
        %v3744 = vshrl.u32 %v3546, 16
        %v3746 = vrot.slane %v3744, 7
        %v3747 = vshll.u32 %v3546, 16
        %v3749 = vor.u32 %v3746, %v3747
        %v3750 = vrot.slane %v3746, 4
        %v3752 = vshrl.u32 %v3547, 16
        %v3754 = vrot.slane %v3752, 7
        %v3755 = vshll.u32 %v3547, 16
        %v3757 = vor.u32 %v3754, %v3755
        %v3758 = vsel %vm357, %v3750, %v3757
        %v3759 = vrot.slane %v3754, 4
        %v3761 = vshrl.u32 %v3548, 16
        %v3763 = vrot.slane %v3761, 7
        %v3764 = vshll.u32 %v3548, 16
        %v3766 = vor.u32 %v3763, %v3764
        %v3767 = vrot.slane %v3763, 4
        %v3769 = vshrl.u32 %v3549, 16
        %v3771 = vrot.slane %v3769, 7
        %v3772 = vshll.u32 %v3549, 16
        %v3774 = vor.u32 %v3771, %v3772
        %v3775 = vsel %vm357, %v3767, %v3774
        %v3776 = vrot.slane %v3771, 4
        %v3778 = vshrl.u32 %v3550, 16
        %v3780 = vrot.slane %v3778, 7
        %v3781 = vshll.u32 %v3550, 16
        %v3783 = vor.u32 %v3780, %v3781
        %v3784 = vrot.slane %v3780, 4
        %v3786 = vshrl.u32 %v3551, 16
        %v3788 = vrot.slane %v3786, 7
        %v3789 = vshll.u32 %v3551, 16
        %v3791 = vor.u32 %v3788, %v3789
        %v3792 = vsel %vm357, %v3784, %v3791
        %v3793 = vrot.slane %v3788, 4
        %v3795 = vshrl.u32 %v3552, 16
        %v3797 = vrot.slane %v3795, 7
        %v3798 = vshll.u32 %v3552, 16
        %v3800 = vor.u32 %v3797, %v3798
        %v3801 = vrot.slane %v3797, 4
        %v3803 = vshrl.u32 %v3553, 16
        %v3805 = vrot.slane %v3803, 7
        %v3806 = vshll.u32 %v3553, 16
        %v3808 = vor.u32 %v3805, %v3806
        %v3809 = vsel %vm357, %v3801, %v3808
        %v3810 = vrot.slane %v3805, 4
        %v3812 = vshrl.u32 %v3554, 16
        %v3814 = vrot.slane %v3812, 7
        %v3815 = vshll.u32 %v3554, 16
        %v3817 = vor.u32 %v3814, %v3815
        %v3818 = vrot.slane %v3814, 4
        %v3820 = vshrl.u32 %v3555, 16
        %v3822 = vrot.slane %v3820, 7
        %v3823 = vshll.u32 %v3555, 16
        %v3825 = vor.u32 %v3822, %v3823
        %v3826 = vsel %vm357, %v3818, %v3825
        %v3827 = vrot.slane %v3822, 4
        %s3876 = scalar_lea.vmem [#allocation3], 12
        %v3877 = vld [vmem:[%s3876] sm:$0xf]
        %v3878 = vsel %vm681, %v3562, %v3877
        %3879 = vst [vmem:[%s3876] sm:$0xf] %v3878
        %3880 = vst.msk [vmem:[%s3876 + $0x4] sm:$0xf] %vm235, %v3571
        %v3881 = vld [vmem:[%s3876 + $0x8] sm:$0x1]
        %v3882 = vsel %vm687, %v3572, %v3881
        %3883 = vst [vmem:[%s3876 + $0x8] sm:$0x1] %v3882
        %v3884 = vld [vmem:[%s3876 + $0xc] sm:$0xf]
        %v3885 = vsel %vm681, %v3579, %v3884
        %3886 = vst [vmem:[%s3876 + $0xc] sm:$0xf] %v3885
        %3887 = vst.msk [vmem:[%s3876 + $0x10] sm:$0xf] %vm235, %v3588
        %v3888 = vld [vmem:[%s3876 + $0x14] sm:$0x1]
        %v3889 = vsel %vm687, %v3589, %v3888
        %3890 = vst [vmem:[%s3876 + $0x14] sm:$0x1] %v3889
        %v3891 = vld [vmem:[%s3876 + $0x18] sm:$0xf]
        %v3892 = vsel %vm681, %v3596, %v3891
        %3893 = vst [vmem:[%s3876 + $0x18] sm:$0xf] %v3892
        %3894 = vst.msk [vmem:[%s3876 + $0x1c] sm:$0xf] %vm235, %v3605
        %v3895 = vld [vmem:[%s3876 + $0x20] sm:$0x1]
        %v3896 = vsel %vm687, %v3606, %v3895
        %3897 = vst [vmem:[%s3876 + $0x20] sm:$0x1] %v3896
        %v3898 = vld [vmem:[%s3876 + $0x24] sm:$0xf]
        %v3899 = vsel %vm681, %v3613, %v3898
        %3900 = vst [vmem:[%s3876 + $0x24] sm:$0xf] %v3899
        %3901 = vst.msk [vmem:[%s3876 + $0x28] sm:$0xf] %vm235, %v3622
        %v3902 = vld [vmem:[%s3876 + $0x2c] sm:$0x1]
        %v3903 = vsel %vm687, %v3623, %v3902
        %3904 = vst [vmem:[%s3876 + $0x2c] sm:$0x1] %v3903
        %v3905 = vld [vmem:[%s3876 + $0x30] sm:$0xf]
        %v3906 = vsel %vm681, %v3630, %v3905
        %3907 = vst [vmem:[%s3876 + $0x30] sm:$0xf] %v3906
        %3908 = vst.msk [vmem:[%s3876 + $0x34] sm:$0xf] %vm235, %v3639
        %v3909 = vld [vmem:[%s3876 + $0x38] sm:$0x1]
        %v3910 = vsel %vm687, %v3640, %v3909
        %3911 = vst [vmem:[%s3876 + $0x38] sm:$0x1] %v3910
        %v3912 = vld [vmem:[%s3876 + $0x3c] sm:$0xf]
        %v3913 = vsel %vm681, %v3647, %v3912
        %3914 = vst [vmem:[%s3876 + $0x3c] sm:$0xf] %v3913
        %3915 = vst.msk [vmem:[%s3876 + $0x40] sm:$0xf] %vm235, %v3656
        %v3916 = vld [vmem:[%s3876 + $0x44] sm:$0x1]
        %v3917 = vsel %vm687, %v3657, %v3916
        %3918 = vst [vmem:[%s3876 + $0x44] sm:$0x1] %v3917
        %v3919 = vld [vmem:[%s3876 + $0x48] sm:$0xf]
        %v3920 = vsel %vm681, %v3664, %v3919
        %3921 = vst [vmem:[%s3876 + $0x48] sm:$0xf] %v3920
        %3922 = vst.msk [vmem:[%s3876 + $0x4c] sm:$0xf] %vm235, %v3673
        %v3923 = vld [vmem:[%s3876 + $0x50] sm:$0x1]
        %v3924 = vsel %vm687, %v3674, %v3923
        %3925 = vst [vmem:[%s3876 + $0x50] sm:$0x1] %v3924
        %v3926 = vld [vmem:[%s3876 + $0x54] sm:$0xf]
        %v3927 = vsel %vm681, %v3681, %v3926
        %3928 = vst [vmem:[%s3876 + $0x54] sm:$0xf] %v3927
        %3929 = vst.msk [vmem:[%s3876 + $0x58] sm:$0xf] %vm235, %v3690
        %v3930 = vld [vmem:[%s3876 + $0x5c] sm:$0x1]
        %v3931 = vsel %vm687, %v3691, %v3930
        %3932 = vst [vmem:[%s3876 + $0x5c] sm:$0x1] %v3931
        %v3933 = vld [vmem:[%s3876 + $0x60] sm:$0xf]
        %v3934 = vsel %vm681, %v3698, %v3933
        %3935 = vst [vmem:[%s3876 + $0x60] sm:$0xf] %v3934
        %3936 = vst.msk [vmem:[%s3876 + $0x64] sm:$0xf] %vm235, %v3707
        %v3937 = vld [vmem:[%s3876 + $0x68] sm:$0x1]
        %v3938 = vsel %vm687, %v3708, %v3937
        %3939 = vst [vmem:[%s3876 + $0x68] sm:$0x1] %v3938
        %v3940 = vld [vmem:[%s3876 + $0x6c] sm:$0xf]
        %v3941 = vsel %vm681, %v3715, %v3940
        %3942 = vst [vmem:[%s3876 + $0x6c] sm:$0xf] %v3941
        %3943 = vst.msk [vmem:[%s3876 + $0x70] sm:$0xf] %vm235, %v3724
        %v3944 = vld [vmem:[%s3876 + $0x74] sm:$0x1]
        %v3945 = vsel %vm687, %v3725, %v3944
        %3946 = vst [vmem:[%s3876 + $0x74] sm:$0x1] %v3945
        %v3947 = vld [vmem:[%s3876 + $0x78] sm:$0xf]
        %v3948 = vsel %vm681, %v3732, %v3947
        %3949 = vst [vmem:[%s3876 + $0x78] sm:$0xf] %v3948
        %3950 = vst.msk [vmem:[%s3876 + $0x7c] sm:$0xf] %vm235, %v3741
        %v3951 = vld [vmem:[%s3876 + $0x80] sm:$0x1]
        %v3952 = vsel %vm687, %v3742, %v3951
        %3953 = vst [vmem:[%s3876 + $0x80] sm:$0x1] %v3952
        %v3954 = vld [vmem:[%s3876 + $0x84] sm:$0xf]
        %v3955 = vsel %vm681, %v3749, %v3954
        %3956 = vst [vmem:[%s3876 + $0x84] sm:$0xf] %v3955
        %3957 = vst.msk [vmem:[%s3876 + $0x88] sm:$0xf] %vm235, %v3758
        %v3958 = vld [vmem:[%s3876 + $0x8c] sm:$0x1]
        %v3959 = vsel %vm687, %v3759, %v3958
        %3960 = vst [vmem:[%s3876 + $0x8c] sm:$0x1] %v3959
        %v3961 = vld [vmem:[%s3876 + $0x90] sm:$0xf]
        %v3962 = vsel %vm681, %v3766, %v3961
        %3963 = vst [vmem:[%s3876 + $0x90] sm:$0xf] %v3962
        %3964 = vst.msk [vmem:[%s3876 + $0x94] sm:$0xf] %vm235, %v3775
        %v3965 = vld [vmem:[%s3876 + $0x98] sm:$0x1]
        %v3966 = vsel %vm687, %v3776, %v3965
        %3967 = vst [vmem:[%s3876 + $0x98] sm:$0x1] %v3966
        %v3968 = vld [vmem:[%s3876 + $0x9c] sm:$0xf]
        %v3969 = vsel %vm681, %v3783, %v3968
        %3970 = vst [vmem:[%s3876 + $0x9c] sm:$0xf] %v3969
        %3971 = vst.msk [vmem:[%s3876 + $0xa0] sm:$0xf] %vm235, %v3792
        %v3972 = vld [vmem:[%s3876 + $0xa4] sm:$0x1]
        %v3973 = vsel %vm687, %v3793, %v3972
        %3974 = vst [vmem:[%s3876 + $0xa4] sm:$0x1] %v3973
        %v3975 = vld [vmem:[%s3876 + $0xa8] sm:$0xf]
        %v3976 = vsel %vm681, %v3800, %v3975
        %3977 = vst [vmem:[%s3876 + $0xa8] sm:$0xf] %v3976
        %3978 = vst.msk [vmem:[%s3876 + $0xac] sm:$0xf] %vm235, %v3809
        %v3979 = vld [vmem:[%s3876 + $0xb0] sm:$0x1]
        %v3980 = vsel %vm687, %v3810, %v3979
        %3981 = vst [vmem:[%s3876 + $0xb0] sm:$0x1] %v3980
        %v3982 = vld [vmem:[%s3876 + $0xb4] sm:$0xf]
        %v3983 = vsel %vm681, %v3817, %v3982
        %3984 = vst [vmem:[%s3876 + $0xb4] sm:$0xf] %v3983
        %3985 = vst.msk [vmem:[%s3876 + $0xb8] sm:$0xf] %vm235, %v3826
        %v3986 = vld [vmem:[%s3876 + $0xbc] sm:$0x1]
        %v3987 = vsel %vm687, %v3827, %v3986
        %3988 = vst [vmem:[%s3876 + $0xbc] sm:$0x1] %v3987
        %v3989 = vld [vmem:[#allocation3] sm:$0xf]
        %v3990 = vld [vmem:[#allocation3 + $0x4] sm:$0xf]
        %v3991 = vld [vmem:[#allocation3 + $0xc] sm:$0xf]
        %v3992 = vld [vmem:[#allocation3 + $0x10] sm:$0xf]
        %v3993 = vld [vmem:[#allocation3 + $0x18] sm:$0xf]
        %v3994 = vld [vmem:[#allocation3 + $0x1c] sm:$0xf]
        %v3995 = vld [vmem:[#allocation3 + $0x24] sm:$0xf]
        %v3996 = vld [vmem:[#allocation3 + $0x28] sm:$0xf]
        %v3997 = vld [vmem:[#allocation3 + $0x30] sm:$0xf]
        %v3998 = vld [vmem:[#allocation3 + $0x34] sm:$0xf]
        %v3999 = vld [vmem:[#allocation3 + $0x3c] sm:$0xf]
        %v4000 = vld [vmem:[#allocation3 + $0x40] sm:$0xf]
        %v4001 = vld [vmem:[#allocation3 + $0x48] sm:$0xf]
        %v4002 = vld [vmem:[#allocation3 + $0x4c] sm:$0xf]
        %v4003 = vld [vmem:[#allocation3 + $0x54] sm:$0xf]
        %v4004 = vld [vmem:[#allocation3 + $0x58] sm:$0xf]
        %v4005 = vld [vmem:[#allocation3 + $0x60] sm:$0xf]
        %v4006 = vld [vmem:[#allocation3 + $0x64] sm:$0xf]
        %v4007 = vld [vmem:[#allocation3 + $0x6c] sm:$0xf]
        %v4008 = vld [vmem:[#allocation3 + $0x70] sm:$0xf]
        %v4009 = vld [vmem:[#allocation3 + $0x78] sm:$0xf]
        %v4010 = vld [vmem:[#allocation3 + $0x7c] sm:$0xf]
        %v4011 = vld [vmem:[#allocation3 + $0x84] sm:$0xf]
        %v4012 = vld [vmem:[#allocation3 + $0x88] sm:$0xf]
        %v4013 = vld [vmem:[#allocation3 + $0x90] sm:$0xf]
        %v4014 = vld [vmem:[#allocation3 + $0x94] sm:$0xf]
        %v4015 = vld [vmem:[#allocation3 + $0x9c] sm:$0xf]
        %v4016 = vld [vmem:[#allocation3 + $0xa0] sm:$0xf]
        %v4017 = vld [vmem:[#allocation3 + $0xa8] sm:$0xf]
        %v4018 = vld [vmem:[#allocation3 + $0xac] sm:$0xf]
        %v4019 = vld [vmem:[#allocation3 + $0xb4] sm:$0xf]
        %v4020 = vld [vmem:[#allocation3 + $0xb8] sm:$0xf]
        %v4021 = vunpack.c.l.bf16 %v3989
        %v4022 = vunpack.c.l.bf16 %v3990
        %v4023 = vunpack.c.l.bf16 %v3991
        %v4024 = vunpack.c.l.bf16 %v3992
        %v4025 = vunpack.c.l.bf16 %v3993
        %v4026 = vunpack.c.l.bf16 %v3994
        %v4027 = vunpack.c.l.bf16 %v3995
        %v4028 = vunpack.c.l.bf16 %v3996
        %v4029 = vunpack.c.l.bf16 %v3997
        %v4030 = vunpack.c.l.bf16 %v3998
        %v4031 = vunpack.c.l.bf16 %v3999
        %v4032 = vunpack.c.l.bf16 %v4000
        %v4033 = vunpack.c.l.bf16 %v4001
        %v4034 = vunpack.c.l.bf16 %v4002
        %v4035 = vunpack.c.l.bf16 %v4003
        %v4036 = vunpack.c.l.bf16 %v4004
        %v4037 = vunpack.c.l.bf16 %v4005
        %v4038 = vunpack.c.l.bf16 %v4006
        %v4039 = vunpack.c.l.bf16 %v4007
        %v4040 = vunpack.c.l.bf16 %v4008
        %v4041 = vunpack.c.l.bf16 %v4009
        %v4042 = vunpack.c.l.bf16 %v4010
        %v4043 = vunpack.c.l.bf16 %v4011
        %v4044 = vunpack.c.l.bf16 %v4012
        %v4045 = vunpack.c.l.bf16 %v4013
        %v4046 = vunpack.c.l.bf16 %v4014
        %v4047 = vunpack.c.l.bf16 %v4015
        %v4048 = vunpack.c.l.bf16 %v4016
        %v4049 = vunpack.c.l.bf16 %v4017
        %v4050 = vunpack.c.l.bf16 %v4018
        %v4051 = vunpack.c.l.bf16 %v4019
        %v4052 = vunpack.c.l.bf16 %v4020
        %v4053 = vld [vmem:[%s2] sm:$0x1]
        %v4054 = vperm.slane %v4053, 0
        %v4055 = vmul.f32 %v4021, %v4054
        %v4056 = vmul.f32 %v4022, %v4054
        %v4057 = vmul.f32 %v4023, %v4054
        %v4058 = vmul.f32 %v4024, %v4054
        %v4059 = vmul.f32 %v4025, %v4054
        %v4060 = vmul.f32 %v4026, %v4054
        %v4061 = vmul.f32 %v4027, %v4054
        %v4062 = vmul.f32 %v4028, %v4054
        %v4063 = vmul.f32 %v4029, %v4054
        %v4064 = vmul.f32 %v4030, %v4054
        %v4065 = vmul.f32 %v4031, %v4054
        %v4066 = vmul.f32 %v4032, %v4054
        %v4067 = vmul.f32 %v4033, %v4054
        %v4068 = vmul.f32 %v4034, %v4054
        %v4069 = vmul.f32 %v4035, %v4054
        %v4070 = vmul.f32 %v4036, %v4054
        %v4071 = vmul.f32 %v4037, %v4054
        %v4072 = vmul.f32 %v4038, %v4054
        %v4073 = vmul.f32 %v4039, %v4054
        %v4074 = vmul.f32 %v4040, %v4054
        %v4075 = vmul.f32 %v4041, %v4054
        %v4076 = vmul.f32 %v4042, %v4054
        %v4077 = vmul.f32 %v4043, %v4054
        %v4078 = vmul.f32 %v4044, %v4054
        %v4079 = vmul.f32 %v4045, %v4054
        %v4080 = vmul.f32 %v4046, %v4054
        %v4081 = vmul.f32 %v4047, %v4054
        %v4082 = vmul.f32 %v4048, %v4054
        %v4083 = vmul.f32 %v4049, %v4054
        %v4084 = vmul.f32 %v4050, %v4054
        %v4085 = vmul.f32 %v4051, %v4054
        %v4086 = vmul.f32 %v4052, %v4054
        %v4087 = vadd.f32 %v4055, 0.0
        %v4088 = vadd.f32 %v4056, 0.0
        %v4089 = vadd.f32 %v4057, 0.0
        %v4090 = vadd.f32 %v4058, 0.0
        %v4091 = vadd.f32 %v4059, 0.0
        %v4092 = vadd.f32 %v4060, 0.0
        %v4093 = vadd.f32 %v4061, 0.0
        %v4094 = vadd.f32 %v4062, 0.0
        %v4095 = vadd.f32 %v4063, 0.0
        %v4096 = vadd.f32 %v4064, 0.0
        %v4097 = vadd.f32 %v4065, 0.0
        %v4098 = vadd.f32 %v4066, 0.0
        %v4099 = vadd.f32 %v4067, 0.0
        %v4100 = vadd.f32 %v4068, 0.0
        %v4101 = vadd.f32 %v4069, 0.0
        %v4102 = vadd.f32 %v4070, 0.0
        %v4103 = vadd.f32 %v4071, 0.0
        %v4104 = vadd.f32 %v4072, 0.0
        %v4105 = vadd.f32 %v4073, 0.0
        %v4106 = vadd.f32 %v4074, 0.0
        %v4107 = vadd.f32 %v4075, 0.0
        %v4108 = vadd.f32 %v4076, 0.0
        %v4109 = vadd.f32 %v4077, 0.0
        %v4110 = vadd.f32 %v4078, 0.0
        %v4111 = vadd.f32 %v4079, 0.0
        %v4112 = vadd.f32 %v4080, 0.0
        %v4113 = vadd.f32 %v4081, 0.0
        %v4114 = vadd.f32 %v4082, 0.0
        %v4115 = vadd.f32 %v4083, 0.0
        %v4116 = vadd.f32 %v4084, 0.0
        %v4117 = vadd.f32 %v4085, 0.0
        %v4118 = vadd.f32 %v4086, 0.0
        %v4119 = vld [vmem:[#allocation3 + $0x8] sm:$0x1]
        %v4120 = vld [vmem:[#allocation3 + $0x14] sm:$0x1]
        %v4121 = vld [vmem:[#allocation3 + $0x20] sm:$0x1]
        %v4122 = vld [vmem:[#allocation3 + $0x2c] sm:$0x1]
        %v4123 = vld [vmem:[#allocation3 + $0x38] sm:$0x1]
        %v4124 = vld [vmem:[#allocation3 + $0x44] sm:$0x1]
        %v4125 = vld [vmem:[#allocation3 + $0x50] sm:$0x1]
        %v4126 = vld [vmem:[#allocation3 + $0x5c] sm:$0x1]
        %v4127 = vld [vmem:[#allocation3 + $0x68] sm:$0x1]
        %v4128 = vld [vmem:[#allocation3 + $0x74] sm:$0x1]
        %v4129 = vld [vmem:[#allocation3 + $0x80] sm:$0x1]
        %v4130 = vld [vmem:[#allocation3 + $0x8c] sm:$0x1]
        %v4131 = vld [vmem:[#allocation3 + $0x98] sm:$0x1]
        %v4132 = vld [vmem:[#allocation3 + $0xa4] sm:$0x1]
        %v4133 = vld [vmem:[#allocation3 + $0xb0] sm:$0x1]
        %v4134 = vld [vmem:[#allocation3 + $0xbc] sm:$0x1]
        %v4135 = vunpack.c.l.bf16 %v4119
        %v4136 = vunpack.c.l.bf16 %v4120
        %v4137 = vunpack.c.l.bf16 %v4121
        %v4138 = vunpack.c.l.bf16 %v4122
        %v4139 = vunpack.c.l.bf16 %v4123
        %v4140 = vunpack.c.l.bf16 %v4124
        %v4141 = vunpack.c.l.bf16 %v4125
        %v4142 = vunpack.c.l.bf16 %v4126
        %v4143 = vunpack.c.l.bf16 %v4127
        %v4144 = vunpack.c.l.bf16 %v4128
        %v4145 = vunpack.c.l.bf16 %v4129
        %v4146 = vunpack.c.l.bf16 %v4130
        %v4147 = vunpack.c.l.bf16 %v4131
        %v4148 = vunpack.c.l.bf16 %v4132
        %v4149 = vunpack.c.l.bf16 %v4133
        %v4150 = vunpack.c.l.bf16 %v4134
        %v4151 = vld [vmem:[%s2 + $0x1] sm:$0x1]
        %v4152 = vperm.slane %v4151, 0
        %v4153 = vmul.f32 %v4021, %v4152
        %v4154 = vmul.f32 %v4022, %v4152
        %v4155 = vmul.f32 %v4135, %v4152
        %v4156 = vmul.f32 %v4023, %v4152
        %v4157 = vmul.f32 %v4024, %v4152
        %v4158 = vmul.f32 %v4136, %v4152
        %v4159 = vmul.f32 %v4025, %v4152
        %v4160 = vmul.f32 %v4026, %v4152
        %v4161 = vmul.f32 %v4137, %v4152
        %v4162 = vmul.f32 %v4027, %v4152
        %v4163 = vmul.f32 %v4028, %v4152
        %v4164 = vmul.f32 %v4138, %v4152
        %v4165 = vmul.f32 %v4029, %v4152
        %v4166 = vmul.f32 %v4030, %v4152
        %v4167 = vmul.f32 %v4139, %v4152
        %v4168 = vmul.f32 %v4031, %v4152
        %v4169 = vmul.f32 %v4032, %v4152
        %v4170 = vmul.f32 %v4140, %v4152
        %v4171 = vmul.f32 %v4033, %v4152
        %v4172 = vmul.f32 %v4034, %v4152
        %v4173 = vmul.f32 %v4141, %v4152
        %v4174 = vmul.f32 %v4035, %v4152
        %v4175 = vmul.f32 %v4036, %v4152
        %v4176 = vmul.f32 %v4142, %v4152
        %v4177 = vmul.f32 %v4037, %v4152
        %v4178 = vmul.f32 %v4038, %v4152
        %v4179 = vmul.f32 %v4143, %v4152
        %v4180 = vmul.f32 %v4039, %v4152
        %v4181 = vmul.f32 %v4040, %v4152
        %v4182 = vmul.f32 %v4144, %v4152
        %v4183 = vmul.f32 %v4041, %v4152
        %v4184 = vmul.f32 %v4042, %v4152
        %v4185 = vmul.f32 %v4145, %v4152
        %v4186 = vmul.f32 %v4043, %v4152
        %v4187 = vmul.f32 %v4044, %v4152
        %v4188 = vmul.f32 %v4146, %v4152
        %v4189 = vmul.f32 %v4045, %v4152
        %v4190 = vmul.f32 %v4046, %v4152
        %v4191 = vmul.f32 %v4147, %v4152
        %v4192 = vmul.f32 %v4047, %v4152
        %v4193 = vmul.f32 %v4048, %v4152
        %v4194 = vmul.f32 %v4148, %v4152
        %v4195 = vmul.f32 %v4049, %v4152
        %v4196 = vmul.f32 %v4050, %v4152
        %v4197 = vmul.f32 %v4149, %v4152
        %v4198 = vmul.f32 %v4051, %v4152
        %v4199 = vmul.f32 %v4052, %v4152
        %v4200 = vmul.f32 %v4150, %v4152
        %vm4249 = vcmask 1046528
        %v4250 = vrot.slane %v4153, 1
        %v4251 = vrot.slane %v4154, 1
        %v4252 = vsel %vm4249, %v4250, %v4251
        %v4253 = vrot.slane %v4155, 1
        %v4254 = vsel %vm4249, %v4251, %v4253
        %v4255 = vrot.slane %v4156, 1
        %v4256 = vrot.slane %v4157, 1
        %v4257 = vsel %vm4249, %v4255, %v4256
        %v4258 = vrot.slane %v4158, 1
        %v4259 = vsel %vm4249, %v4256, %v4258
        %v4260 = vrot.slane %v4159, 1
        %v4261 = vrot.slane %v4160, 1
        %v4262 = vsel %vm4249, %v4260, %v4261
        %v4263 = vrot.slane %v4161, 1
        %v4264 = vsel %vm4249, %v4261, %v4263
        %v4265 = vrot.slane %v4162, 1
        %v4266 = vrot.slane %v4163, 1
        %v4267 = vsel %vm4249, %v4265, %v4266
        %v4268 = vrot.slane %v4164, 1
        %v4269 = vsel %vm4249, %v4266, %v4268
        %v4270 = vrot.slane %v4165, 1
        %v4271 = vrot.slane %v4166, 1
        %v4272 = vsel %vm4249, %v4270, %v4271
        %v4273 = vrot.slane %v4167, 1
        %v4274 = vsel %vm4249, %v4271, %v4273
        %v4275 = vrot.slane %v4168, 1
        %v4276 = vrot.slane %v4169, 1
        %v4277 = vsel %vm4249, %v4275, %v4276
        %v4278 = vrot.slane %v4170, 1
        %v4279 = vsel %vm4249, %v4276, %v4278
        %v4280 = vrot.slane %v4171, 1
        %v4281 = vrot.slane %v4172, 1
        %v4282 = vsel %vm4249, %v4280, %v4281
        %v4283 = vrot.slane %v4173, 1
        %v4284 = vsel %vm4249, %v4281, %v4283
        %v4285 = vrot.slane %v4174, 1
        %v4286 = vrot.slane %v4175, 1
        %v4287 = vsel %vm4249, %v4285, %v4286
        %v4288 = vrot.slane %v4176, 1
        %v4289 = vsel %vm4249, %v4286, %v4288
        %v4290 = vrot.slane %v4177, 1
        %v4291 = vrot.slane %v4178, 1
        %v4292 = vsel %vm4249, %v4290, %v4291
        %v4293 = vrot.slane %v4179, 1
        %v4294 = vsel %vm4249, %v4291, %v4293
        %v4295 = vrot.slane %v4180, 1
        %v4296 = vrot.slane %v4181, 1
        %v4297 = vsel %vm4249, %v4295, %v4296
        %v4298 = vrot.slane %v4182, 1
        %v4299 = vsel %vm4249, %v4296, %v4298
        %v4300 = vrot.slane %v4183, 1
        %v4301 = vrot.slane %v4184, 1
        %v4302 = vsel %vm4249, %v4300, %v4301
        %v4303 = vrot.slane %v4185, 1
        %v4304 = vsel %vm4249, %v4301, %v4303
        %v4305 = vrot.slane %v4186, 1
        %v4306 = vrot.slane %v4187, 1
        %v4307 = vsel %vm4249, %v4305, %v4306
        %v4308 = vrot.slane %v4188, 1
        %v4309 = vsel %vm4249, %v4306, %v4308
        %v4310 = vrot.slane %v4189, 1
        %v4311 = vrot.slane %v4190, 1
        %v4312 = vsel %vm4249, %v4310, %v4311
        %v4313 = vrot.slane %v4191, 1
        %v4314 = vsel %vm4249, %v4311, %v4313
        %v4315 = vrot.slane %v4192, 1
        %v4316 = vrot.slane %v4193, 1
        %v4317 = vsel %vm4249, %v4315, %v4316
        %v4318 = vrot.slane %v4194, 1
        %v4319 = vsel %vm4249, %v4316, %v4318
        %v4320 = vrot.slane %v4195, 1
        %v4321 = vrot.slane %v4196, 1
        %v4322 = vsel %vm4249, %v4320, %v4321
        %v4323 = vrot.slane %v4197, 1
        %v4324 = vsel %vm4249, %v4321, %v4323
        %v4325 = vrot.slane %v4198, 1
        %v4326 = vrot.slane %v4199, 1
        %v4327 = vsel %vm4249, %v4325, %v4326
        %v4328 = vrot.slane %v4200, 1
        %v4329 = vsel %vm4249, %v4326, %v4328
        %v4362 = vadd.f32 %v4087, %v4252
        %v4363 = vadd.f32 %v4088, %v4254
        %v4364 = vadd.f32 %v4089, %v4257
        %v4365 = vadd.f32 %v4090, %v4259
        %v4366 = vadd.f32 %v4091, %v4262
        %v4367 = vadd.f32 %v4092, %v4264
        %v4368 = vadd.f32 %v4093, %v4267
        %v4369 = vadd.f32 %v4094, %v4269
        %v4370 = vadd.f32 %v4095, %v4272
        %v4371 = vadd.f32 %v4096, %v4274
        %v4372 = vadd.f32 %v4097, %v4277
        %v4373 = vadd.f32 %v4098, %v4279
        %v4374 = vadd.f32 %v4099, %v4282
        %v4375 = vadd.f32 %v4100, %v4284
        %v4376 = vadd.f32 %v4101, %v4287
        %v4377 = vadd.f32 %v4102, %v4289
        %v4378 = vadd.f32 %v4103, %v4292
        %v4379 = vadd.f32 %v4104, %v4294
        %v4380 = vadd.f32 %v4105, %v4297
        %v4381 = vadd.f32 %v4106, %v4299
        %v4382 = vadd.f32 %v4107, %v4302
        %v4383 = vadd.f32 %v4108, %v4304
        %v4384 = vadd.f32 %v4109, %v4307
        %v4385 = vadd.f32 %v4110, %v4309
        %v4386 = vadd.f32 %v4111, %v4312
        %v4387 = vadd.f32 %v4112, %v4314
        %v4388 = vadd.f32 %v4113, %v4317
        %v4389 = vadd.f32 %v4114, %v4319
        %v4390 = vadd.f32 %v4115, %v4322
        %v4391 = vadd.f32 %v4116, %v4324
        %v4392 = vadd.f32 %v4117, %v4327
        %v4393 = vadd.f32 %v4118, %v4329
        %v4394 = vld [vmem:[#allocation3] sm:$0xe]
        %v4395 = vld [vmem:[#allocation3 + $0xc] sm:$0xe]
        %v4396 = vld [vmem:[#allocation3 + $0x18] sm:$0xe]
        %v4397 = vld [vmem:[#allocation3 + $0x24] sm:$0xe]
        %v4398 = vld [vmem:[#allocation3 + $0x30] sm:$0xe]
        %v4399 = vld [vmem:[#allocation3 + $0x3c] sm:$0xe]
        %v4400 = vld [vmem:[#allocation3 + $0x48] sm:$0xe]
        %v4401 = vld [vmem:[#allocation3 + $0x54] sm:$0xe]
        %v4402 = vld [vmem:[#allocation3 + $0x60] sm:$0xe]
        %v4403 = vld [vmem:[#allocation3 + $0x6c] sm:$0xe]
        %v4404 = vld [vmem:[#allocation3 + $0x78] sm:$0xe]
        %v4405 = vld [vmem:[#allocation3 + $0x84] sm:$0xe]
        %v4406 = vld [vmem:[#allocation3 + $0x90] sm:$0xe]
        %v4407 = vld [vmem:[#allocation3 + $0x9c] sm:$0xe]
        %v4408 = vld [vmem:[#allocation3 + $0xa8] sm:$0xe]
        %v4409 = vld [vmem:[#allocation3 + $0xb4] sm:$0xe]
        %v4410 = vunpack.c.l.bf16 %v4394
        %v4411 = vunpack.c.l.bf16 %v4395
        %v4412 = vunpack.c.l.bf16 %v4396
        %v4413 = vunpack.c.l.bf16 %v4397
        %v4414 = vunpack.c.l.bf16 %v4398
        %v4415 = vunpack.c.l.bf16 %v4399
        %v4416 = vunpack.c.l.bf16 %v4400
        %v4417 = vunpack.c.l.bf16 %v4401
        %v4418 = vunpack.c.l.bf16 %v4402
        %v4419 = vunpack.c.l.bf16 %v4403
        %v4420 = vunpack.c.l.bf16 %v4404
        %v4421 = vunpack.c.l.bf16 %v4405
        %v4422 = vunpack.c.l.bf16 %v4406
        %v4423 = vunpack.c.l.bf16 %v4407
        %v4424 = vunpack.c.l.bf16 %v4408
        %v4425 = vunpack.c.l.bf16 %v4409
        %v4426 = vld [vmem:[%s2 + $0x2] sm:$0x1]
        %v4427 = vperm.slane %v4426, 0
        %v4428 = vmul.f32 %v4410, %v4427
        %v4429 = vmul.f32 %v4022, %v4427
        %v4430 = vmul.f32 %v4135, %v4427
        %v4431 = vmul.f32 %v4411, %v4427
        %v4432 = vmul.f32 %v4024, %v4427
        %v4433 = vmul.f32 %v4136, %v4427
        %v4434 = vmul.f32 %v4412, %v4427
        %v4435 = vmul.f32 %v4026, %v4427
        %v4436 = vmul.f32 %v4137, %v4427
        %v4437 = vmul.f32 %v4413, %v4427
        %v4438 = vmul.f32 %v4028, %v4427
        %v4439 = vmul.f32 %v4138, %v4427
        %v4440 = vmul.f32 %v4414, %v4427
        %v4441 = vmul.f32 %v4030, %v4427
        %v4442 = vmul.f32 %v4139, %v4427
        %v4443 = vmul.f32 %v4415, %v4427
        %v4444 = vmul.f32 %v4032, %v4427
        %v4445 = vmul.f32 %v4140, %v4427
        %v4446 = vmul.f32 %v4416, %v4427
        %v4447 = vmul.f32 %v4034, %v4427
        %v4448 = vmul.f32 %v4141, %v4427
        %v4449 = vmul.f32 %v4417, %v4427
        %v4450 = vmul.f32 %v4036, %v4427
        %v4451 = vmul.f32 %v4142, %v4427
        %v4452 = vmul.f32 %v4418, %v4427
        %v4453 = vmul.f32 %v4038, %v4427
        %v4454 = vmul.f32 %v4143, %v4427
        %v4455 = vmul.f32 %v4419, %v4427
        %v4456 = vmul.f32 %v4040, %v4427
        %v4457 = vmul.f32 %v4144, %v4427
        %v4458 = vmul.f32 %v4420, %v4427
        %v4459 = vmul.f32 %v4042, %v4427
        %v4460 = vmul.f32 %v4145, %v4427
        %v4461 = vmul.f32 %v4421, %v4427
        %v4462 = vmul.f32 %v4044, %v4427
        %v4463 = vmul.f32 %v4146, %v4427
        %v4464 = vmul.f32 %v4422, %v4427
        %v4465 = vmul.f32 %v4046, %v4427
        %v4466 = vmul.f32 %v4147, %v4427
        %v4467 = vmul.f32 %v4423, %v4427
        %v4468 = vmul.f32 %v4048, %v4427
        %v4469 = vmul.f32 %v4148, %v4427
        %v4470 = vmul.f32 %v4424, %v4427
        %v4471 = vmul.f32 %v4050, %v4427
        %v4472 = vmul.f32 %v4149, %v4427
        %v4473 = vmul.f32 %v4425, %v4427
        %v4474 = vmul.f32 %v4052, %v4427
        %v4475 = vmul.f32 %v4150, %v4427
        %vm4524 = vcmask 1045504
        %v4525 = vrot.slane %v4428, 2
        %v4526 = vrot.slane %v4429, 2
        %v4527 = vsel %vm4524, %v4525, %v4526
        %v4528 = vrot.slane %v4430, 2
        %v4529 = vsel %vm4524, %v4526, %v4528
        %v4530 = vrot.slane %v4431, 2
        %v4531 = vrot.slane %v4432, 2
        %v4532 = vsel %vm4524, %v4530, %v4531
        %v4533 = vrot.slane %v4433, 2
        %v4534 = vsel %vm4524, %v4531, %v4533
        %v4535 = vrot.slane %v4434, 2
        %v4536 = vrot.slane %v4435, 2
        %v4537 = vsel %vm4524, %v4535, %v4536
        %v4538 = vrot.slane %v4436, 2
        %v4539 = vsel %vm4524, %v4536, %v4538
        %v4540 = vrot.slane %v4437, 2
        %v4541 = vrot.slane %v4438, 2
        %v4542 = vsel %vm4524, %v4540, %v4541
        %v4543 = vrot.slane %v4439, 2
        %v4544 = vsel %vm4524, %v4541, %v4543
        %v4545 = vrot.slane %v4440, 2
        %v4546 = vrot.slane %v4441, 2
        %v4547 = vsel %vm4524, %v4545, %v4546
        %v4548 = vrot.slane %v4442, 2
        %v4549 = vsel %vm4524, %v4546, %v4548
        %v4550 = vrot.slane %v4443, 2
        %v4551 = vrot.slane %v4444, 2
        %v4552 = vsel %vm4524, %v4550, %v4551
        %v4553 = vrot.slane %v4445, 2
        %v4554 = vsel %vm4524, %v4551, %v4553
        %v4555 = vrot.slane %v4446, 2
        %v4556 = vrot.slane %v4447, 2
        %v4557 = vsel %vm4524, %v4555, %v4556
        %v4558 = vrot.slane %v4448, 2
        %v4559 = vsel %vm4524, %v4556, %v4558
        %v4560 = vrot.slane %v4449, 2
        %v4561 = vrot.slane %v4450, 2
        %v4562 = vsel %vm4524, %v4560, %v4561
        %v4563 = vrot.slane %v4451, 2
        %v4564 = vsel %vm4524, %v4561, %v4563
        %v4565 = vrot.slane %v4452, 2
        %v4566 = vrot.slane %v4453, 2
        %v4567 = vsel %vm4524, %v4565, %v4566
        %v4568 = vrot.slane %v4454, 2
        %v4569 = vsel %vm4524, %v4566, %v4568
        %v4570 = vrot.slane %v4455, 2
        %v4571 = vrot.slane %v4456, 2
        %v4572 = vsel %vm4524, %v4570, %v4571
        %v4573 = vrot.slane %v4457, 2
        %v4574 = vsel %vm4524, %v4571, %v4573
        %v4575 = vrot.slane %v4458, 2
        %v4576 = vrot.slane %v4459, 2
        %v4577 = vsel %vm4524, %v4575, %v4576
        %v4578 = vrot.slane %v4460, 2
        %v4579 = vsel %vm4524, %v4576, %v4578
        %v4580 = vrot.slane %v4461, 2
        %v4581 = vrot.slane %v4462, 2
        %v4582 = vsel %vm4524, %v4580, %v4581
        %v4583 = vrot.slane %v4463, 2
        %v4584 = vsel %vm4524, %v4581, %v4583
        %v4585 = vrot.slane %v4464, 2
        %v4586 = vrot.slane %v4465, 2
        %v4587 = vsel %vm4524, %v4585, %v4586
        %v4588 = vrot.slane %v4466, 2
        %v4589 = vsel %vm4524, %v4586, %v4588
        %v4590 = vrot.slane %v4467, 2
        %v4591 = vrot.slane %v4468, 2
        %v4592 = vsel %vm4524, %v4590, %v4591
        %v4593 = vrot.slane %v4469, 2
        %v4594 = vsel %vm4524, %v4591, %v4593
        %v4595 = vrot.slane %v4470, 2
        %v4596 = vrot.slane %v4471, 2
        %v4597 = vsel %vm4524, %v4595, %v4596
        %v4598 = vrot.slane %v4472, 2
        %v4599 = vsel %vm4524, %v4596, %v4598
        %v4600 = vrot.slane %v4473, 2
        %v4601 = vrot.slane %v4474, 2
        %v4602 = vsel %vm4524, %v4600, %v4601
        %v4603 = vrot.slane %v4475, 2
        %v4604 = vsel %vm4524, %v4601, %v4603
        %v4637 = vadd.f32 %v4362, %v4527
        %v4638 = vadd.f32 %v4363, %v4529
        %v4639 = vadd.f32 %v4364, %v4532
        %v4640 = vadd.f32 %v4365, %v4534
        %v4641 = vadd.f32 %v4366, %v4537
        %v4642 = vadd.f32 %v4367, %v4539
        %v4643 = vadd.f32 %v4368, %v4542
        %v4644 = vadd.f32 %v4369, %v4544
        %v4645 = vadd.f32 %v4370, %v4547
        %v4646 = vadd.f32 %v4371, %v4549
        %v4647 = vadd.f32 %v4372, %v4552
        %v4648 = vadd.f32 %v4373, %v4554
        %v4649 = vadd.f32 %v4374, %v4557
        %v4650 = vadd.f32 %v4375, %v4559
        %v4651 = vadd.f32 %v4376, %v4562
        %v4652 = vadd.f32 %v4377, %v4564
        %v4653 = vadd.f32 %v4378, %v4567
        %v4654 = vadd.f32 %v4379, %v4569
        %v4655 = vadd.f32 %v4380, %v4572
        %v4656 = vadd.f32 %v4381, %v4574
        %v4657 = vadd.f32 %v4382, %v4577
        %v4658 = vadd.f32 %v4383, %v4579
        %v4659 = vadd.f32 %v4384, %v4582
        %v4660 = vadd.f32 %v4385, %v4584
        %v4661 = vadd.f32 %v4386, %v4587
        %v4662 = vadd.f32 %v4387, %v4589
        %v4663 = vadd.f32 %v4388, %v4592
        %v4664 = vadd.f32 %v4389, %v4594
        %v4665 = vadd.f32 %v4390, %v4597
        %v4666 = vadd.f32 %v4391, %v4599
        %v4667 = vadd.f32 %v4392, %v4602
        %v4668 = vadd.f32 %v4393, %v4604
        %v4669 = vld [vmem:[%s3876] sm:$0xf]
        %v4670 = vld [vmem:[%s3876 + $0x4] sm:$0xf]
        %v4671 = vld [vmem:[%s3876 + $0xc] sm:$0xf]
        %v4672 = vld [vmem:[%s3876 + $0x10] sm:$0xf]
        %v4673 = vld [vmem:[%s3876 + $0x18] sm:$0xf]
        %v4674 = vld [vmem:[%s3876 + $0x1c] sm:$0xf]
        %v4675 = vld [vmem:[%s3876 + $0x24] sm:$0xf]
        %v4676 = vld [vmem:[%s3876 + $0x28] sm:$0xf]
        %v4677 = vld [vmem:[%s3876 + $0x30] sm:$0xf]
        %v4678 = vld [vmem:[%s3876 + $0x34] sm:$0xf]
        %v4679 = vld [vmem:[%s3876 + $0x3c] sm:$0xf]
        %v4680 = vld [vmem:[%s3876 + $0x40] sm:$0xf]
        %v4681 = vld [vmem:[%s3876 + $0x48] sm:$0xf]
        %v4682 = vld [vmem:[%s3876 + $0x4c] sm:$0xf]
        %v4683 = vld [vmem:[%s3876 + $0x54] sm:$0xf]
        %v4684 = vld [vmem:[%s3876 + $0x58] sm:$0xf]
        %v4685 = vld [vmem:[%s3876 + $0x60] sm:$0xf]
        %v4686 = vld [vmem:[%s3876 + $0x64] sm:$0xf]
        %v4687 = vld [vmem:[%s3876 + $0x6c] sm:$0xf]
        %v4688 = vld [vmem:[%s3876 + $0x70] sm:$0xf]
        %v4689 = vld [vmem:[%s3876 + $0x78] sm:$0xf]
        %v4690 = vld [vmem:[%s3876 + $0x7c] sm:$0xf]
        %v4691 = vld [vmem:[%s3876 + $0x84] sm:$0xf]
        %v4692 = vld [vmem:[%s3876 + $0x88] sm:$0xf]
        %v4693 = vld [vmem:[%s3876 + $0x90] sm:$0xf]
        %v4694 = vld [vmem:[%s3876 + $0x94] sm:$0xf]
        %v4695 = vld [vmem:[%s3876 + $0x9c] sm:$0xf]
        %v4696 = vld [vmem:[%s3876 + $0xa0] sm:$0xf]
        %v4697 = vld [vmem:[%s3876 + $0xa8] sm:$0xf]
        %v4698 = vld [vmem:[%s3876 + $0xac] sm:$0xf]
        %v4699 = vld [vmem:[%s3876 + $0xb4] sm:$0xf]
        %v4700 = vld [vmem:[%s3876 + $0xb8] sm:$0xf]
        %v4701 = vunpack.c.l.bf16 %v4669
        %v4702 = vunpack.c.l.bf16 %v4670
        %v4703 = vunpack.c.l.bf16 %v4671
        %v4704 = vunpack.c.l.bf16 %v4672
        %v4705 = vunpack.c.l.bf16 %v4673
        %v4706 = vunpack.c.l.bf16 %v4674
        %v4707 = vunpack.c.l.bf16 %v4675
        %v4708 = vunpack.c.l.bf16 %v4676
        %v4709 = vunpack.c.l.bf16 %v4677
        %v4710 = vunpack.c.l.bf16 %v4678
        %v4711 = vunpack.c.l.bf16 %v4679
        %v4712 = vunpack.c.l.bf16 %v4680
        %v4713 = vunpack.c.l.bf16 %v4681
        %v4714 = vunpack.c.l.bf16 %v4682
        %v4715 = vunpack.c.l.bf16 %v4683
        %v4716 = vunpack.c.l.bf16 %v4684
        %v4717 = vunpack.c.l.bf16 %v4685
        %v4718 = vunpack.c.l.bf16 %v4686
        %v4719 = vunpack.c.l.bf16 %v4687
        %v4720 = vunpack.c.l.bf16 %v4688
        %v4721 = vunpack.c.l.bf16 %v4689
        %v4722 = vunpack.c.l.bf16 %v4690
        %v4723 = vunpack.c.l.bf16 %v4691
        %v4724 = vunpack.c.l.bf16 %v4692
        %v4725 = vunpack.c.l.bf16 %v4693
        %v4726 = vunpack.c.l.bf16 %v4694
        %v4727 = vunpack.c.l.bf16 %v4695
        %v4728 = vunpack.c.l.bf16 %v4696
        %v4729 = vunpack.c.l.bf16 %v4697
        %v4730 = vunpack.c.l.bf16 %v4698
        %v4731 = vunpack.c.l.bf16 %v4699
        %v4732 = vunpack.c.l.bf16 %v4700
        %v4733 = vld [vmem:[%s2 + $0x3] sm:$0x1]
        %v4734 = vperm.slane %v4733, 0
        %v4735 = vmul.f32 %v4701, %v4734
        %v4736 = vmul.f32 %v4702, %v4734
        %v4737 = vmul.f32 %v4703, %v4734
        %v4738 = vmul.f32 %v4704, %v4734
        %v4739 = vmul.f32 %v4705, %v4734
        %v4740 = vmul.f32 %v4706, %v4734
        %v4741 = vmul.f32 %v4707, %v4734
        %v4742 = vmul.f32 %v4708, %v4734
        %v4743 = vmul.f32 %v4709, %v4734
        %v4744 = vmul.f32 %v4710, %v4734
        %v4745 = vmul.f32 %v4711, %v4734
        %v4746 = vmul.f32 %v4712, %v4734
        %v4747 = vmul.f32 %v4713, %v4734
        %v4748 = vmul.f32 %v4714, %v4734
        %v4749 = vmul.f32 %v4715, %v4734
        %v4750 = vmul.f32 %v4716, %v4734
        %v4751 = vmul.f32 %v4717, %v4734
        %v4752 = vmul.f32 %v4718, %v4734
        %v4753 = vmul.f32 %v4719, %v4734
        %v4754 = vmul.f32 %v4720, %v4734
        %v4755 = vmul.f32 %v4721, %v4734
        %v4756 = vmul.f32 %v4722, %v4734
        %v4757 = vmul.f32 %v4723, %v4734
        %v4758 = vmul.f32 %v4724, %v4734
        %v4759 = vmul.f32 %v4725, %v4734
        %v4760 = vmul.f32 %v4726, %v4734
        %v4761 = vmul.f32 %v4727, %v4734
        %v4762 = vmul.f32 %v4728, %v4734
        %v4763 = vmul.f32 %v4729, %v4734
        %v4764 = vmul.f32 %v4730, %v4734
        %v4765 = vmul.f32 %v4731, %v4734
        %v4766 = vmul.f32 %v4732, %v4734
        %v4767 = vadd.f32 %v4637, %v4735
        %v4768 = vadd.f32 %v4638, %v4736
        %v4769 = vadd.f32 %v4639, %v4737
        %v4770 = vadd.f32 %v4640, %v4738
        %v4771 = vadd.f32 %v4641, %v4739
        %v4772 = vadd.f32 %v4642, %v4740
        %v4773 = vadd.f32 %v4643, %v4741
        %v4774 = vadd.f32 %v4644, %v4742
        %v4775 = vadd.f32 %v4645, %v4743
        %v4776 = vadd.f32 %v4646, %v4744
        %v4777 = vadd.f32 %v4647, %v4745
        %v4778 = vadd.f32 %v4648, %v4746
        %v4779 = vadd.f32 %v4649, %v4747
        %v4780 = vadd.f32 %v4650, %v4748
        %v4781 = vadd.f32 %v4651, %v4749
        %v4782 = vadd.f32 %v4652, %v4750
        %v4783 = vadd.f32 %v4653, %v4751
        %v4784 = vadd.f32 %v4654, %v4752
        %v4785 = vadd.f32 %v4655, %v4753
        %v4786 = vadd.f32 %v4656, %v4754
        %v4787 = vadd.f32 %v4657, %v4755
        %v4788 = vadd.f32 %v4658, %v4756
        %v4789 = vadd.f32 %v4659, %v4757
        %v4790 = vadd.f32 %v4660, %v4758
        %v4791 = vadd.f32 %v4661, %v4759
        %v4792 = vadd.f32 %v4662, %v4760
        %v4793 = vadd.f32 %v4663, %v4761
        %v4794 = vadd.f32 %v4664, %v4762
        %v4795 = vadd.f32 %v4665, %v4763
        %v4796 = vadd.f32 %v4666, %v4764
        %v4797 = vadd.f32 %v4667, %v4765
        %v4798 = vadd.f32 %v4668, %v4766
        %v4799 = vld [vmem:[%s3876 + $0x8] sm:$0x1]
        %v4800 = vld [vmem:[%s3876 + $0x14] sm:$0x1]
        %v4801 = vld [vmem:[%s3876 + $0x20] sm:$0x1]
        %v4802 = vld [vmem:[%s3876 + $0x2c] sm:$0x1]
        %v4803 = vld [vmem:[%s3876 + $0x38] sm:$0x1]
        %v4804 = vld [vmem:[%s3876 + $0x44] sm:$0x1]
        %v4805 = vld [vmem:[%s3876 + $0x50] sm:$0x1]
        %v4806 = vld [vmem:[%s3876 + $0x5c] sm:$0x1]
        %v4807 = vld [vmem:[%s3876 + $0x68] sm:$0x1]
        %v4808 = vld [vmem:[%s3876 + $0x74] sm:$0x1]
        %v4809 = vld [vmem:[%s3876 + $0x80] sm:$0x1]
        %v4810 = vld [vmem:[%s3876 + $0x8c] sm:$0x1]
        %v4811 = vld [vmem:[%s3876 + $0x98] sm:$0x1]
        %v4812 = vld [vmem:[%s3876 + $0xa4] sm:$0x1]
        %v4813 = vld [vmem:[%s3876 + $0xb0] sm:$0x1]
        %v4814 = vld [vmem:[%s3876 + $0xbc] sm:$0x1]
        %v4815 = vunpack.c.l.bf16 %v4799
        %v4816 = vunpack.c.l.bf16 %v4800
        %v4817 = vunpack.c.l.bf16 %v4801
        %v4818 = vunpack.c.l.bf16 %v4802
        %v4819 = vunpack.c.l.bf16 %v4803
        %v4820 = vunpack.c.l.bf16 %v4804
        %v4821 = vunpack.c.l.bf16 %v4805
        %v4822 = vunpack.c.l.bf16 %v4806
        %v4823 = vunpack.c.l.bf16 %v4807
        %v4824 = vunpack.c.l.bf16 %v4808
        %v4825 = vunpack.c.l.bf16 %v4809
        %v4826 = vunpack.c.l.bf16 %v4810
        %v4827 = vunpack.c.l.bf16 %v4811
        %v4828 = vunpack.c.l.bf16 %v4812
        %v4829 = vunpack.c.l.bf16 %v4813
        %v4830 = vunpack.c.l.bf16 %v4814
        %v4831 = vld [vmem:[%s2 + $0x4] sm:$0x1]
        %v4832 = vperm.slane %v4831, 0
        %v4833 = vmul.f32 %v4701, %v4832
        %v4834 = vmul.f32 %v4702, %v4832
        %v4835 = vmul.f32 %v4815, %v4832
        %v4836 = vmul.f32 %v4703, %v4832
        %v4837 = vmul.f32 %v4704, %v4832
        %v4838 = vmul.f32 %v4816, %v4832
        %v4839 = vmul.f32 %v4705, %v4832
        %v4840 = vmul.f32 %v4706, %v4832
        %v4841 = vmul.f32 %v4817, %v4832
        %v4842 = vmul.f32 %v4707, %v4832
        %v4843 = vmul.f32 %v4708, %v4832
        %v4844 = vmul.f32 %v4818, %v4832
        %v4845 = vmul.f32 %v4709, %v4832
        %v4846 = vmul.f32 %v4710, %v4832
        %v4847 = vmul.f32 %v4819, %v4832
        %v4848 = vmul.f32 %v4711, %v4832
        %v4849 = vmul.f32 %v4712, %v4832
        %v4850 = vmul.f32 %v4820, %v4832
        %v4851 = vmul.f32 %v4713, %v4832
        %v4852 = vmul.f32 %v4714, %v4832
        %v4853 = vmul.f32 %v4821, %v4832
        %v4854 = vmul.f32 %v4715, %v4832
        %v4855 = vmul.f32 %v4716, %v4832
        %v4856 = vmul.f32 %v4822, %v4832
        %v4857 = vmul.f32 %v4717, %v4832
        %v4858 = vmul.f32 %v4718, %v4832
        %v4859 = vmul.f32 %v4823, %v4832
        %v4860 = vmul.f32 %v4719, %v4832
        %v4861 = vmul.f32 %v4720, %v4832
        %v4862 = vmul.f32 %v4824, %v4832
        %v4863 = vmul.f32 %v4721, %v4832
        %v4864 = vmul.f32 %v4722, %v4832
        %v4865 = vmul.f32 %v4825, %v4832
        %v4866 = vmul.f32 %v4723, %v4832
        %v4867 = vmul.f32 %v4724, %v4832
        %v4868 = vmul.f32 %v4826, %v4832
        %v4869 = vmul.f32 %v4725, %v4832
        %v4870 = vmul.f32 %v4726, %v4832
        %v4871 = vmul.f32 %v4827, %v4832
        %v4872 = vmul.f32 %v4727, %v4832
        %v4873 = vmul.f32 %v4728, %v4832
        %v4874 = vmul.f32 %v4828, %v4832
        %v4875 = vmul.f32 %v4729, %v4832
        %v4876 = vmul.f32 %v4730, %v4832
        %v4877 = vmul.f32 %v4829, %v4832
        %v4878 = vmul.f32 %v4731, %v4832
        %v4879 = vmul.f32 %v4732, %v4832
        %v4880 = vmul.f32 %v4830, %v4832
        %v4929 = vrot.slane %v4833, 1
        %v4930 = vrot.slane %v4834, 1
        %v4931 = vsel %vm4249, %v4929, %v4930
        %v4932 = vrot.slane %v4835, 1
        %v4933 = vsel %vm4249, %v4930, %v4932
        %v4934 = vrot.slane %v4836, 1
        %v4935 = vrot.slane %v4837, 1
        %v4936 = vsel %vm4249, %v4934, %v4935
        %v4937 = vrot.slane %v4838, 1
        %v4938 = vsel %vm4249, %v4935, %v4937
        %v4939 = vrot.slane %v4839, 1
        %v4940 = vrot.slane %v4840, 1
        %v4941 = vsel %vm4249, %v4939, %v4940
        %v4942 = vrot.slane %v4841, 1
        %v4943 = vsel %vm4249, %v4940, %v4942
        %v4944 = vrot.slane %v4842, 1
        %v4945 = vrot.slane %v4843, 1
        %v4946 = vsel %vm4249, %v4944, %v4945
        %v4947 = vrot.slane %v4844, 1
        %v4948 = vsel %vm4249, %v4945, %v4947
        %v4949 = vrot.slane %v4845, 1
        %v4950 = vrot.slane %v4846, 1
        %v4951 = vsel %vm4249, %v4949, %v4950
        %v4952 = vrot.slane %v4847, 1
        %v4953 = vsel %vm4249, %v4950, %v4952
        %v4954 = vrot.slane %v4848, 1
        %v4955 = vrot.slane %v4849, 1
        %v4956 = vsel %vm4249, %v4954, %v4955
        %v4957 = vrot.slane %v4850, 1
        %v4958 = vsel %vm4249, %v4955, %v4957
        %v4959 = vrot.slane %v4851, 1
        %v4960 = vrot.slane %v4852, 1
        %v4961 = vsel %vm4249, %v4959, %v4960
        %v4962 = vrot.slane %v4853, 1
        %v4963 = vsel %vm4249, %v4960, %v4962
        %v4964 = vrot.slane %v4854, 1
        %v4965 = vrot.slane %v4855, 1
        %v4966 = vsel %vm4249, %v4964, %v4965
        %v4967 = vrot.slane %v4856, 1
        %v4968 = vsel %vm4249, %v4965, %v4967
        %v4969 = vrot.slane %v4857, 1
        %v4970 = vrot.slane %v4858, 1
        %v4971 = vsel %vm4249, %v4969, %v4970
        %v4972 = vrot.slane %v4859, 1
        %v4973 = vsel %vm4249, %v4970, %v4972
        %v4974 = vrot.slane %v4860, 1
        %v4975 = vrot.slane %v4861, 1
        %v4976 = vsel %vm4249, %v4974, %v4975
        %v4977 = vrot.slane %v4862, 1
        %v4978 = vsel %vm4249, %v4975, %v4977
        %v4979 = vrot.slane %v4863, 1
        %v4980 = vrot.slane %v4864, 1
        %v4981 = vsel %vm4249, %v4979, %v4980
        %v4982 = vrot.slane %v4865, 1
        %v4983 = vsel %vm4249, %v4980, %v4982
        %v4984 = vrot.slane %v4866, 1
        %v4985 = vrot.slane %v4867, 1
        %v4986 = vsel %vm4249, %v4984, %v4985
        %v4987 = vrot.slane %v4868, 1
        %v4988 = vsel %vm4249, %v4985, %v4987
        %v4989 = vrot.slane %v4869, 1
        %v4990 = vrot.slane %v4870, 1
        %v4991 = vsel %vm4249, %v4989, %v4990
        %v4992 = vrot.slane %v4871, 1
        %v4993 = vsel %vm4249, %v4990, %v4992
        %v4994 = vrot.slane %v4872, 1
        %v4995 = vrot.slane %v4873, 1
        %v4996 = vsel %vm4249, %v4994, %v4995
        %v4997 = vrot.slane %v4874, 1
        %v4998 = vsel %vm4249, %v4995, %v4997
        %v4999 = vrot.slane %v4875, 1
        %v5000 = vrot.slane %v4876, 1
        %v5001 = vsel %vm4249, %v4999, %v5000
        %v5002 = vrot.slane %v4877, 1
        %v5003 = vsel %vm4249, %v5000, %v5002
        %v5004 = vrot.slane %v4878, 1
        %v5005 = vrot.slane %v4879, 1
        %v5006 = vsel %vm4249, %v5004, %v5005
        %v5007 = vrot.slane %v4880, 1
        %v5008 = vsel %vm4249, %v5005, %v5007
        %v5041 = vadd.f32 %v4767, %v4931
        %v5042 = vadd.f32 %v4768, %v4933
        %v5043 = vadd.f32 %v4769, %v4936
        %v5044 = vadd.f32 %v4770, %v4938
        %v5045 = vadd.f32 %v4771, %v4941
        %v5046 = vadd.f32 %v4772, %v4943
        %v5047 = vadd.f32 %v4773, %v4946
        %v5048 = vadd.f32 %v4774, %v4948
        %v5049 = vadd.f32 %v4775, %v4951
        %v5050 = vadd.f32 %v4776, %v4953
        %v5051 = vadd.f32 %v4777, %v4956
        %v5052 = vadd.f32 %v4778, %v4958
        %v5053 = vadd.f32 %v4779, %v4961
        %v5054 = vadd.f32 %v4780, %v4963
        %v5055 = vadd.f32 %v4781, %v4966
        %v5056 = vadd.f32 %v4782, %v4968
        %v5057 = vadd.f32 %v4783, %v4971
        %v5058 = vadd.f32 %v4784, %v4973
        %v5059 = vadd.f32 %v4785, %v4976
        %v5060 = vadd.f32 %v4786, %v4978
        %v5061 = vadd.f32 %v4787, %v4981
        %v5062 = vadd.f32 %v4788, %v4983
        %v5063 = vadd.f32 %v4789, %v4986
        %v5064 = vadd.f32 %v4790, %v4988
        %v5065 = vadd.f32 %v4791, %v4991
        %v5066 = vadd.f32 %v4792, %v4993
        %v5067 = vadd.f32 %v4793, %v4996
        %v5068 = vadd.f32 %v4794, %v4998
        %v5069 = vadd.f32 %v4795, %v5001
        %v5070 = vadd.f32 %v4796, %v5003
        %v5071 = vadd.f32 %v4797, %v5006
        %v5072 = vadd.f32 %v4798, %v5008
        %v5073 = vld [vmem:[%s3876] sm:$0xe]
        %v5074 = vld [vmem:[%s3876 + $0xc] sm:$0xe]
        %v5075 = vld [vmem:[%s3876 + $0x18] sm:$0xe]
        %v5076 = vld [vmem:[%s3876 + $0x24] sm:$0xe]
        %v5077 = vld [vmem:[%s3876 + $0x30] sm:$0xe]
        %v5078 = vld [vmem:[%s3876 + $0x3c] sm:$0xe]
        %v5079 = vld [vmem:[%s3876 + $0x48] sm:$0xe]
        %v5080 = vld [vmem:[%s3876 + $0x54] sm:$0xe]
        %v5081 = vld [vmem:[%s3876 + $0x60] sm:$0xe]
        %v5082 = vld [vmem:[%s3876 + $0x6c] sm:$0xe]
        %v5083 = vld [vmem:[%s3876 + $0x78] sm:$0xe]
        %v5084 = vld [vmem:[%s3876 + $0x84] sm:$0xe]
        %v5085 = vld [vmem:[%s3876 + $0x90] sm:$0xe]
        %v5086 = vld [vmem:[%s3876 + $0x9c] sm:$0xe]
        %v5087 = vld [vmem:[%s3876 + $0xa8] sm:$0xe]
        %v5088 = vld [vmem:[%s3876 + $0xb4] sm:$0xe]
        %v5089 = vunpack.c.l.bf16 %v5073
        %v5090 = vunpack.c.l.bf16 %v5074
        %v5091 = vunpack.c.l.bf16 %v5075
        %v5092 = vunpack.c.l.bf16 %v5076
        %v5093 = vunpack.c.l.bf16 %v5077
        %v5094 = vunpack.c.l.bf16 %v5078
        %v5095 = vunpack.c.l.bf16 %v5079
        %v5096 = vunpack.c.l.bf16 %v5080
        %v5097 = vunpack.c.l.bf16 %v5081
        %v5098 = vunpack.c.l.bf16 %v5082
        %v5099 = vunpack.c.l.bf16 %v5083
        %v5100 = vunpack.c.l.bf16 %v5084
        %v5101 = vunpack.c.l.bf16 %v5085
        %v5102 = vunpack.c.l.bf16 %v5086
        %v5103 = vunpack.c.l.bf16 %v5087
        %v5104 = vunpack.c.l.bf16 %v5088
        %v5105 = vld [vmem:[%s2 + $0x5] sm:$0x1]
        %v5106 = vperm.slane %v5105, 0
        %v5107 = vmul.f32 %v5089, %v5106
        %v5108 = vmul.f32 %v4702, %v5106
        %v5109 = vmul.f32 %v4815, %v5106
        %v5110 = vmul.f32 %v5090, %v5106
        %v5111 = vmul.f32 %v4704, %v5106
        %v5112 = vmul.f32 %v4816, %v5106
        %v5113 = vmul.f32 %v5091, %v5106
        %v5114 = vmul.f32 %v4706, %v5106
        %v5115 = vmul.f32 %v4817, %v5106
        %v5116 = vmul.f32 %v5092, %v5106
        %v5117 = vmul.f32 %v4708, %v5106
        %v5118 = vmul.f32 %v4818, %v5106
        %v5119 = vmul.f32 %v5093, %v5106
        %v5120 = vmul.f32 %v4710, %v5106
        %v5121 = vmul.f32 %v4819, %v5106
        %v5122 = vmul.f32 %v5094, %v5106
        %v5123 = vmul.f32 %v4712, %v5106
        %v5124 = vmul.f32 %v4820, %v5106
        %v5125 = vmul.f32 %v5095, %v5106
        %v5126 = vmul.f32 %v4714, %v5106
        %v5127 = vmul.f32 %v4821, %v5106
        %v5128 = vmul.f32 %v5096, %v5106
        %v5129 = vmul.f32 %v4716, %v5106
        %v5130 = vmul.f32 %v4822, %v5106
        %v5131 = vmul.f32 %v5097, %v5106
        %v5132 = vmul.f32 %v4718, %v5106
        %v5133 = vmul.f32 %v4823, %v5106
        %v5134 = vmul.f32 %v5098, %v5106
        %v5135 = vmul.f32 %v4720, %v5106
        %v5136 = vmul.f32 %v4824, %v5106
        %v5137 = vmul.f32 %v5099, %v5106
        %v5138 = vmul.f32 %v4722, %v5106
        %v5139 = vmul.f32 %v4825, %v5106
        %v5140 = vmul.f32 %v5100, %v5106
        %v5141 = vmul.f32 %v4724, %v5106
        %v5142 = vmul.f32 %v4826, %v5106
        %v5143 = vmul.f32 %v5101, %v5106
        %v5144 = vmul.f32 %v4726, %v5106
        %v5145 = vmul.f32 %v4827, %v5106
        %v5146 = vmul.f32 %v5102, %v5106
        %v5147 = vmul.f32 %v4728, %v5106
        %v5148 = vmul.f32 %v4828, %v5106
        %v5149 = vmul.f32 %v5103, %v5106
        %v5150 = vmul.f32 %v4730, %v5106
        %v5151 = vmul.f32 %v4829, %v5106
        %v5152 = vmul.f32 %v5104, %v5106
        %v5153 = vmul.f32 %v4732, %v5106
        %v5154 = vmul.f32 %v4830, %v5106
        %v5203 = vrot.slane %v5107, 2
        %v5204 = vrot.slane %v5108, 2
        %v5205 = vsel %vm4524, %v5203, %v5204
        %v5206 = vrot.slane %v5109, 2
        %v5207 = vsel %vm4524, %v5204, %v5206
        %v5208 = vrot.slane %v5110, 2
        %v5209 = vrot.slane %v5111, 2
        %v5210 = vsel %vm4524, %v5208, %v5209
        %v5211 = vrot.slane %v5112, 2
        %v5212 = vsel %vm4524, %v5209, %v5211
        %v5213 = vrot.slane %v5113, 2
        %v5214 = vrot.slane %v5114, 2
        %v5215 = vsel %vm4524, %v5213, %v5214
        %v5216 = vrot.slane %v5115, 2
        %v5217 = vsel %vm4524, %v5214, %v5216
        %v5218 = vrot.slane %v5116, 2
        %v5219 = vrot.slane %v5117, 2
        %v5220 = vsel %vm4524, %v5218, %v5219
        %v5221 = vrot.slane %v5118, 2
        %v5222 = vsel %vm4524, %v5219, %v5221
        %v5223 = vrot.slane %v5119, 2
        %v5224 = vrot.slane %v5120, 2
        %v5225 = vsel %vm4524, %v5223, %v5224
        %v5226 = vrot.slane %v5121, 2
        %v5227 = vsel %vm4524, %v5224, %v5226
        %v5228 = vrot.slane %v5122, 2
        %v5229 = vrot.slane %v5123, 2
        %v5230 = vsel %vm4524, %v5228, %v5229
        %v5231 = vrot.slane %v5124, 2
        %v5232 = vsel %vm4524, %v5229, %v5231
        %v5233 = vrot.slane %v5125, 2
        %v5234 = vrot.slane %v5126, 2
        %v5235 = vsel %vm4524, %v5233, %v5234
        %v5236 = vrot.slane %v5127, 2
        %v5237 = vsel %vm4524, %v5234, %v5236
        %v5238 = vrot.slane %v5128, 2
        %v5239 = vrot.slane %v5129, 2
        %v5240 = vsel %vm4524, %v5238, %v5239
        %v5241 = vrot.slane %v5130, 2
        %v5242 = vsel %vm4524, %v5239, %v5241
        %v5243 = vrot.slane %v5131, 2
        %v5244 = vrot.slane %v5132, 2
        %v5245 = vsel %vm4524, %v5243, %v5244
        %v5246 = vrot.slane %v5133, 2
        %v5247 = vsel %vm4524, %v5244, %v5246
        %v5248 = vrot.slane %v5134, 2
        %v5249 = vrot.slane %v5135, 2
        %v5250 = vsel %vm4524, %v5248, %v5249
        %v5251 = vrot.slane %v5136, 2
        %v5252 = vsel %vm4524, %v5249, %v5251
        %v5253 = vrot.slane %v5137, 2
        %v5254 = vrot.slane %v5138, 2
        %v5255 = vsel %vm4524, %v5253, %v5254
        %v5256 = vrot.slane %v5139, 2
        %v5257 = vsel %vm4524, %v5254, %v5256
        %v5258 = vrot.slane %v5140, 2
        %v5259 = vrot.slane %v5141, 2
        %v5260 = vsel %vm4524, %v5258, %v5259
        %v5261 = vrot.slane %v5142, 2
        %v5262 = vsel %vm4524, %v5259, %v5261
        %v5263 = vrot.slane %v5143, 2
        %v5264 = vrot.slane %v5144, 2
        %v5265 = vsel %vm4524, %v5263, %v5264
        %v5266 = vrot.slane %v5145, 2
        %v5267 = vsel %vm4524, %v5264, %v5266
        %v5268 = vrot.slane %v5146, 2
        %v5269 = vrot.slane %v5147, 2
        %v5270 = vsel %vm4524, %v5268, %v5269
        %v5271 = vrot.slane %v5148, 2
        %v5272 = vsel %vm4524, %v5269, %v5271
        %v5273 = vrot.slane %v5149, 2
        %v5274 = vrot.slane %v5150, 2
        %v5275 = vsel %vm4524, %v5273, %v5274
        %v5276 = vrot.slane %v5151, 2
        %v5277 = vsel %vm4524, %v5274, %v5276
        %v5278 = vrot.slane %v5152, 2
        %v5279 = vrot.slane %v5153, 2
        %v5280 = vsel %vm4524, %v5278, %v5279
        %v5281 = vrot.slane %v5154, 2
        %v5282 = vsel %vm4524, %v5279, %v5281
        %v5315 = vadd.f32 %v5041, %v5205
        %v5316 = vadd.f32 %v5042, %v5207
        %v5317 = vadd.f32 %v5043, %v5210
        %v5318 = vadd.f32 %v5044, %v5212
        %v5319 = vadd.f32 %v5045, %v5215
        %v5320 = vadd.f32 %v5046, %v5217
        %v5321 = vadd.f32 %v5047, %v5220
        %v5322 = vadd.f32 %v5048, %v5222
        %v5323 = vadd.f32 %v5049, %v5225
        %v5324 = vadd.f32 %v5050, %v5227
        %v5325 = vadd.f32 %v5051, %v5230
        %v5326 = vadd.f32 %v5052, %v5232
        %v5327 = vadd.f32 %v5053, %v5235
        %v5328 = vadd.f32 %v5054, %v5237
        %v5329 = vadd.f32 %v5055, %v5240
        %v5330 = vadd.f32 %v5056, %v5242
        %v5331 = vadd.f32 %v5057, %v5245
        %v5332 = vadd.f32 %v5058, %v5247
        %v5333 = vadd.f32 %v5059, %v5250
        %v5334 = vadd.f32 %v5060, %v5252
        %v5335 = vadd.f32 %v5061, %v5255
        %v5336 = vadd.f32 %v5062, %v5257
        %v5337 = vadd.f32 %v5063, %v5260
        %v5338 = vadd.f32 %v5064, %v5262
        %v5339 = vadd.f32 %v5065, %v5265
        %v5340 = vadd.f32 %v5066, %v5267
        %v5341 = vadd.f32 %v5067, %v5270
        %v5342 = vadd.f32 %v5068, %v5272
        %v5343 = vadd.f32 %v5069, %v5275
        %v5344 = vadd.f32 %v5070, %v5277
        %v5345 = vadd.f32 %v5071, %v5280
        %v5346 = vadd.f32 %v5072, %v5282
        %s5347 = scalar_lea.vmem [#allocation3], 24
        %v5348 = vld [vmem:[%s5347] sm:$0xf]
        %v5349 = vld [vmem:[%s5347 + $0x4] sm:$0xf]
        %v5350 = vld [vmem:[%s5347 + $0xc] sm:$0xf]
        %v5351 = vld [vmem:[%s5347 + $0x10] sm:$0xf]
        %v5352 = vld [vmem:[%s5347 + $0x18] sm:$0xf]
        %v5353 = vld [vmem:[%s5347 + $0x1c] sm:$0xf]
        %v5354 = vld [vmem:[%s5347 + $0x24] sm:$0xf]
        %v5355 = vld [vmem:[%s5347 + $0x28] sm:$0xf]
        %v5356 = vld [vmem:[%s5347 + $0x30] sm:$0xf]
        %v5357 = vld [vmem:[%s5347 + $0x34] sm:$0xf]
        %v5358 = vld [vmem:[%s5347 + $0x3c] sm:$0xf]
        %v5359 = vld [vmem:[%s5347 + $0x40] sm:$0xf]
        %v5360 = vld [vmem:[%s5347 + $0x48] sm:$0xf]
        %v5361 = vld [vmem:[%s5347 + $0x4c] sm:$0xf]
        %v5362 = vld [vmem:[%s5347 + $0x54] sm:$0xf]
        %v5363 = vld [vmem:[%s5347 + $0x58] sm:$0xf]
        %v5364 = vld [vmem:[%s5347 + $0x60] sm:$0xf]
        %v5365 = vld [vmem:[%s5347 + $0x64] sm:$0xf]
        %v5366 = vld [vmem:[%s5347 + $0x6c] sm:$0xf]
        %v5367 = vld [vmem:[%s5347 + $0x70] sm:$0xf]
        %v5368 = vld [vmem:[%s5347 + $0x78] sm:$0xf]
        %v5369 = vld [vmem:[%s5347 + $0x7c] sm:$0xf]
        %v5370 = vld [vmem:[%s5347 + $0x84] sm:$0xf]
        %v5371 = vld [vmem:[%s5347 + $0x88] sm:$0xf]
        %v5372 = vld [vmem:[%s5347 + $0x90] sm:$0xf]
        %v5373 = vld [vmem:[%s5347 + $0x94] sm:$0xf]
        %v5374 = vld [vmem:[%s5347 + $0x9c] sm:$0xf]
        %v5375 = vld [vmem:[%s5347 + $0xa0] sm:$0xf]
        %v5376 = vld [vmem:[%s5347 + $0xa8] sm:$0xf]
        %v5377 = vld [vmem:[%s5347 + $0xac] sm:$0xf]
        %v5378 = vld [vmem:[%s5347 + $0xb4] sm:$0xf]
        %v5379 = vld [vmem:[%s5347 + $0xb8] sm:$0xf]
        %v5380 = vunpack.c.l.bf16 %v5348
        %v5381 = vunpack.c.l.bf16 %v5349
        %v5382 = vunpack.c.l.bf16 %v5350
        %v5383 = vunpack.c.l.bf16 %v5351
        %v5384 = vunpack.c.l.bf16 %v5352
        %v5385 = vunpack.c.l.bf16 %v5353
        %v5386 = vunpack.c.l.bf16 %v5354
        %v5387 = vunpack.c.l.bf16 %v5355
        %v5388 = vunpack.c.l.bf16 %v5356
        %v5389 = vunpack.c.l.bf16 %v5357
        %v5390 = vunpack.c.l.bf16 %v5358
        %v5391 = vunpack.c.l.bf16 %v5359
        %v5392 = vunpack.c.l.bf16 %v5360
        %v5393 = vunpack.c.l.bf16 %v5361
        %v5394 = vunpack.c.l.bf16 %v5362
        %v5395 = vunpack.c.l.bf16 %v5363
        %v5396 = vunpack.c.l.bf16 %v5364
        %v5397 = vunpack.c.l.bf16 %v5365
        %v5398 = vunpack.c.l.bf16 %v5366
        %v5399 = vunpack.c.l.bf16 %v5367
        %v5400 = vunpack.c.l.bf16 %v5368
        %v5401 = vunpack.c.l.bf16 %v5369
        %v5402 = vunpack.c.l.bf16 %v5370
        %v5403 = vunpack.c.l.bf16 %v5371
        %v5404 = vunpack.c.l.bf16 %v5372
        %v5405 = vunpack.c.l.bf16 %v5373
        %v5406 = vunpack.c.l.bf16 %v5374
        %v5407 = vunpack.c.l.bf16 %v5375
        %v5408 = vunpack.c.l.bf16 %v5376
        %v5409 = vunpack.c.l.bf16 %v5377
        %v5410 = vunpack.c.l.bf16 %v5378
        %v5411 = vunpack.c.l.bf16 %v5379
        %v5412 = vld [vmem:[%s2 + $0x6] sm:$0x1]
        %v5413 = vperm.slane %v5412, 0
        %v5414 = vmul.f32 %v5380, %v5413
        %v5415 = vmul.f32 %v5381, %v5413
        %v5416 = vmul.f32 %v5382, %v5413
        %v5417 = vmul.f32 %v5383, %v5413
        %v5418 = vmul.f32 %v5384, %v5413
        %v5419 = vmul.f32 %v5385, %v5413
        %v5420 = vmul.f32 %v5386, %v5413
        %v5421 = vmul.f32 %v5387, %v5413
        %v5422 = vmul.f32 %v5388, %v5413
        %v5423 = vmul.f32 %v5389, %v5413
        %v5424 = vmul.f32 %v5390, %v5413
        %v5425 = vmul.f32 %v5391, %v5413
        %v5426 = vmul.f32 %v5392, %v5413
        %v5427 = vmul.f32 %v5393, %v5413
        %v5428 = vmul.f32 %v5394, %v5413
        %v5429 = vmul.f32 %v5395, %v5413
        %v5430 = vmul.f32 %v5396, %v5413
        %v5431 = vmul.f32 %v5397, %v5413
        %v5432 = vmul.f32 %v5398, %v5413
        %v5433 = vmul.f32 %v5399, %v5413
        %v5434 = vmul.f32 %v5400, %v5413
        %v5435 = vmul.f32 %v5401, %v5413
        %v5436 = vmul.f32 %v5402, %v5413
        %v5437 = vmul.f32 %v5403, %v5413
        %v5438 = vmul.f32 %v5404, %v5413
        %v5439 = vmul.f32 %v5405, %v5413
        %v5440 = vmul.f32 %v5406, %v5413
        %v5441 = vmul.f32 %v5407, %v5413
        %v5442 = vmul.f32 %v5408, %v5413
        %v5443 = vmul.f32 %v5409, %v5413
        %v5444 = vmul.f32 %v5410, %v5413
        %v5445 = vmul.f32 %v5411, %v5413
        %v5446 = vadd.f32 %v5315, %v5414
        %v5447 = vadd.f32 %v5316, %v5415
        %v5448 = vadd.f32 %v5317, %v5416
        %v5449 = vadd.f32 %v5318, %v5417
        %v5450 = vadd.f32 %v5319, %v5418
        %v5451 = vadd.f32 %v5320, %v5419
        %v5452 = vadd.f32 %v5321, %v5420
        %v5453 = vadd.f32 %v5322, %v5421
        %v5454 = vadd.f32 %v5323, %v5422
        %v5455 = vadd.f32 %v5324, %v5423
        %v5456 = vadd.f32 %v5325, %v5424
        %v5457 = vadd.f32 %v5326, %v5425
        %v5458 = vadd.f32 %v5327, %v5426
        %v5459 = vadd.f32 %v5328, %v5427
        %v5460 = vadd.f32 %v5329, %v5428
        %v5461 = vadd.f32 %v5330, %v5429
        %v5462 = vadd.f32 %v5331, %v5430
        %v5463 = vadd.f32 %v5332, %v5431
        %v5464 = vadd.f32 %v5333, %v5432
        %v5465 = vadd.f32 %v5334, %v5433
        %v5466 = vadd.f32 %v5335, %v5434
        %v5467 = vadd.f32 %v5336, %v5435
        %v5468 = vadd.f32 %v5337, %v5436
        %v5469 = vadd.f32 %v5338, %v5437
        %v5470 = vadd.f32 %v5339, %v5438
        %v5471 = vadd.f32 %v5340, %v5439
        %v5472 = vadd.f32 %v5341, %v5440
        %v5473 = vadd.f32 %v5342, %v5441
        %v5474 = vadd.f32 %v5343, %v5442
        %v5475 = vadd.f32 %v5344, %v5443
        %v5476 = vadd.f32 %v5345, %v5444
        %v5477 = vadd.f32 %v5346, %v5445
        %v5478 = vld [vmem:[%s5347 + $0x8] sm:$0x1]
        %v5479 = vld [vmem:[%s5347 + $0x14] sm:$0x1]
        %v5480 = vld [vmem:[%s5347 + $0x20] sm:$0x1]
        %v5481 = vld [vmem:[%s5347 + $0x2c] sm:$0x1]
        %v5482 = vld [vmem:[%s5347 + $0x38] sm:$0x1]
        %v5483 = vld [vmem:[%s5347 + $0x44] sm:$0x1]
        %v5484 = vld [vmem:[%s5347 + $0x50] sm:$0x1]
        %v5485 = vld [vmem:[%s5347 + $0x5c] sm:$0x1]
        %v5486 = vld [vmem:[%s5347 + $0x68] sm:$0x1]
        %v5487 = vld [vmem:[%s5347 + $0x74] sm:$0x1]
        %v5488 = vld [vmem:[%s5347 + $0x80] sm:$0x1]
        %v5489 = vld [vmem:[%s5347 + $0x8c] sm:$0x1]
        %v5490 = vld [vmem:[%s5347 + $0x98] sm:$0x1]
        %v5491 = vld [vmem:[%s5347 + $0xa4] sm:$0x1]
        %v5492 = vld [vmem:[%s5347 + $0xb0] sm:$0x1]
        %v5493 = vld [vmem:[%s5347 + $0xbc] sm:$0x1]
        %v5494 = vunpack.c.l.bf16 %v5478
        %v5495 = vunpack.c.l.bf16 %v5479
        %v5496 = vunpack.c.l.bf16 %v5480
        %v5497 = vunpack.c.l.bf16 %v5481
        %v5498 = vunpack.c.l.bf16 %v5482
        %v5499 = vunpack.c.l.bf16 %v5483
        %v5500 = vunpack.c.l.bf16 %v5484
        %v5501 = vunpack.c.l.bf16 %v5485
        %v5502 = vunpack.c.l.bf16 %v5486
        %v5503 = vunpack.c.l.bf16 %v5487
        %v5504 = vunpack.c.l.bf16 %v5488
        %v5505 = vunpack.c.l.bf16 %v5489
        %v5506 = vunpack.c.l.bf16 %v5490
        %v5507 = vunpack.c.l.bf16 %v5491
        %v5508 = vunpack.c.l.bf16 %v5492
        %v5509 = vunpack.c.l.bf16 %v5493
        %v5510 = vld [vmem:[%s2 + $0x7] sm:$0x1]
        %v5511 = vperm.slane %v5510, 0
        %v5512 = vmul.f32 %v5380, %v5511
        %v5513 = vmul.f32 %v5381, %v5511
        %v5514 = vmul.f32 %v5494, %v5511
        %v5515 = vmul.f32 %v5382, %v5511
        %v5516 = vmul.f32 %v5383, %v5511
        %v5517 = vmul.f32 %v5495, %v5511
        %v5518 = vmul.f32 %v5384, %v5511
        %v5519 = vmul.f32 %v5385, %v5511
        %v5520 = vmul.f32 %v5496, %v5511
        %v5521 = vmul.f32 %v5386, %v5511
        %v5522 = vmul.f32 %v5387, %v5511
        %v5523 = vmul.f32 %v5497, %v5511
        %v5524 = vmul.f32 %v5388, %v5511
        %v5525 = vmul.f32 %v5389, %v5511
        %v5526 = vmul.f32 %v5498, %v5511
        %v5527 = vmul.f32 %v5390, %v5511
        %v5528 = vmul.f32 %v5391, %v5511
        %v5529 = vmul.f32 %v5499, %v5511
        %v5530 = vmul.f32 %v5392, %v5511
        %v5531 = vmul.f32 %v5393, %v5511
        %v5532 = vmul.f32 %v5500, %v5511
        %v5533 = vmul.f32 %v5394, %v5511
        %v5534 = vmul.f32 %v5395, %v5511
        %v5535 = vmul.f32 %v5501, %v5511
        %v5536 = vmul.f32 %v5396, %v5511
        %v5537 = vmul.f32 %v5397, %v5511
        %v5538 = vmul.f32 %v5502, %v5511
        %v5539 = vmul.f32 %v5398, %v5511
        %v5540 = vmul.f32 %v5399, %v5511
        %v5541 = vmul.f32 %v5503, %v5511
        %v5542 = vmul.f32 %v5400, %v5511
        %v5543 = vmul.f32 %v5401, %v5511
        %v5544 = vmul.f32 %v5504, %v5511
        %v5545 = vmul.f32 %v5402, %v5511
        %v5546 = vmul.f32 %v5403, %v5511
        %v5547 = vmul.f32 %v5505, %v5511
        %v5548 = vmul.f32 %v5404, %v5511
        %v5549 = vmul.f32 %v5405, %v5511
        %v5550 = vmul.f32 %v5506, %v5511
        %v5551 = vmul.f32 %v5406, %v5511
        %v5552 = vmul.f32 %v5407, %v5511
        %v5553 = vmul.f32 %v5507, %v5511
        %v5554 = vmul.f32 %v5408, %v5511
        %v5555 = vmul.f32 %v5409, %v5511
        %v5556 = vmul.f32 %v5508, %v5511
        %v5557 = vmul.f32 %v5410, %v5511
        %v5558 = vmul.f32 %v5411, %v5511
        %v5559 = vmul.f32 %v5509, %v5511
        %v5608 = vrot.slane %v5512, 1
        %v5609 = vrot.slane %v5513, 1
        %v5610 = vsel %vm4249, %v5608, %v5609
        %v5611 = vrot.slane %v5514, 1
        %v5612 = vsel %vm4249, %v5609, %v5611
        %v5613 = vrot.slane %v5515, 1
        %v5614 = vrot.slane %v5516, 1
        %v5615 = vsel %vm4249, %v5613, %v5614
        %v5616 = vrot.slane %v5517, 1
        %v5617 = vsel %vm4249, %v5614, %v5616
        %v5618 = vrot.slane %v5518, 1
        %v5619 = vrot.slane %v5519, 1
        %v5620 = vsel %vm4249, %v5618, %v5619
        %v5621 = vrot.slane %v5520, 1
        %v5622 = vsel %vm4249, %v5619, %v5621
        %v5623 = vrot.slane %v5521, 1
        %v5624 = vrot.slane %v5522, 1
        %v5625 = vsel %vm4249, %v5623, %v5624
        %v5626 = vrot.slane %v5523, 1
        %v5627 = vsel %vm4249, %v5624, %v5626
        %v5628 = vrot.slane %v5524, 1
        %v5629 = vrot.slane %v5525, 1
        %v5630 = vsel %vm4249, %v5628, %v5629
        %v5631 = vrot.slane %v5526, 1
        %v5632 = vsel %vm4249, %v5629, %v5631
        %v5633 = vrot.slane %v5527, 1
        %v5634 = vrot.slane %v5528, 1
        %v5635 = vsel %vm4249, %v5633, %v5634
        %v5636 = vrot.slane %v5529, 1
        %v5637 = vsel %vm4249, %v5634, %v5636
        %v5638 = vrot.slane %v5530, 1
        %v5639 = vrot.slane %v5531, 1
        %v5640 = vsel %vm4249, %v5638, %v5639
        %v5641 = vrot.slane %v5532, 1
        %v5642 = vsel %vm4249, %v5639, %v5641
        %v5643 = vrot.slane %v5533, 1
        %v5644 = vrot.slane %v5534, 1
        %v5645 = vsel %vm4249, %v5643, %v5644
        %v5646 = vrot.slane %v5535, 1
        %v5647 = vsel %vm4249, %v5644, %v5646
        %v5648 = vrot.slane %v5536, 1
        %v5649 = vrot.slane %v5537, 1
        %v5650 = vsel %vm4249, %v5648, %v5649
        %v5651 = vrot.slane %v5538, 1
        %v5652 = vsel %vm4249, %v5649, %v5651
        %v5653 = vrot.slane %v5539, 1
        %v5654 = vrot.slane %v5540, 1
        %v5655 = vsel %vm4249, %v5653, %v5654
        %v5656 = vrot.slane %v5541, 1
        %v5657 = vsel %vm4249, %v5654, %v5656
        %v5658 = vrot.slane %v5542, 1
        %v5659 = vrot.slane %v5543, 1
        %v5660 = vsel %vm4249, %v5658, %v5659
        %v5661 = vrot.slane %v5544, 1
        %v5662 = vsel %vm4249, %v5659, %v5661
        %v5663 = vrot.slane %v5545, 1
        %v5664 = vrot.slane %v5546, 1
        %v5665 = vsel %vm4249, %v5663, %v5664
        %v5666 = vrot.slane %v5547, 1
        %v5667 = vsel %vm4249, %v5664, %v5666
        %v5668 = vrot.slane %v5548, 1
        %v5669 = vrot.slane %v5549, 1
        %v5670 = vsel %vm4249, %v5668, %v5669
        %v5671 = vrot.slane %v5550, 1
        %v5672 = vsel %vm4249, %v5669, %v5671
        %v5673 = vrot.slane %v5551, 1
        %v5674 = vrot.slane %v5552, 1
        %v5675 = vsel %vm4249, %v5673, %v5674
        %v5676 = vrot.slane %v5553, 1
        %v5677 = vsel %vm4249, %v5674, %v5676
        %v5678 = vrot.slane %v5554, 1
        %v5679 = vrot.slane %v5555, 1
        %v5680 = vsel %vm4249, %v5678, %v5679
        %v5681 = vrot.slane %v5556, 1
        %v5682 = vsel %vm4249, %v5679, %v5681
        %v5683 = vrot.slane %v5557, 1
        %v5684 = vrot.slane %v5558, 1
        %v5685 = vsel %vm4249, %v5683, %v5684
        %v5686 = vrot.slane %v5559, 1
        %v5687 = vsel %vm4249, %v5684, %v5686
        %v5720 = vadd.f32 %v5446, %v5610
        %v5721 = vadd.f32 %v5447, %v5612
        %v5722 = vadd.f32 %v5448, %v5615
        %v5723 = vadd.f32 %v5449, %v5617
        %v5724 = vadd.f32 %v5450, %v5620
        %v5725 = vadd.f32 %v5451, %v5622
        %v5726 = vadd.f32 %v5452, %v5625
        %v5727 = vadd.f32 %v5453, %v5627
        %v5728 = vadd.f32 %v5454, %v5630
        %v5729 = vadd.f32 %v5455, %v5632
        %v5730 = vadd.f32 %v5456, %v5635
        %v5731 = vadd.f32 %v5457, %v5637
        %v5732 = vadd.f32 %v5458, %v5640
        %v5733 = vadd.f32 %v5459, %v5642
        %v5734 = vadd.f32 %v5460, %v5645
        %v5735 = vadd.f32 %v5461, %v5647
        %v5736 = vadd.f32 %v5462, %v5650
        %v5737 = vadd.f32 %v5463, %v5652
        %v5738 = vadd.f32 %v5464, %v5655
        %v5739 = vadd.f32 %v5465, %v5657
        %v5740 = vadd.f32 %v5466, %v5660
        %v5741 = vadd.f32 %v5467, %v5662
        %v5742 = vadd.f32 %v5468, %v5665
        %v5743 = vadd.f32 %v5469, %v5667
        %v5744 = vadd.f32 %v5470, %v5670
        %v5745 = vadd.f32 %v5471, %v5672
        %v5746 = vadd.f32 %v5472, %v5675
        %v5747 = vadd.f32 %v5473, %v5677
        %v5748 = vadd.f32 %v5474, %v5680
        %v5749 = vadd.f32 %v5475, %v5682
        %v5750 = vadd.f32 %v5476, %v5685
        %v5751 = vadd.f32 %v5477, %v5687
        %v5752 = vld [vmem:[%s5347] sm:$0xe]
        %v5753 = vld [vmem:[%s5347 + $0xc] sm:$0xe]
        %v5754 = vld [vmem:[%s5347 + $0x18] sm:$0xe]
        %v5755 = vld [vmem:[%s5347 + $0x24] sm:$0xe]
        %v5756 = vld [vmem:[%s5347 + $0x30] sm:$0xe]
        %v5757 = vld [vmem:[%s5347 + $0x3c] sm:$0xe]
        %v5758 = vld [vmem:[%s5347 + $0x48] sm:$0xe]
        %v5759 = vld [vmem:[%s5347 + $0x54] sm:$0xe]
        %v5760 = vld [vmem:[%s5347 + $0x60] sm:$0xe]
        %v5761 = vld [vmem:[%s5347 + $0x6c] sm:$0xe]
        %v5762 = vld [vmem:[%s5347 + $0x78] sm:$0xe]
        %v5763 = vld [vmem:[%s5347 + $0x84] sm:$0xe]
        %v5764 = vld [vmem:[%s5347 + $0x90] sm:$0xe]
        %v5765 = vld [vmem:[%s5347 + $0x9c] sm:$0xe]
        %v5766 = vld [vmem:[%s5347 + $0xa8] sm:$0xe]
        %v5767 = vld [vmem:[%s5347 + $0xb4] sm:$0xe]
        %v5768 = vunpack.c.l.bf16 %v5752
        %v5769 = vunpack.c.l.bf16 %v5753
        %v5770 = vunpack.c.l.bf16 %v5754
        %v5771 = vunpack.c.l.bf16 %v5755
        %v5772 = vunpack.c.l.bf16 %v5756
        %v5773 = vunpack.c.l.bf16 %v5757
        %v5774 = vunpack.c.l.bf16 %v5758
        %v5775 = vunpack.c.l.bf16 %v5759
        %v5776 = vunpack.c.l.bf16 %v5760
        %v5777 = vunpack.c.l.bf16 %v5761
        %v5778 = vunpack.c.l.bf16 %v5762
        %v5779 = vunpack.c.l.bf16 %v5763
        %v5780 = vunpack.c.l.bf16 %v5764
        %v5781 = vunpack.c.l.bf16 %v5765
        %v5782 = vunpack.c.l.bf16 %v5766
        %v5783 = vunpack.c.l.bf16 %v5767
        %v5784 = vld [vmem:[%s2 + $0x8] sm:$0x1]
        %v5785 = vperm.slane %v5784, 0
        %v5786 = vmul.f32 %v5768, %v5785
        %v5787 = vmul.f32 %v5381, %v5785
        %v5788 = vmul.f32 %v5494, %v5785
        %v5789 = vmul.f32 %v5769, %v5785
        %v5790 = vmul.f32 %v5383, %v5785
        %v5791 = vmul.f32 %v5495, %v5785
        %v5792 = vmul.f32 %v5770, %v5785
        %v5793 = vmul.f32 %v5385, %v5785
        %v5794 = vmul.f32 %v5496, %v5785
        %v5795 = vmul.f32 %v5771, %v5785
        %v5796 = vmul.f32 %v5387, %v5785
        %v5797 = vmul.f32 %v5497, %v5785
        %v5798 = vmul.f32 %v5772, %v5785
        %v5799 = vmul.f32 %v5389, %v5785
        %v5800 = vmul.f32 %v5498, %v5785
        %v5801 = vmul.f32 %v5773, %v5785
        %v5802 = vmul.f32 %v5391, %v5785
        %v5803 = vmul.f32 %v5499, %v5785
        %v5804 = vmul.f32 %v5774, %v5785
        %v5805 = vmul.f32 %v5393, %v5785
        %v5806 = vmul.f32 %v5500, %v5785
        %v5807 = vmul.f32 %v5775, %v5785
        %v5808 = vmul.f32 %v5395, %v5785
        %v5809 = vmul.f32 %v5501, %v5785
        %v5810 = vmul.f32 %v5776, %v5785
        %v5811 = vmul.f32 %v5397, %v5785
        %v5812 = vmul.f32 %v5502, %v5785
        %v5813 = vmul.f32 %v5777, %v5785
        %v5814 = vmul.f32 %v5399, %v5785
        %v5815 = vmul.f32 %v5503, %v5785
        %v5816 = vmul.f32 %v5778, %v5785
        %v5817 = vmul.f32 %v5401, %v5785
        %v5818 = vmul.f32 %v5504, %v5785
        %v5819 = vmul.f32 %v5779, %v5785
        %v5820 = vmul.f32 %v5403, %v5785
        %v5821 = vmul.f32 %v5505, %v5785
        %v5822 = vmul.f32 %v5780, %v5785
        %v5823 = vmul.f32 %v5405, %v5785
        %v5824 = vmul.f32 %v5506, %v5785
        %v5825 = vmul.f32 %v5781, %v5785
        %v5826 = vmul.f32 %v5407, %v5785
        %v5827 = vmul.f32 %v5507, %v5785
        %v5828 = vmul.f32 %v5782, %v5785
        %v5829 = vmul.f32 %v5409, %v5785
        %v5830 = vmul.f32 %v5508, %v5785
        %v5831 = vmul.f32 %v5783, %v5785
        %v5832 = vmul.f32 %v5411, %v5785
        %v5833 = vmul.f32 %v5509, %v5785
        %v5882 = vrot.slane %v5786, 2
        %v5883 = vrot.slane %v5787, 2
        %v5884 = vsel %vm4524, %v5882, %v5883
        %v5885 = vrot.slane %v5788, 2
        %v5886 = vsel %vm4524, %v5883, %v5885
        %v5887 = vrot.slane %v5789, 2
        %v5888 = vrot.slane %v5790, 2
        %v5889 = vsel %vm4524, %v5887, %v5888
        %v5890 = vrot.slane %v5791, 2
        %v5891 = vsel %vm4524, %v5888, %v5890
        %v5892 = vrot.slane %v5792, 2
        %v5893 = vrot.slane %v5793, 2
        %v5894 = vsel %vm4524, %v5892, %v5893
        %v5895 = vrot.slane %v5794, 2
        %v5896 = vsel %vm4524, %v5893, %v5895
        %v5897 = vrot.slane %v5795, 2
        %v5898 = vrot.slane %v5796, 2
        %v5899 = vsel %vm4524, %v5897, %v5898
        %v5900 = vrot.slane %v5797, 2
        %v5901 = vsel %vm4524, %v5898, %v5900
        %v5902 = vrot.slane %v5798, 2
        %v5903 = vrot.slane %v5799, 2
        %v5904 = vsel %vm4524, %v5902, %v5903
        %v5905 = vrot.slane %v5800, 2
        %v5906 = vsel %vm4524, %v5903, %v5905
        %v5907 = vrot.slane %v5801, 2
        %v5908 = vrot.slane %v5802, 2
        %v5909 = vsel %vm4524, %v5907, %v5908
        %v5910 = vrot.slane %v5803, 2
        %v5911 = vsel %vm4524, %v5908, %v5910
        %v5912 = vrot.slane %v5804, 2
        %v5913 = vrot.slane %v5805, 2
        %v5914 = vsel %vm4524, %v5912, %v5913
        %v5915 = vrot.slane %v5806, 2
        %v5916 = vsel %vm4524, %v5913, %v5915
        %v5917 = vrot.slane %v5807, 2
        %v5918 = vrot.slane %v5808, 2
        %v5919 = vsel %vm4524, %v5917, %v5918
        %v5920 = vrot.slane %v5809, 2
        %v5921 = vsel %vm4524, %v5918, %v5920
        %v5922 = vrot.slane %v5810, 2
        %v5923 = vrot.slane %v5811, 2
        %v5924 = vsel %vm4524, %v5922, %v5923
        %v5925 = vrot.slane %v5812, 2
        %v5926 = vsel %vm4524, %v5923, %v5925
        %v5927 = vrot.slane %v5813, 2
        %v5928 = vrot.slane %v5814, 2
        %v5929 = vsel %vm4524, %v5927, %v5928
        %v5930 = vrot.slane %v5815, 2
        %v5931 = vsel %vm4524, %v5928, %v5930
        %v5932 = vrot.slane %v5816, 2
        %v5933 = vrot.slane %v5817, 2
        %v5934 = vsel %vm4524, %v5932, %v5933
        %v5935 = vrot.slane %v5818, 2
        %v5936 = vsel %vm4524, %v5933, %v5935
        %v5937 = vrot.slane %v5819, 2
        %v5938 = vrot.slane %v5820, 2
        %v5939 = vsel %vm4524, %v5937, %v5938
        %v5940 = vrot.slane %v5821, 2
        %v5941 = vsel %vm4524, %v5938, %v5940
        %v5942 = vrot.slane %v5822, 2
        %v5943 = vrot.slane %v5823, 2
        %v5944 = vsel %vm4524, %v5942, %v5943
        %v5945 = vrot.slane %v5824, 2
        %v5946 = vsel %vm4524, %v5943, %v5945
        %v5947 = vrot.slane %v5825, 2
        %v5948 = vrot.slane %v5826, 2
        %v5949 = vsel %vm4524, %v5947, %v5948
        %v5950 = vrot.slane %v5827, 2
        %v5951 = vsel %vm4524, %v5948, %v5950
        %v5952 = vrot.slane %v5828, 2
        %v5953 = vrot.slane %v5829, 2
        %v5954 = vsel %vm4524, %v5952, %v5953
        %v5955 = vrot.slane %v5830, 2
        %v5956 = vsel %vm4524, %v5953, %v5955
        %v5957 = vrot.slane %v5831, 2
        %v5958 = vrot.slane %v5832, 2
        %v5959 = vsel %vm4524, %v5957, %v5958
        %v5960 = vrot.slane %v5833, 2
        %v5961 = vsel %vm4524, %v5958, %v5960
        %v5994 = vadd.f32 %v5720, %v5884
        %v5995 = vadd.f32 %v5721, %v5886
        %v5996 = vadd.f32 %v5722, %v5889
        %v5997 = vadd.f32 %v5723, %v5891
        %v5998 = vadd.f32 %v5724, %v5894
        %v5999 = vadd.f32 %v5725, %v5896
        %v6000 = vadd.f32 %v5726, %v5899
        %v6001 = vadd.f32 %v5727, %v5901
        %v6002 = vadd.f32 %v5728, %v5904
        %v6003 = vadd.f32 %v5729, %v5906
        %v6004 = vadd.f32 %v5730, %v5909
        %v6005 = vadd.f32 %v5731, %v5911
        %v6006 = vadd.f32 %v5732, %v5914
        %v6007 = vadd.f32 %v5733, %v5916
        %v6008 = vadd.f32 %v5734, %v5919
        %v6009 = vadd.f32 %v5735, %v5921
        %v6010 = vadd.f32 %v5736, %v5924
        %v6011 = vadd.f32 %v5737, %v5926
        %v6012 = vadd.f32 %v5738, %v5929
        %v6013 = vadd.f32 %v5739, %v5931
        %v6014 = vadd.f32 %v5740, %v5934
        %v6015 = vadd.f32 %v5741, %v5936
        %v6016 = vadd.f32 %v5742, %v5939
        %v6017 = vadd.f32 %v5743, %v5941
        %v6018 = vadd.f32 %v5744, %v5944
        %v6019 = vadd.f32 %v5745, %v5946
        %v6020 = vadd.f32 %v5746, %v5949
        %v6021 = vadd.f32 %v5747, %v5951
        %v6022 = vadd.f32 %v5748, %v5954
        %v6023 = vadd.f32 %v5749, %v5956
        %v6024 = vadd.f32 %v5750, %v5959
        %v6025 = vadd.f32 %v5751, %v5961
        %v6026 = vsel %vm2367, %v5994, 0.0
        %6027 = vadd.xlane.f32.xlu0 %v6026
        %v6028 = vpop.xlane.xlu0 %6027
        %v6029 = vsel %vm2367, %v5995, 0.0
        %6030 = vadd.xlane.f32.xlu0 %v6029
        %v6031 = vpop.xlane.xlu0 %6030
        %v6032 = vsel %vm2367, %v5996, 0.0
        %6033 = vadd.xlane.f32.xlu0 %v6032
        %v6034 = vpop.xlane.xlu0 %6033
        %v6035 = vsel %vm2367, %v5997, 0.0
        %6036 = vadd.xlane.f32.xlu0 %v6035
        %v6037 = vpop.xlane.xlu0 %6036
        %v6038 = vsel %vm2367, %v5998, 0.0
        %6039 = vadd.xlane.f32.xlu0 %v6038
        %v6040 = vpop.xlane.xlu0 %6039
        %v6041 = vsel %vm2367, %v5999, 0.0
        %6042 = vadd.xlane.f32.xlu0 %v6041
        %v6043 = vpop.xlane.xlu0 %6042
        %v6044 = vsel %vm2367, %v6000, 0.0
        %6045 = vadd.xlane.f32.xlu0 %v6044
        %v6046 = vpop.xlane.xlu0 %6045
        %v6047 = vsel %vm2367, %v6001, 0.0
        %6048 = vadd.xlane.f32.xlu0 %v6047
        %v6049 = vpop.xlane.xlu0 %6048
        %v6050 = vsel %vm2367, %v6002, 0.0
        %6051 = vadd.xlane.f32.xlu0 %v6050
        %v6052 = vpop.xlane.xlu0 %6051
        %v6053 = vsel %vm2367, %v6003, 0.0
        %6054 = vadd.xlane.f32.xlu0 %v6053
        %v6055 = vpop.xlane.xlu0 %6054
        %v6056 = vsel %vm2367, %v6004, 0.0
        %6057 = vadd.xlane.f32.xlu0 %v6056
        %v6058 = vpop.xlane.xlu0 %6057
        %v6059 = vsel %vm2367, %v6005, 0.0
        %6060 = vadd.xlane.f32.xlu0 %v6059
        %v6061 = vpop.xlane.xlu0 %6060
        %v6062 = vsel %vm2367, %v6006, 0.0
        %6063 = vadd.xlane.f32.xlu0 %v6062
        %v6064 = vpop.xlane.xlu0 %6063
        %v6065 = vsel %vm2367, %v6007, 0.0
        %6066 = vadd.xlane.f32.xlu0 %v6065
        %v6067 = vpop.xlane.xlu0 %6066
        %v6068 = vsel %vm2367, %v6008, 0.0
        %6069 = vadd.xlane.f32.xlu0 %v6068
        %v6070 = vpop.xlane.xlu0 %6069
        %v6071 = vsel %vm2367, %v6009, 0.0
        %6072 = vadd.xlane.f32.xlu0 %v6071
        %v6073 = vpop.xlane.xlu0 %6072
        %v6074 = vsel %vm2367, %v6010, 0.0
        %6075 = vadd.xlane.f32.xlu0 %v6074
        %v6076 = vpop.xlane.xlu0 %6075
        %v6077 = vsel %vm2367, %v6011, 0.0
        %6078 = vadd.xlane.f32.xlu0 %v6077
        %v6079 = vpop.xlane.xlu0 %6078
        %v6080 = vsel %vm2367, %v6012, 0.0
        %6081 = vadd.xlane.f32.xlu0 %v6080
        %v6082 = vpop.xlane.xlu0 %6081
        %v6083 = vsel %vm2367, %v6013, 0.0
        %6084 = vadd.xlane.f32.xlu0 %v6083
        %v6085 = vpop.xlane.xlu0 %6084
        %v6086 = vsel %vm2367, %v6014, 0.0
        %6087 = vadd.xlane.f32.xlu0 %v6086
        %v6088 = vpop.xlane.xlu0 %6087
        %v6089 = vsel %vm2367, %v6015, 0.0
        %6090 = vadd.xlane.f32.xlu0 %v6089
        %v6091 = vpop.xlane.xlu0 %6090
        %v6092 = vsel %vm2367, %v6016, 0.0
        %6093 = vadd.xlane.f32.xlu0 %v6092
        %v6094 = vpop.xlane.xlu0 %6093
        %v6095 = vsel %vm2367, %v6017, 0.0
        %6096 = vadd.xlane.f32.xlu0 %v6095
        %v6097 = vpop.xlane.xlu0 %6096
        %v6098 = vsel %vm2367, %v6018, 0.0
        %6099 = vadd.xlane.f32.xlu0 %v6098
        %v6100 = vpop.xlane.xlu0 %6099
        %v6101 = vsel %vm2367, %v6019, 0.0
        %6102 = vadd.xlane.f32.xlu0 %v6101
        %v6103 = vpop.xlane.xlu0 %6102
        %v6104 = vsel %vm2367, %v6020, 0.0
        %6105 = vadd.xlane.f32.xlu0 %v6104
        %v6106 = vpop.xlane.xlu0 %6105
        %v6107 = vsel %vm2367, %v6021, 0.0
        %6108 = vadd.xlane.f32.xlu0 %v6107
        %v6109 = vpop.xlane.xlu0 %6108
        %v6110 = vsel %vm2367, %v6022, 0.0
        %6111 = vadd.xlane.f32.xlu0 %v6110
        %v6112 = vpop.xlane.xlu0 %6111
        %v6113 = vsel %vm2367, %v6023, 0.0
        %6114 = vadd.xlane.f32.xlu0 %v6113
        %v6115 = vpop.xlane.xlu0 %6114
        %v6116 = vsel %vm2367, %v6024, 0.0
        %6117 = vadd.xlane.f32.xlu0 %v6116
        %v6118 = vpop.xlane.xlu0 %6117
        %v6119 = vsel %vm2367, %v6025, 0.0
        %6120 = vadd.xlane.f32.xlu0 %v6119
        %v6121 = vpop.xlane.xlu0 %6120
        %v6122 = vstv %s234
        %v6123 = vadd.f32 %v6028, %v6122
        %v6124 = vadd.f32 %v6031, %v6122
        %v6125 = vadd.f32 %v6034, %v6122
        %v6126 = vadd.f32 %v6037, %v6122
        %v6127 = vadd.f32 %v6040, %v6122
        %v6128 = vadd.f32 %v6043, %v6122
        %v6129 = vadd.f32 %v6046, %v6122
        %v6130 = vadd.f32 %v6049, %v6122
        %v6131 = vadd.f32 %v6052, %v6122
        %v6132 = vadd.f32 %v6055, %v6122
        %v6133 = vadd.f32 %v6058, %v6122
        %v6134 = vadd.f32 %v6061, %v6122
        %v6135 = vadd.f32 %v6064, %v6122
        %v6136 = vadd.f32 %v6067, %v6122
        %v6137 = vadd.f32 %v6070, %v6122
        %v6138 = vadd.f32 %v6073, %v6122
        %v6139 = vadd.f32 %v6076, %v6122
        %v6140 = vadd.f32 %v6079, %v6122
        %v6141 = vadd.f32 %v6082, %v6122
        %v6142 = vadd.f32 %v6085, %v6122
        %v6143 = vadd.f32 %v6088, %v6122
        %v6144 = vadd.f32 %v6091, %v6122
        %v6145 = vadd.f32 %v6094, %v6122
        %v6146 = vadd.f32 %v6097, %v6122
        %v6147 = vadd.f32 %v6100, %v6122
        %v6148 = vadd.f32 %v6103, %v6122
        %v6149 = vadd.f32 %v6106, %v6122
        %v6150 = vadd.f32 %v6109, %v6122
        %v6151 = vadd.f32 %v6112, %v6122
        %v6152 = vadd.f32 %v6115, %v6122
        %v6153 = vadd.f32 %v6118, %v6122
        %v6154 = vadd.f32 %v6121, %v6122
        %v6187 = vlaneseq
        %v6188 = vand.u32 %v6187, 127
        %v6189 = vperm.slane %v6123, %v6188
        %v6190 = vadd.s32 %v6188, 4294967288
        %v6191 = vperm.slane %v6124, %v6190
        %vm6192 = vcmask 130112
        %v6193 = vsel %vm6192, %v6191, %v6189
        %v6194 = vperm.slane %v6125, %v6188
        %v6195 = vperm.slane %v6126, %v6190
        %v6196 = vsel %vm6192, %v6195, %v6194
        %v6197 = vperm.slane %v6127, %v6188
        %v6198 = vperm.slane %v6128, %v6190
        %v6199 = vsel %vm6192, %v6198, %v6197
        %v6200 = vperm.slane %v6129, %v6188
        %v6201 = vperm.slane %v6130, %v6190
        %v6202 = vsel %vm6192, %v6201, %v6200
        %v6203 = vperm.slane %v6131, %v6188
        %v6204 = vperm.slane %v6132, %v6190
        %v6205 = vsel %vm6192, %v6204, %v6203
        %v6206 = vperm.slane %v6133, %v6188
        %v6207 = vperm.slane %v6134, %v6190
        %v6208 = vsel %vm6192, %v6207, %v6206
        %v6209 = vperm.slane %v6135, %v6188
        %v6210 = vperm.slane %v6136, %v6190
        %v6211 = vsel %vm6192, %v6210, %v6209
        %v6212 = vperm.slane %v6137, %v6188
        %v6213 = vperm.slane %v6138, %v6190
        %v6214 = vsel %vm6192, %v6213, %v6212
        %v6215 = vperm.slane %v6139, %v6188
        %v6216 = vperm.slane %v6140, %v6190
        %v6217 = vsel %vm6192, %v6216, %v6215
        %v6218 = vperm.slane %v6141, %v6188
        %v6219 = vperm.slane %v6142, %v6190
        %v6220 = vsel %vm6192, %v6219, %v6218
        %v6221 = vperm.slane %v6143, %v6188
        %v6222 = vperm.slane %v6144, %v6190
        %v6223 = vsel %vm6192, %v6222, %v6221
        %v6224 = vperm.slane %v6145, %v6188
        %v6225 = vperm.slane %v6146, %v6190
        %v6226 = vsel %vm6192, %v6225, %v6224
        %v6227 = vperm.slane %v6147, %v6188
        %v6228 = vperm.slane %v6148, %v6190
        %v6229 = vsel %vm6192, %v6228, %v6227
        %v6230 = vperm.slane %v6149, %v6188
        %v6231 = vperm.slane %v6150, %v6190
        %v6232 = vsel %vm6192, %v6231, %v6230
        %v6233 = vperm.slane %v6151, %v6188
        %v6234 = vperm.slane %v6152, %v6190
        %v6235 = vsel %vm6192, %v6234, %v6233
        %v6236 = vperm.slane %v6153, %v6188
        %v6237 = vperm.slane %v6154, %v6190
        %v6238 = vsel %vm6192, %v6237, %v6236
        %vm6239 = vcmask 1041409
        %v6240 = vsel %vm6239, %v6196, %v6193
        %vm6241 = vcmask 1042434
        %v6242 = vsel %vm6241, %v6199, %v6240
        %vm6243 = vcmask 1043459
        %v6244 = vsel %vm6243, %v6202, %v6242
        %vm6245 = vcmask 1044484
        %v6246 = vsel %vm6245, %v6205, %v6244
        %vm6247 = vcmask 1045509
        %v6248 = vsel %vm6247, %v6208, %v6246
        %vm6249 = vcmask 1046534
        %v6250 = vsel %vm6249, %v6211, %v6248
        %vm6251 = vcmask 1047559
        %v6252 = vsel %vm6251, %v6214, %v6250
        %v6253 = vsel %vm6239, %v6220, %v6217
        %v6254 = vsel %vm6241, %v6223, %v6253
        %v6255 = vsel %vm6243, %v6226, %v6254
        %v6256 = vsel %vm6245, %v6229, %v6255
        %v6257 = vsel %vm6247, %v6232, %v6256
        %v6258 = vsel %vm6249, %v6235, %v6257
        %v6259 = vsel %vm6251, %v6238, %v6258
        %vm6262 = vcmask 130048
        %6263 = vst.msk [vmem:[%s231] sm:$0xff] %vm6262, %v6252
        %6264 = vst.msk [vmem:[%s231 + $0x8] sm:$0xff] %vm6262, %v6259
        %s6265 = sand.u32 %s119, 1
        %s6266 = scalar_lea.sflag [#allocation6], %s6265
        %s6267 = sand.u32 %s119, 1
        %s6268 = smul.addr %s6267, 16
        %s6269 = scalar_lea.vmem [#allocation9], %s6268
        // Predicated region
        $region45: #{to_clean_image_forward.1} parent=35 // pred_check
          %p6270 = pneg %p129
        $region46: #{to_clean_image_forward.1} parent=35 // pred_check_branch
          %6272 = sbr.rel (%p6270) target = $region48
        $region47: #{to_clean_image_forward.1} parent=35 // pred_region
          %6274 = vsyncadd %s6266, 0
          %s6275 = smul.addr %s22, 2
          %s6276 = smul.addr %s6275, 8
          %s6277 = scalar_lea.hbm %s4, %s6276
          %s6278 = sshll.u32 %s6269, 4
          %s6279 = int_to_ptr.vmem [resolvable:$true] %s6278
          %s6280 = sshll.u32 %s6277, 4
          %s6281 = int_to_ptr.hbm [resolvable:$true] %s6280
          %6286 = dma.vmem_to_hbm [thread:$0]  %s6279, 256, %s6281, %s6266, 128, 128, 8
        $region48: #{to_clean_image_forward.1} parent=35 // pred_fallthru
          _
      $region36: #{to_clean_image_forward.1} parent=5 // pred_fallthru
        _
      %p6287 = scmp.le.s32.totalorder 2, %s17
      // Predicated region
      $region49: #{to_clean_image_forward.1} parent=5 // pred_check
        %p6288 = pneg %p6287
      $region50: #{to_clean_image_forward.1} parent=5 // pred_check_branch
        %6290 = sbr.rel (%p6288) target = $region52
      $region51: #{to_clean_image_forward.1} parent=5 // pred_region
        %s6291 = ssub.s32 %s17, 2
        // Predicated region
        $region53: #{to_clean_image_forward.1} parent=51 // pred_check
          %p6292 = pneg %p135
        $region54: #{to_clean_image_forward.1} parent=51 // pred_check_branch
          %6294 = sbr.rel (%p6292) target = $region56
        $region55: #{to_clean_image_forward.1} parent=51 // pred_region
          %s6295 = sand.u32 %s120, 1
          %s6296 = scalar_lea.sflag [#allocation6], %s6295
          %s6297 = sand.u32 %s120, 1
          %s6298 = smul.addr %s6297, 16
          %s6299 = scalar_lea.vmem [#allocation9], %s6298
          %6301 = dma.done %s6296, 256
        $region56: #{to_clean_image_forward.1} parent=51 // pred_fallthru
          _
      $region52: #{to_clean_image_forward.1} parent=5 // pred_fallthru
        _
    $region6: #{to_clean_image_forward.1} parent=1 // loop_footer
      %s21 = sadd.s32 1, %s17
    $region7: #{to_clean_image_forward.1} parent=1 // loop_footer_branch
      %16 = sbr.rel target = $region3
    $region8: #{to_clean_image_forward.1} parent=1 // loop_exit
      _
    %6302 = vsyncpa [#allocation5], 1
    %s6303 = scalar_lea.sflag [#allocation5], 1
    %6304 = vsyncpa %s6303, 1
    %6305 = vsyncpa [#allocation6], 1
    %s6306 = scalar_lea.sflag [#allocation6], 1
    %6307 = vsyncpa %s6306, 1
    %6308 = vsyncpa [#allocation7], 1
    %s6309 = scalar_lea.sflag [#allocation7], 1
    %6310 = vsyncpa %s6309, 1

</llo_original>
